<compile_context>
chip_gen: v7x
topology: tpu7x:2x2x1
jax: 0.10.0
libtpu: 0.0.40
codegen_flags: <defaults>
</compile_context>

<pallas_src>
import numpy as np

import jax
import jax.numpy as jnp
from jax.experimental import pallas as pl
from jax.experimental.pallas import tpu as pltpu

# ---------------- config (small synthetic sizes consistent with the module) --
BATCH = 2
IMG_C, IMG_H, IMG_W = 3, 16, 16
PATCH = 8
NUM_PATCHES = (IMG_H // PATCH) * (IMG_W // PATCH)   # 4
NUM_PREFIX = 2                                      # base_encoder.num_prefix_tokens
EMBED_LEN = NUM_PATCHES + NUM_PREFIX                # 6
PATCH_DIM = EMBED_LEN - 2                           # positioner output dim
PATCH_FLAT = IMG_C * PATCH * PATCH                  # 192
HIDDEN = 32                                         # base_encoder.head.weight.shape[1]
MLP_DIM = 64
DIM = 16
T = 1.0
B_T = 1.0
BN_EPS = 1e-5


# ---------------- compile-time constant matrices (passed as tiny VMEM inputs) -
def _cls_select(n_rows, total_imgs, img_offset):
    """Row i selects the cls-token row of image (img_offset + i)."""
    s = np.zeros((n_rows, total_imgs * EMBED_LEN), np.float32)
    for i in range(n_rows):
        s[i, (img_offset + i) * EMBED_LEN] = 1.0
    return s


S_CLS_B12 = _cls_select(2 * BATCH, 3 * BATCH, 0)          # cls of x1,x2 views
S_CLS_BR = _cls_select(BATCH, 3 * BATCH, 2 * BATCH)       # cls of r view
S_CLS_M = _cls_select(2 * BATCH, 2 * BATCH, 0)            # cls of momentum views

# pooled = ((pos2 @ E_POOL) * D_POOL) @ tokens  ==  einsum('ijk,ij->ik')
E_POOL = np.zeros((NUM_PATCHES, 3 * BATCH * EMBED_LEN), np.float32)
D_POOL = np.zeros((BATCH, 3 * BATCH * EMBED_LEN), np.float32)
for _i in range(BATCH):
    _c0 = (2 * BATCH + _i) * EMBED_LEN
    D_POOL[_i, _c0:_c0 + EMBED_LEN] = 1.0
    for _j in range(NUM_PATCHES):
        E_POOL[_j, _c0 + NUM_PREFIX + _j] = 1.0


def _group_proj(rows, group):
    """Block-diagonal averaging projector: (proj @ x)[r] = mean of x over r's group."""
    p = np.zeros((rows, rows), np.float32)
    for g in range(rows // group):
        p[g * group:(g + 1) * group, g * group:(g + 1) * group] = 1.0 / group
    return p


P_2GROUPS = _group_proj(2 * BATCH, BATCH)                 # two per-view BN groups
P_1GROUP = _group_proj(BATCH, BATCH)                      # one N-row BN group

DUP2 = np.tile(np.eye(BATCH, dtype=np.float32), (2, 1))   # [v; v] row duplication

# MoCo on stacked q=[q1;q2], k=[k1;k2]: valid block = opposite view, label = own row.
_ROWS = np.arange(2 * BATCH)
MOCO_BLOCK_MASK = ((_ROWS[:, None] // BATCH) != (_ROWS[None, :] // BATCH)).astype(np.float32)
MOCO_LABEL_MASK = (_ROWS[None, :] == ((_ROWS[:, None] + BATCH) % (2 * BATCH))).astype(np.float32)

_CONSTS = [S_CLS_B12, S_CLS_BR, S_CLS_M, E_POOL, D_POOL,
           P_2GROUPS, P_1GROUP, DUP2, MOCO_BLOCK_MASK, MOCO_LABEL_MASK]


# ---------------- in-kernel helpers (operate on values, not refs) -------------
def _mm(a, b):
    """Network matmul: bf16 MXU operands, f32 accumulation."""
    return jnp.dot(a.astype(jnp.bfloat16), b.astype(jnp.bfloat16),
                   preferred_element_type=jnp.float32)


def _bn(x, proj, gamma, beta, relu):
    """BatchNorm1d (training-mode biased batch stats), possibly view-grouped.

    `proj` is a block-diagonal averaging matrix so each view keeps its own
    statistics, matching separate PyTorch BatchNorm1d calls exactly.
    gamma/beta None => affine=False."""
    mean = jnp.dot(proj, x, preferred_element_type=jnp.float32)
    d = x - mean
    var = jnp.dot(proj, d * d, preferred_element_type=jnp.float32)
    y = d * jax.lax.rsqrt(var + BN_EPS)
    if gamma is not None:
        y = y * gamma + beta
    if relu:
        y = jnp.maximum(y, 0.0)
    return y


def _mlp_head(x, proj, ws, gammas, betas):
    """_build_mlp: Linear(no bias) -> BN+ReLU per hidden layer, final BN(affine=False)."""
    h = x
    last = len(ws) - 1
    for i, w in enumerate(ws):
        h = _mm(h, w)
        if i < last:
            h = _bn(h, proj, gammas[i], betas[i], relu=True)
        else:
            h = _bn(h, proj, None, None, relu=False)
    return h


def _trunk(patches, bias, patch_w, blk_w1, blk_w2):
    """Stand-in ViT trunk: patch embed (+prefix/pos bias) and one residual MLP block."""
    tok = _mm(patches, patch_w) + bias
    mid = jnp.maximum(_mm(tok, blk_w1), 0.0)
    return tok + _mm(mid, blk_w2)


def _l2_normalize(v, eps):
    n = jnp.sqrt(jnp.sum(v * v, axis=-1, keepdims=True))
    return v / jnp.maximum(n, eps)


def _row_cosine(a, b):
    d = jnp.sum(a * b, axis=-1, keepdims=True)
    na = jnp.sqrt(jnp.sum(a * a, axis=-1, keepdims=True))
    nb = jnp.sqrt(jnp.sum(b * b, axis=-1, keepdims=True))
    return d / jnp.maximum(na * nb, 1e-8)   # nn.CosineSimilarity eps


# ---------------- the single fused kernel -------------------------------------
def _bridge_kernel(
        # base encoder (views x1|x2|r) + its projector head
        bp_ref, bb_ref, bpw_ref, bw1_ref, bw2_ref,
        bhw0_ref, bhg0_ref, bhb0_ref, bhw1_ref, bhg1_ref, bhb1_ref, bhw2_ref,
        # momentum encoder (views x1|x2) + its projector head
        mp_ref, mb_ref, mpw_ref, mw1_ref, mw2_ref,
        mhw0_ref, mhg0_ref, mhb0_ref, mhw1_ref, mhg1_ref, mhb1_ref, mhw2_ref,
        # predictor MLP
        pw0_ref, pg0_ref, pb0_ref, pw1_ref,
        # positioner MLP
        sw0_ref, sg0_ref, sb0_ref, sw1_ref,
        # constant matrices
        sel12_ref, selr_ref, selm_ref, epool_ref, dpool_ref,
        p2_ref, p1_ref, dup_ref, bmask_ref, lmask_ref,
        # output
        loss_ref):
    f32 = jnp.float32
    s_b12, s_br, s_m = sel12_ref[...], selr_ref[...], selm_ref[...]
    e_pool, d_pool = epool_ref[...], dpool_ref[...]
    p2, p1, dup = p2_ref[...], p1_ref[...], dup_ref[...]
    blk_mask, lbl_mask = bmask_ref[...], lmask_ref[...]

    # ---- base encoder trunk, all three views batched (no BN here -> exact) ----
    tok_b = _trunk(bp_ref[...], bb_ref[...], bpw_ref[...], bw1_ref[...], bw2_ref[...])
    cls12 = jnp.dot(s_b12, tok_b, preferred_element_type=f32)        # [2N, HIDDEN]
    cls_r = jnp.dot(s_br, tok_b, preferred_element_type=f32)         # [N, HIDDEN]

    b_head = ([bhw0_ref[...], bhw1_ref[...], bhw2_ref[...]],
              [bhg0_ref[...], bhg1_ref[...]],
              [bhb0_ref[...], bhb1_ref[...]])
    feat12 = _mlp_head(cls12, p2, *b_head)                           # [feat1; feat2]

    # ---- positioner on the r-view cls token (BN over the N r-rows) + softmax --
    h = _bn(_mm(cls_r, sw0_ref[...]), p1, sg0_ref[...], sb0_ref[...], relu=True)
    pos1 = _bn(_mm(h, sw1_ref[...]), p1, None, None, relu=False)     # [N, PATCH_DIM]
    pmax = jnp.max(pos1, axis=-1, keepdims=True)
    pexp = jnp.exp(pos1 - pmax)
    pos2 = pexp / jnp.sum(pexp, axis=-1, keepdims=True)

    # ---- einsum('ijk,ij->ik') token pooling as one masked matmul --------------
    w_pool = jnp.dot(pos2, e_pool, preferred_element_type=f32) * d_pool
    pooled = jnp.dot(w_pool, tok_b, preferred_element_type=f32)      # [N, HIDDEN]
    k1_feat = _mlp_head(pooled, p1, *b_head)                         # K1

    # ---- predictor (BN groups follow the three separate reference calls) ------
    pred = ([pw0_ref[...], pw1_ref[...]], [pg0_ref[...]], [pb0_ref[...]])
    q12 = _mlp_head(feat12, p2, *pred)                               # [q1; q2]
    big_q1 = _mlp_head(k1_feat, p1, *pred)                           # Q1

    # ---- momentum encoder over [x1|x2] -----------------------------------------
    tok_m = _trunk(mp_ref[...], mb_ref[...], mpw_ref[...], mw1_ref[...], mw2_ref[...])
    cls_m = jnp.dot(s_m, tok_m, preferred_element_type=f32)          # [2N, HIDDEN]
    m_head = ([mhw0_ref[...], mhw1_ref[...], mhw2_ref[...]],
              [mhg0_ref[...], mhg1_ref[...]],
              [mhb0_ref[...], mhb1_ref[...]])
    k_all = _mlp_head(cls_m, p2, *m_head)                            # [k1; k2]

    # ---- MoCo: moco(q1,k2) + moco(q2,k1) via one block-masked [2N,2N] logits ---
    qn = _l2_normalize(q12, 1e-12)                                   # F.normalize eps
    kn = _l2_normalize(k_all, 1e-12)
    logits = jax.lax.dot_general(qn, kn, (((1,), (1,)), ((), ())),
                                 preferred_element_type=f32) / T
    masked = jnp.where(blk_mask > 0.5, logits, -1e30)
    row_max = jnp.max(masked, axis=-1, keepdims=True)
    lse = row_max + jnp.log(jnp.sum(jnp.exp(masked - row_max), axis=-1, keepdims=True))
    picked = jnp.sum(logits * lbl_mask, axis=-1, keepdims=True)
    moco = (2.0 * T) * jnp.sum(lse - picked, axis=0, keepdims=True) / BATCH   # (1,1)

    # ---- BYOL: (Q1,feat1)+(Q1,feat2)+(q1,K1)+(q2,K1); 1.001 is from the module -
    q1_rep = jnp.dot(dup, big_q1, preferred_element_type=f32)        # [Q1; Q1]
    k1_rep = jnp.dot(dup, k1_feat, preferred_element_type=f32)       # [K1; K1]
    cos_sum = (jnp.sum(_row_cosine(q1_rep, feat12), axis=0, keepdims=True)
               + jnp.sum(_row_cosine(q12, k1_rep), axis=0, keepdims=True))
    byol = 4.0 * 1.001 - cos_sum / BATCH                             # (1,1)

    loss_ref[...] = moco + B_T * byol


# ---------------- wrapper: layout plumbing + the single pallas_call -----------
def _patch_rows(images):
    """NCHW images -> padded 2-D token-slot patch matrix [n*EMBED_LEN, PATCH_FLAT].

    Prefix-token slots are zero rows so that rows @ patch_w contributes nothing
    there (their content comes from the token-bias input instead)."""
    imgs = jnp.concatenate([jnp.asarray(v, dtype=jnp.float32) for v in images], axis=0)
    n = imgs.shape[0]
    xp = imgs.reshape(n, IMG_C, IMG_H // PATCH, PATCH, IMG_W // PATCH, PATCH)
    xp = xp.transpose(0, 2, 4, 1, 3, 5).reshape(n, NUM_PATCHES, PATCH_FLAT)
    padded = jnp.concatenate(
        [jnp.zeros((n, NUM_PREFIX, PATCH_FLAT), jnp.float32), xp], axis=1)
    return padded.reshape(n * EMBED_LEN, PATCH_FLAT)


def _token_bias(enc, n_imgs):
    """Per-token additive bias (prefix tokens + positional embedding), tiled per image."""
    pref = jnp.concatenate(
        [enc["prefix"][0], jnp.zeros((NUM_PATCHES, HIDDEN), jnp.float32)], axis=0)
    return jnp.tile(pref + enc["pos_embed"][0], (n_imgs, 1))


def _encoder_inputs(enc, images):
    head = enc["head"]
    return [
        _patch_rows(images),
        _token_bias(enc, BATCH * len(images)),
        enc["patch_w"], enc["blk_w1"], enc["blk_w2"],
        head["weights"][0], head["gammas"][0].reshape(1, -1), head["betas"][0].reshape(1, -1),
        head["weights"][1], head["gammas"][1].reshape(1, -1), head["betas"][1].reshape(1, -1),
        head["weights"][2],
    ]


def _mlp2_inputs(mlp):
    return [mlp["weights"][0], mlp["gammas"][0].reshape(1, -1),
            mlp["betas"][0].reshape(1, -1), mlp["weights"][1]]


@jax.jit
def bridge_forward(params, x1, x2, x, r, m):
    base = params["base"]
    # _update_momentum_encoder (no_grad): plain elementwise parameter update.
    momentum = jax.tree_util.tree_map(lambda pm, pb: pm * m + pb * (1.0 - m),
                                      params["momentum"], base)
    # TODO(synk): the real base_encoder is an opaque externally-supplied ViT; this
    # stand-in ignores the second argument `x` of base_encoder(r, x).
    inputs = (_encoder_inputs(base, [x1, x2, r])
              + _encoder_inputs(momentum, [x1, x2])
              + _mlp2_inputs(params["predictor"])
              + _mlp2_inputs(params["positioner"])
              + [jnp.asarray(c) for c in _CONSTS])
    inputs = [jnp.asarray(a, dtype=jnp.float32) for a in inputs]

    loss = pl.pallas_call(
        _bridge_kernel,
        out_shape=jax.ShapeDtypeStruct((1, 1), jnp.float32),
        in_specs=[pl.BlockSpec(memory_space=pltpu.MemorySpace.VMEM) for _ in inputs],
        out_specs=pl.BlockSpec(memory_space=pltpu.MemorySpace.VMEM),
    )(*inputs)[0, 0]
    return loss, momentum


# ---------------- deterministic parameter init --------------------------------
def init_mlp(key, dims):
    ws, gs, bs = [], [], []
    for i in range(len(dims) - 1):
        key, sub = jax.random.split(key)
        ws.append(0.02 * jax.random.normal(sub, (dims[i], dims[i + 1]), jnp.float32))
        gs.append(jnp.ones((dims[i + 1],), jnp.float32))
        bs.append(jnp.zeros((dims[i + 1],), jnp.float32))
    return {"weights": ws, "gammas": gs, "betas": bs}


def init_encoder(key):
    k1, k2, k3, k4, k5, k6 = jax.random.split(key, 6)
    return {
        "patch_w": 0.02 * jax.random.normal(k1, (PATCH_FLAT, HIDDEN), jnp.float32),
        "prefix": 0.02 * jax.random.normal(k2, (1, NUM_PREFIX, HIDDEN), jnp.float32),
        "pos_embed": 0.02 * jax.random.normal(k3, (1, EMBED_LEN, HIDDEN), jnp.float32),
        "blk_w1": 0.02 * jax.random.normal(k4, (HIDDEN, MLP_DIM), jnp.float32),
        "blk_w2": 0.02 * jax.random.normal(k5, (MLP_DIM, HIDDEN), jnp.float32),
        "head": init_mlp(k6, [HIDDEN, MLP_DIM, MLP_DIM, DIM]),   # _build_mlp(3, hidden, mlp, dim)
    }


if __name__ == "__main__":
    key = jax.random.PRNGKey(0)
    k_enc, k_pred, k_pos, kx1, kx2, kx, kr = jax.random.split(key, 7)
    base = init_encoder(k_enc)
    params = {
        "base": base,
        # momentum encoder initialized as a copy of the base encoder
        "momentum": jax.tree_util.tree_map(lambda a: a, base),
        "predictor": init_mlp(k_pred, [DIM, MLP_DIM, DIM]),           # _build_mlp(2, dim, mlp, dim)
        "positioner": init_mlp(k_pos, [HIDDEN, MLP_DIM, PATCH_DIM]),  # _build_mlp(2, hidden, mlp, patch_dim)
    }

    x1 = jax.random.normal(kx1, (BATCH, IMG_C, IMG_H, IMG_W), jnp.float32)
    x2 = jax.random.normal(kx2, (BATCH, IMG_C, IMG_H, IMG_W), jnp.float32)
    x = jax.random.normal(kx, (BATCH, IMG_C, IMG_H, IMG_W), jnp.float32)
    r = jax.random.normal(kr, (BATCH, IMG_C, IMG_H, IMG_W), jnp.float32)
    m = 0.99

    loss, _ = bridge_forward(params, x1, x2, x, r, m)
    loss = jax.block_until_ready(loss)
    assert bool(jnp.isfinite(loss))
    print("KERNEL_OK")
</pallas_src>

<mosaic_0001>
module attributes {stable_mosaic.version = 11 : i64} {
  func.func @_bridge_kernel(%arg0: memref<36x192xf32, #tpu.memory_space<vmem>>, %arg1: memref<36x32xf32, #tpu.memory_space<vmem>>, %arg2: memref<192x32xf32, #tpu.memory_space<vmem>>, %arg3: memref<32x64xf32, #tpu.memory_space<vmem>>, %arg4: memref<64x32xf32, #tpu.memory_space<vmem>>, %arg5: memref<32x64xf32, #tpu.memory_space<vmem>>, %arg6: memref<1x64xf32, #tpu.memory_space<vmem>>, %arg7: memref<1x64xf32, #tpu.memory_space<vmem>>, %arg8: memref<64x64xf32, #tpu.memory_space<vmem>>, %arg9: memref<1x64xf32, #tpu.memory_space<vmem>>, %arg10: memref<1x64xf32, #tpu.memory_space<vmem>>, %arg11: memref<64x16xf32, #tpu.memory_space<vmem>>, %arg12: memref<24x192xf32, #tpu.memory_space<vmem>>, %arg13: memref<24x32xf32, #tpu.memory_space<vmem>>, %arg14: memref<192x32xf32, #tpu.memory_space<vmem>>, %arg15: memref<32x64xf32, #tpu.memory_space<vmem>>, %arg16: memref<64x32xf32, #tpu.memory_space<vmem>>, %arg17: memref<32x64xf32, #tpu.memory_space<vmem>>, %arg18: memref<1x64xf32, #tpu.memory_space<vmem>>, %arg19: memref<1x64xf32, #tpu.memory_space<vmem>>, %arg20: memref<64x64xf32, #tpu.memory_space<vmem>>, %arg21: memref<1x64xf32, #tpu.memory_space<vmem>>, %arg22: memref<1x64xf32, #tpu.memory_space<vmem>>, %arg23: memref<64x16xf32, #tpu.memory_space<vmem>>, %arg24: memref<16x64xf32, #tpu.memory_space<vmem>>, %arg25: memref<1x64xf32, #tpu.memory_space<vmem>>, %arg26: memref<1x64xf32, #tpu.memory_space<vmem>>, %arg27: memref<64x16xf32, #tpu.memory_space<vmem>>, %arg28: memref<32x64xf32, #tpu.memory_space<vmem>>, %arg29: memref<1x64xf32, #tpu.memory_space<vmem>>, %arg30: memref<1x64xf32, #tpu.memory_space<vmem>>, %arg31: memref<64x4xf32, #tpu.memory_space<vmem>>, %arg32: memref<4x36xf32, #tpu.memory_space<vmem>>, %arg33: memref<2x36xf32, #tpu.memory_space<vmem>>, %arg34: memref<4x24xf32, #tpu.memory_space<vmem>>, %arg35: memref<4x36xf32, #tpu.memory_space<vmem>>, %arg36: memref<2x36xf32, #tpu.memory_space<vmem>>, %arg37: memref<4x4xf32, #tpu.memory_space<vmem>>, %arg38: memref<2x2xf32, #tpu.memory_space<vmem>>, %arg39: memref<4x2xf32, #tpu.memory_space<vmem>>, %arg40: memref<4x4xf32, #tpu.memory_space<vmem>>, %arg41: memref<4x4xf32, #tpu.memory_space<vmem>>, %arg42: memref<1x1xf32, #tpu.memory_space<vmem>>) attributes {dimension_semantics = [], scalar_prefetch = 0 : i64, scratch_operands = 0 : i64, tpu.core_type = #tpu.core_type<tc>} {
    %c0 = arith.constant 0 : index
    %c0_0 = arith.constant 0 : index
    %0 = vector.load %arg32[%c0, %c0_0] : memref<4x36xf32, #tpu.memory_space<vmem>>, vector<4x36xf32>
    %c0_1 = arith.constant 0 : index
    %c0_2 = arith.constant 0 : index
    %1 = vector.load %arg33[%c0_1, %c0_2] : memref<2x36xf32, #tpu.memory_space<vmem>>, vector<2x36xf32>
    %c0_3 = arith.constant 0 : index
    %c0_4 = arith.constant 0 : index
    %2 = vector.load %arg34[%c0_3, %c0_4] : memref<4x24xf32, #tpu.memory_space<vmem>>, vector<4x24xf32>
    %c0_5 = arith.constant 0 : index
    %c0_6 = arith.constant 0 : index
    %3 = vector.load %arg35[%c0_5, %c0_6] : memref<4x36xf32, #tpu.memory_space<vmem>>, vector<4x36xf32>
    %c0_7 = arith.constant 0 : index
    %c0_8 = arith.constant 0 : index
    %4 = vector.load %arg36[%c0_7, %c0_8] : memref<2x36xf32, #tpu.memory_space<vmem>>, vector<2x36xf32>
    %c0_9 = arith.constant 0 : index
    %c0_10 = arith.constant 0 : index
    %5 = vector.load %arg37[%c0_9, %c0_10] : memref<4x4xf32, #tpu.memory_space<vmem>>, vector<4x4xf32>
    %c0_11 = arith.constant 0 : index
    %c0_12 = arith.constant 0 : index
    %6 = vector.load %arg38[%c0_11, %c0_12] : memref<2x2xf32, #tpu.memory_space<vmem>>, vector<2x2xf32>
    %c0_13 = arith.constant 0 : index
    %c0_14 = arith.constant 0 : index
    %7 = vector.load %arg39[%c0_13, %c0_14] : memref<4x2xf32, #tpu.memory_space<vmem>>, vector<4x2xf32>
    %c0_15 = arith.constant 0 : index
    %c0_16 = arith.constant 0 : index
    %8 = vector.load %arg40[%c0_15, %c0_16] : memref<4x4xf32, #tpu.memory_space<vmem>>, vector<4x4xf32>
    %c0_17 = arith.constant 0 : index
    %c0_18 = arith.constant 0 : index
    %9 = vector.load %arg41[%c0_17, %c0_18] : memref<4x4xf32, #tpu.memory_space<vmem>>, vector<4x4xf32>
    %c0_19 = arith.constant 0 : index
    %c0_20 = arith.constant 0 : index
    %10 = vector.load %arg0[%c0_19, %c0_20] : memref<36x192xf32, #tpu.memory_space<vmem>>, vector<36x192xf32>
    %c0_21 = arith.constant 0 : index
    %c0_22 = arith.constant 0 : index
    %11 = vector.load %arg1[%c0_21, %c0_22] : memref<36x32xf32, #tpu.memory_space<vmem>>, vector<36x32xf32>
    %c0_23 = arith.constant 0 : index
    %c0_24 = arith.constant 0 : index
    %12 = vector.load %arg2[%c0_23, %c0_24] : memref<192x32xf32, #tpu.memory_space<vmem>>, vector<192x32xf32>
    %c0_25 = arith.constant 0 : index
    %c0_26 = arith.constant 0 : index
    %13 = vector.load %arg3[%c0_25, %c0_26] : memref<32x64xf32, #tpu.memory_space<vmem>>, vector<32x64xf32>
    %c0_27 = arith.constant 0 : index
    %c0_28 = arith.constant 0 : index
    %14 = vector.load %arg4[%c0_27, %c0_28] : memref<64x32xf32, #tpu.memory_space<vmem>>, vector<64x32xf32>
    %15 = arith.truncf %10 : vector<36x192xf32> to vector<36x192xbf16>
    %16 = arith.truncf %12 : vector<192x32xf32> to vector<192x32xbf16>
    %cst = arith.constant dense<0.000000e+00> : vector<36x32xf32>
    %17 = tpu.matmul %15, %16, %cst {dimension_numbers = #tpu.dot_dimension_numbers<[1], [0], [0], [1], [0, 0, 1, 1], [], []>} : vector<36x192xbf16>, vector<192x32xbf16>, vector<36x32xf32> -> vector<36x32xf32>
    %18 = arith.addf %17, %11 : vector<36x32xf32>
    %19 = arith.truncf %18 : vector<36x32xf32> to vector<36x32xbf16>
    %20 = arith.truncf %13 : vector<32x64xf32> to vector<32x64xbf16>
    %cst_29 = arith.constant dense<0.000000e+00> : vector<36x64xf32>
    %21 = tpu.matmul %19, %20, %cst_29 {dimension_numbers = #tpu.dot_dimension_numbers<[1], [0], [0], [1], [0, 0, 1, 1], [], []>} : vector<36x32xbf16>, vector<32x64xbf16>, vector<36x64xf32> -> vector<36x64xf32>
    %cst_30 = arith.constant 0.000000e+00 : f32
    %22 = vector.broadcast %cst_30 : f32 to vector<36x64xf32>
    %23 = arith.maximumf %21, %22 : vector<36x64xf32>
    %24 = arith.truncf %23 : vector<36x64xf32> to vector<36x64xbf16>
    %25 = arith.truncf %14 : vector<64x32xf32> to vector<64x32xbf16>
    %cst_31 = arith.constant dense<0.000000e+00> : vector<36x32xf32>
    %26 = tpu.matmul %24, %25, %cst_31 {dimension_numbers = #tpu.dot_dimension_numbers<[1], [0], [0], [1], [0, 0, 1, 1], [], []>} : vector<36x64xbf16>, vector<64x32xbf16>, vector<36x32xf32> -> vector<36x32xf32>
    %27 = arith.addf %18, %26 : vector<36x32xf32>
    %cst_32 = arith.constant dense<0.000000e+00> : vector<4x32xf32>
    %28 = tpu.matmul %0, %27, %cst_32 {dimension_numbers = #tpu.dot_dimension_numbers<[1], [0], [0], [1], [0, 0, 1, 1], [], []>} : vector<4x36xf32>, vector<36x32xf32>, vector<4x32xf32> -> vector<4x32xf32>
    %cst_33 = arith.constant dense<0.000000e+00> : vector<2x32xf32>
    %29 = tpu.matmul %1, %27, %cst_33 {dimension_numbers = #tpu.dot_dimension_numbers<[1], [0], [0], [1], [0, 0, 1, 1], [], []>} : vector<2x36xf32>, vector<36x32xf32>, vector<2x32xf32> -> vector<2x32xf32>
    %c0_34 = arith.constant 0 : index
    %c0_35 = arith.constant 0 : index
    %30 = vector.load %arg5[%c0_34, %c0_35] : memref<32x64xf32, #tpu.memory_space<vmem>>, vector<32x64xf32>
    %c0_36 = arith.constant 0 : index
    %c0_37 = arith.constant 0 : index
    %31 = vector.load %arg8[%c0_36, %c0_37] : memref<64x64xf32, #tpu.memory_space<vmem>>, vector<64x64xf32>
    %c0_38 = arith.constant 0 : index
    %c0_39 = arith.constant 0 : index
    %32 = vector.load %arg11[%c0_38, %c0_39] : memref<64x16xf32, #tpu.memory_space<vmem>>, vector<64x16xf32>
    %c0_40 = arith.constant 0 : index
    %c0_41 = arith.constant 0 : index
    %33 = vector.load %arg6[%c0_40, %c0_41] : memref<1x64xf32, #tpu.memory_space<vmem>>, vector<1x64xf32>
    %c0_42 = arith.constant 0 : index
    %c0_43 = arith.constant 0 : index
    %34 = vector.load %arg9[%c0_42, %c0_43] : memref<1x64xf32, #tpu.memory_space<vmem>>, vector<1x64xf32>
    %c0_44 = arith.constant 0 : index
    %c0_45 = arith.constant 0 : index
    %35 = vector.load %arg7[%c0_44, %c0_45] : memref<1x64xf32, #tpu.memory_space<vmem>>, vector<1x64xf32>
    %c0_46 = arith.constant 0 : index
    %c0_47 = arith.constant 0 : index
    %36 = vector.load %arg10[%c0_46, %c0_47] : memref<1x64xf32, #tpu.memory_space<vmem>>, vector<1x64xf32>
    %37 = arith.truncf %28 : vector<4x32xf32> to vector<4x32xbf16>
    %38 = arith.truncf %30 : vector<32x64xf32> to vector<32x64xbf16>
    %cst_48 = arith.constant dense<0.000000e+00> : vector<4x64xf32>
    %39 = tpu.matmul %37, %38, %cst_48 {dimension_numbers = #tpu.dot_dimension_numbers<[1], [0], [0], [1], [0, 0, 1, 1], [], []>} : vector<4x32xbf16>, vector<32x64xbf16>, vector<4x64xf32> -> vector<4x64xf32>
    %cst_49 = arith.constant dense<0.000000e+00> : vector<4x64xf32>
    %40 = tpu.matmul %5, %39, %cst_49 {dimension_numbers = #tpu.dot_dimension_numbers<[1], [0], [0], [1], [0, 0, 1, 1], [], []>} : vector<4x4xf32>, vector<4x64xf32>, vector<4x64xf32> -> vector<4x64xf32>
    %41 = arith.subf %39, %40 : vector<4x64xf32>
    %42 = arith.mulf %41, %41 : vector<4x64xf32>
    %cst_50 = arith.constant dense<0.000000e+00> : vector<4x64xf32>
    %43 = tpu.matmul %5, %42, %cst_50 {dimension_numbers = #tpu.dot_dimension_numbers<[1], [0], [0], [1], [0, 0, 1, 1], [], []>} : vector<4x4xf32>, vector<4x64xf32>, vector<4x64xf32> -> vector<4x64xf32>
    %cst_51 = arith.constant 9.99999974E-6 : f32
    %44 = vector.broadcast %cst_51 : f32 to vector<4x64xf32>
    %45 = arith.addf %43, %44 : vector<4x64xf32>
    %46 = math.rsqrt %45 : vector<4x64xf32>
    %47 = arith.mulf %41, %46 : vector<4x64xf32>
    %48 = vector.broadcast %33 : vector<1x64xf32> to vector<4x64xf32>
    %49 = arith.mulf %47, %48 : vector<4x64xf32>
    %50 = vector.broadcast %35 : vector<1x64xf32> to vector<4x64xf32>
    %51 = arith.addf %49, %50 : vector<4x64xf32>
    %cst_52 = arith.constant 0.000000e+00 : f32
    %52 = vector.broadcast %cst_52 : f32 to vector<4x64xf32>
    %53 = arith.maximumf %51, %52 : vector<4x64xf32>
    %54 = arith.truncf %53 : vector<4x64xf32> to vector<4x64xbf16>
    %55 = arith.truncf %31 : vector<64x64xf32> to vector<64x64xbf16>
    %cst_53 = arith.constant dense<0.000000e+00> : vector<4x64xf32>
    %56 = tpu.matmul %54, %55, %cst_53 {dimension_numbers = #tpu.dot_dimension_numbers<[1], [0], [0], [1], [0, 0, 1, 1], [], []>} : vector<4x64xbf16>, vector<64x64xbf16>, vector<4x64xf32> -> vector<4x64xf32>
    %cst_54 = arith.constant dense<0.000000e+00> : vector<4x64xf32>
    %57 = tpu.matmul %5, %56, %cst_54 {dimension_numbers = #tpu.dot_dimension_numbers<[1], [0], [0], [1], [0, 0, 1, 1], [], []>} : vector<4x4xf32>, vector<4x64xf32>, vector<4x64xf32> -> vector<4x64xf32>
    %58 = arith.subf %56, %57 : vector<4x64xf32>
    %59 = arith.mulf %58, %58 : vector<4x64xf32>
    %cst_55 = arith.constant dense<0.000000e+00> : vector<4x64xf32>
    %60 = tpu.matmul %5, %59, %cst_55 {dimension_numbers = #tpu.dot_dimension_numbers<[1], [0], [0], [1], [0, 0, 1, 1], [], []>} : vector<4x4xf32>, vector<4x64xf32>, vector<4x64xf32> -> vector<4x64xf32>
    %cst_56 = arith.constant 9.99999974E-6 : f32
    %61 = vector.broadcast %cst_56 : f32 to vector<4x64xf32>
    %62 = arith.addf %60, %61 : vector<4x64xf32>
    %63 = math.rsqrt %62 : vector<4x64xf32>
    %64 = arith.mulf %58, %63 : vector<4x64xf32>
    %65 = vector.broadcast %34 : vector<1x64xf32> to vector<4x64xf32>
    %66 = arith.mulf %64, %65 : vector<4x64xf32>
    %67 = vector.broadcast %36 : vector<1x64xf32> to vector<4x64xf32>
    %68 = arith.addf %66, %67 : vector<4x64xf32>
    %cst_57 = arith.constant 0.000000e+00 : f32
    %69 = vector.broadcast %cst_57 : f32 to vector<4x64xf32>
    %70 = arith.maximumf %68, %69 : vector<4x64xf32>
    %71 = arith.truncf %70 : vector<4x64xf32> to vector<4x64xbf16>
    %72 = arith.truncf %32 : vector<64x16xf32> to vector<64x16xbf16>
    %cst_58 = arith.constant dense<0.000000e+00> : vector<4x16xf32>
    %73 = tpu.matmul %71, %72, %cst_58 {dimension_numbers = #tpu.dot_dimension_numbers<[1], [0], [0], [1], [0, 0, 1, 1], [], []>} : vector<4x64xbf16>, vector<64x16xbf16>, vector<4x16xf32> -> vector<4x16xf32>
    %cst_59 = arith.constant dense<0.000000e+00> : vector<4x16xf32>
    %74 = tpu.matmul %5, %73, %cst_59 {dimension_numbers = #tpu.dot_dimension_numbers<[1], [0], [0], [1], [0, 0, 1, 1], [], []>} : vector<4x4xf32>, vector<4x16xf32>, vector<4x16xf32> -> vector<4x16xf32>
    %75 = arith.subf %73, %74 : vector<4x16xf32>
    %76 = arith.mulf %75, %75 : vector<4x16xf32>
    %cst_60 = arith.constant dense<0.000000e+00> : vector<4x16xf32>
    %77 = tpu.matmul %5, %76, %cst_60 {dimension_numbers = #tpu.dot_dimension_numbers<[1], [0], [0], [1], [0, 0, 1, 1], [], []>} : vector<4x4xf32>, vector<4x16xf32>, vector<4x16xf32> -> vector<4x16xf32>
    %cst_61 = arith.constant 9.99999974E-6 : f32
    %78 = vector.broadcast %cst_61 : f32 to vector<4x16xf32>
    %79 = arith.addf %77, %78 : vector<4x16xf32>
    %80 = math.rsqrt %79 : vector<4x16xf32>
    %81 = arith.mulf %75, %80 : vector<4x16xf32>
    %c0_62 = arith.constant 0 : index
    %c0_63 = arith.constant 0 : index
    %82 = vector.load %arg28[%c0_62, %c0_63] : memref<32x64xf32, #tpu.memory_space<vmem>>, vector<32x64xf32>
    %83 = arith.truncf %29 : vector<2x32xf32> to vector<2x32xbf16>
    %84 = arith.truncf %82 : vector<32x64xf32> to vector<32x64xbf16>
    %cst_64 = arith.constant dense<0.000000e+00> : vector<2x64xf32>
    %85 = tpu.matmul %83, %84, %cst_64 {dimension_numbers = #tpu.dot_dimension_numbers<[1], [0], [0], [1], [0, 0, 1, 1], [], []>} : vector<2x32xbf16>, vector<32x64xbf16>, vector<2x64xf32> -> vector<2x64xf32>
    %c0_65 = arith.constant 0 : index
    %c0_66 = arith.constant 0 : index
    %86 = vector.load %arg29[%c0_65, %c0_66] : memref<1x64xf32, #tpu.memory_space<vmem>>, vector<1x64xf32>
    %c0_67 = arith.constant 0 : index
    %c0_68 = arith.constant 0 : index
    %87 = vector.load %arg30[%c0_67, %c0_68] : memref<1x64xf32, #tpu.memory_space<vmem>>, vector<1x64xf32>
    %cst_69 = arith.constant dense<0.000000e+00> : vector<2x64xf32>
    %88 = tpu.matmul %6, %85, %cst_69 {dimension_numbers = #tpu.dot_dimension_numbers<[1], [0], [0], [1], [0, 0, 1, 1], [], []>} : vector<2x2xf32>, vector<2x64xf32>, vector<2x64xf32> -> vector<2x64xf32>
    %89 = arith.subf %85, %88 : vector<2x64xf32>
    %90 = arith.mulf %89, %89 : vector<2x64xf32>
    %cst_70 = arith.constant dense<0.000000e+00> : vector<2x64xf32>
    %91 = tpu.matmul %6, %90, %cst_70 {dimension_numbers = #tpu.dot_dimension_numbers<[1], [0], [0], [1], [0, 0, 1, 1], [], []>} : vector<2x2xf32>, vector<2x64xf32>, vector<2x64xf32> -> vector<2x64xf32>
    %cst_71 = arith.constant 9.99999974E-6 : f32
    %92 = vector.broadcast %cst_71 : f32 to vector<2x64xf32>
    %93 = arith.addf %91, %92 : vector<2x64xf32>
    %94 = math.rsqrt %93 : vector<2x64xf32>
    %95 = arith.mulf %89, %94 : vector<2x64xf32>
    %96 = vector.broadcast %86 : vector<1x64xf32> to vector<2x64xf32>
    %97 = arith.mulf %95, %96 : vector<2x64xf32>
    %98 = vector.broadcast %87 : vector<1x64xf32> to vector<2x64xf32>
    %99 = arith.addf %97, %98 : vector<2x64xf32>
    %cst_72 = arith.constant 0.000000e+00 : f32
    %100 = vector.broadcast %cst_72 : f32 to vector<2x64xf32>
    %101 = arith.maximumf %99, %100 : vector<2x64xf32>
    %c0_73 = arith.constant 0 : index
    %c0_74 = arith.constant 0 : index
    %102 = vector.load %arg31[%c0_73, %c0_74] : memref<64x4xf32, #tpu.memory_space<vmem>>, vector<64x4xf32>
    %103 = arith.truncf %101 : vector<2x64xf32> to vector<2x64xbf16>
    %104 = arith.truncf %102 : vector<64x4xf32> to vector<64x4xbf16>
    %cst_75 = arith.constant dense<0.000000e+00> : vector<2x4xf32>
    %105 = tpu.matmul %103, %104, %cst_75 {dimension_numbers = #tpu.dot_dimension_numbers<[1], [0], [0], [1], [0, 0, 1, 1], [], []>} : vector<2x64xbf16>, vector<64x4xbf16>, vector<2x4xf32> -> vector<2x4xf32>
    %cst_76 = arith.constant dense<0.000000e+00> : vector<2x4xf32>
    %106 = tpu.matmul %6, %105, %cst_76 {dimension_numbers = #tpu.dot_dimension_numbers<[1], [0], [0], [1], [0, 0, 1, 1], [], []>} : vector<2x2xf32>, vector<2x4xf32>, vector<2x4xf32> -> vector<2x4xf32>
    %107 = arith.subf %105, %106 : vector<2x4xf32>
    %108 = arith.mulf %107, %107 : vector<2x4xf32>
    %cst_77 = arith.constant dense<0.000000e+00> : vector<2x4xf32>
    %109 = tpu.matmul %6, %108, %cst_77 {dimension_numbers = #tpu.dot_dimension_numbers<[1], [0], [0], [1], [0, 0, 1, 1], [], []>} : vector<2x2xf32>, vector<2x4xf32>, vector<2x4xf32> -> vector<2x4xf32>
    %cst_78 = arith.constant 9.99999974E-6 : f32
    %110 = vector.broadcast %cst_78 : f32 to vector<2x4xf32>
    %111 = arith.addf %109, %110 : vector<2x4xf32>
    %112 = math.rsqrt %111 : vector<2x4xf32>
    %113 = arith.mulf %107, %112 : vector<2x4xf32>
    %cst_79 = arith.constant dense<0xFF800000> : vector<2xf32>
    %114 = vector.multi_reduction <maximumf>, %113, %cst_79 [1] : vector<2x4xf32> to vector<2xf32>
    %115 = vector.shape_cast %114 : vector<2xf32> to vector<2x1xf32>
    %116 = vector.broadcast %115 : vector<2x1xf32> to vector<2x4xf32>
    %117 = arith.subf %113, %116 : vector<2x4xf32>
    %118 = math.exp %117 : vector<2x4xf32>
    %cst_80 = arith.constant dense<0.000000e+00> : vector<2xf32>
    %119 = vector.multi_reduction <add>, %118, %cst_80 [1] : vector<2x4xf32> to vector<2xf32>
    %120 = vector.shape_cast %119 : vector<2xf32> to vector<2x1xf32>
    %121 = vector.broadcast %120 : vector<2x1xf32> to vector<2x4xf32>
    %122 = arith.divf %118, %121 : vector<2x4xf32>
    %cst_81 = arith.constant dense<0.000000e+00> : vector<2x36xf32>
    %123 = tpu.matmul %122, %3, %cst_81 {dimension_numbers = #tpu.dot_dimension_numbers<[1], [0], [0], [1], [0, 0, 1, 1], [], []>} : vector<2x4xf32>, vector<4x36xf32>, vector<2x36xf32> -> vector<2x36xf32>
    %124 = arith.mulf %123, %4 : vector<2x36xf32>
    %cst_82 = arith.constant dense<0.000000e+00> : vector<2x32xf32>
    %125 = tpu.matmul %124, %27, %cst_82 {dimension_numbers = #tpu.dot_dimension_numbers<[1], [0], [0], [1], [0, 0, 1, 1], [], []>} : vector<2x36xf32>, vector<36x32xf32>, vector<2x32xf32> -> vector<2x32xf32>
    %126 = arith.truncf %125 : vector<2x32xf32> to vector<2x32xbf16>
    %127 = arith.truncf %30 : vector<32x64xf32> to vector<32x64xbf16>
    %cst_83 = arith.constant dense<0.000000e+00> : vector<2x64xf32>
    %128 = tpu.matmul %126, %127, %cst_83 {dimension_numbers = #tpu.dot_dimension_numbers<[1], [0], [0], [1], [0, 0, 1, 1], [], []>} : vector<2x32xbf16>, vector<32x64xbf16>, vector<2x64xf32> -> vector<2x64xf32>
    %cst_84 = arith.constant dense<0.000000e+00> : vector<2x64xf32>
    %129 = tpu.matmul %6, %128, %cst_84 {dimension_numbers = #tpu.dot_dimension_numbers<[1], [0], [0], [1], [0, 0, 1, 1], [], []>} : vector<2x2xf32>, vector<2x64xf32>, vector<2x64xf32> -> vector<2x64xf32>
    %130 = arith.subf %128, %129 : vector<2x64xf32>
    %131 = arith.mulf %130, %130 : vector<2x64xf32>
    %cst_85 = arith.constant dense<0.000000e+00> : vector<2x64xf32>
    %132 = tpu.matmul %6, %131, %cst_85 {dimension_numbers = #tpu.dot_dimension_numbers<[1], [0], [0], [1], [0, 0, 1, 1], [], []>} : vector<2x2xf32>, vector<2x64xf32>, vector<2x64xf32> -> vector<2x64xf32>
    %cst_86 = arith.constant 9.99999974E-6 : f32
    %133 = vector.broadcast %cst_86 : f32 to vector<2x64xf32>
    %134 = arith.addf %132, %133 : vector<2x64xf32>
    %135 = math.rsqrt %134 : vector<2x64xf32>
    %136 = arith.mulf %130, %135 : vector<2x64xf32>
    %137 = vector.broadcast %33 : vector<1x64xf32> to vector<2x64xf32>
    %138 = arith.mulf %136, %137 : vector<2x64xf32>
    %139 = vector.broadcast %35 : vector<1x64xf32> to vector<2x64xf32>
    %140 = arith.addf %138, %139 : vector<2x64xf32>
    %cst_87 = arith.constant 0.000000e+00 : f32
    %141 = vector.broadcast %cst_87 : f32 to vector<2x64xf32>
    %142 = arith.maximumf %140, %141 : vector<2x64xf32>
    %143 = arith.truncf %142 : vector<2x64xf32> to vector<2x64xbf16>
    %144 = arith.truncf %31 : vector<64x64xf32> to vector<64x64xbf16>
    %cst_88 = arith.constant dense<0.000000e+00> : vector<2x64xf32>
    %145 = tpu.matmul %143, %144, %cst_88 {dimension_numbers = #tpu.dot_dimension_numbers<[1], [0], [0], [1], [0, 0, 1, 1], [], []>} : vector<2x64xbf16>, vector<64x64xbf16>, vector<2x64xf32> -> vector<2x64xf32>
    %cst_89 = arith.constant dense<0.000000e+00> : vector<2x64xf32>
    %146 = tpu.matmul %6, %145, %cst_89 {dimension_numbers = #tpu.dot_dimension_numbers<[1], [0], [0], [1], [0, 0, 1, 1], [], []>} : vector<2x2xf32>, vector<2x64xf32>, vector<2x64xf32> -> vector<2x64xf32>
    %147 = arith.subf %145, %146 : vector<2x64xf32>
    %148 = arith.mulf %147, %147 : vector<2x64xf32>
    %cst_90 = arith.constant dense<0.000000e+00> : vector<2x64xf32>
    %149 = tpu.matmul %6, %148, %cst_90 {dimension_numbers = #tpu.dot_dimension_numbers<[1], [0], [0], [1], [0, 0, 1, 1], [], []>} : vector<2x2xf32>, vector<2x64xf32>, vector<2x64xf32> -> vector<2x64xf32>
    %cst_91 = arith.constant 9.99999974E-6 : f32
    %150 = vector.broadcast %cst_91 : f32 to vector<2x64xf32>
    %151 = arith.addf %149, %150 : vector<2x64xf32>
    %152 = math.rsqrt %151 : vector<2x64xf32>
    %153 = arith.mulf %147, %152 : vector<2x64xf32>
    %154 = vector.broadcast %34 : vector<1x64xf32> to vector<2x64xf32>
    %155 = arith.mulf %153, %154 : vector<2x64xf32>
    %156 = vector.broadcast %36 : vector<1x64xf32> to vector<2x64xf32>
    %157 = arith.addf %155, %156 : vector<2x64xf32>
    %cst_92 = arith.constant 0.000000e+00 : f32
    %158 = vector.broadcast %cst_92 : f32 to vector<2x64xf32>
    %159 = arith.maximumf %157, %158 : vector<2x64xf32>
    %160 = arith.truncf %159 : vector<2x64xf32> to vector<2x64xbf16>
    %161 = arith.truncf %32 : vector<64x16xf32> to vector<64x16xbf16>
    %cst_93 = arith.constant dense<0.000000e+00> : vector<2x16xf32>
    %162 = tpu.matmul %160, %161, %cst_93 {dimension_numbers = #tpu.dot_dimension_numbers<[1], [0], [0], [1], [0, 0, 1, 1], [], []>} : vector<2x64xbf16>, vector<64x16xbf16>, vector<2x16xf32> -> vector<2x16xf32>
    %cst_94 = arith.constant dense<0.000000e+00> : vector<2x16xf32>
    %163 = tpu.matmul %6, %162, %cst_94 {dimension_numbers = #tpu.dot_dimension_numbers<[1], [0], [0], [1], [0, 0, 1, 1], [], []>} : vector<2x2xf32>, vector<2x16xf32>, vector<2x16xf32> -> vector<2x16xf32>
    %164 = arith.subf %162, %163 : vector<2x16xf32>
    %165 = arith.mulf %164, %164 : vector<2x16xf32>
    %cst_95 = arith.constant dense<0.000000e+00> : vector<2x16xf32>
    %166 = tpu.matmul %6, %165, %cst_95 {dimension_numbers = #tpu.dot_dimension_numbers<[1], [0], [0], [1], [0, 0, 1, 1], [], []>} : vector<2x2xf32>, vector<2x16xf32>, vector<2x16xf32> -> vector<2x16xf32>
    %cst_96 = arith.constant 9.99999974E-6 : f32
    %167 = vector.broadcast %cst_96 : f32 to vector<2x16xf32>
    %168 = arith.addf %166, %167 : vector<2x16xf32>
    %169 = math.rsqrt %168 : vector<2x16xf32>
    %170 = arith.mulf %164, %169 : vector<2x16xf32>
    %c0_97 = arith.constant 0 : index
    %c0_98 = arith.constant 0 : index
    %171 = vector.load %arg24[%c0_97, %c0_98] : memref<16x64xf32, #tpu.memory_space<vmem>>, vector<16x64xf32>
    %c0_99 = arith.constant 0 : index
    %c0_100 = arith.constant 0 : index
    %172 = vector.load %arg27[%c0_99, %c0_100] : memref<64x16xf32, #tpu.memory_space<vmem>>, vector<64x16xf32>
    %c0_101 = arith.constant 0 : index
    %c0_102 = arith.constant 0 : index
    %173 = vector.load %arg25[%c0_101, %c0_102] : memref<1x64xf32, #tpu.memory_space<vmem>>, vector<1x64xf32>
    %c0_103 = arith.constant 0 : index
    %c0_104 = arith.constant 0 : index
    %174 = vector.load %arg26[%c0_103, %c0_104] : memref<1x64xf32, #tpu.memory_space<vmem>>, vector<1x64xf32>
    %175 = arith.truncf %81 : vector<4x16xf32> to vector<4x16xbf16>
    %176 = arith.truncf %171 : vector<16x64xf32> to vector<16x64xbf16>
    %cst_105 = arith.constant dense<0.000000e+00> : vector<4x64xf32>
    %177 = tpu.matmul %175, %176, %cst_105 {dimension_numbers = #tpu.dot_dimension_numbers<[1], [0], [0], [1], [0, 0, 1, 1], [], []>} : vector<4x16xbf16>, vector<16x64xbf16>, vector<4x64xf32> -> vector<4x64xf32>
    %cst_106 = arith.constant dense<0.000000e+00> : vector<4x64xf32>
    %178 = tpu.matmul %5, %177, %cst_106 {dimension_numbers = #tpu.dot_dimension_numbers<[1], [0], [0], [1], [0, 0, 1, 1], [], []>} : vector<4x4xf32>, vector<4x64xf32>, vector<4x64xf32> -> vector<4x64xf32>
    %179 = arith.subf %177, %178 : vector<4x64xf32>
    %180 = arith.mulf %179, %179 : vector<4x64xf32>
    %cst_107 = arith.constant dense<0.000000e+00> : vector<4x64xf32>
    %181 = tpu.matmul %5, %180, %cst_107 {dimension_numbers = #tpu.dot_dimension_numbers<[1], [0], [0], [1], [0, 0, 1, 1], [], []>} : vector<4x4xf32>, vector<4x64xf32>, vector<4x64xf32> -> vector<4x64xf32>
    %cst_108 = arith.constant 9.99999974E-6 : f32
    %182 = vector.broadcast %cst_108 : f32 to vector<4x64xf32>
    %183 = arith.addf %181, %182 : vector<4x64xf32>
    %184 = math.rsqrt %183 : vector<4x64xf32>
    %185 = arith.mulf %179, %184 : vector<4x64xf32>
    %186 = vector.broadcast %173 : vector<1x64xf32> to vector<4x64xf32>
    %187 = arith.mulf %185, %186 : vector<4x64xf32>
    %188 = vector.broadcast %174 : vector<1x64xf32> to vector<4x64xf32>
    %189 = arith.addf %187, %188 : vector<4x64xf32>
    %cst_109 = arith.constant 0.000000e+00 : f32
    %190 = vector.broadcast %cst_109 : f32 to vector<4x64xf32>
    %191 = arith.maximumf %189, %190 : vector<4x64xf32>
    %192 = arith.truncf %191 : vector<4x64xf32> to vector<4x64xbf16>
    %193 = arith.truncf %172 : vector<64x16xf32> to vector<64x16xbf16>
    %cst_110 = arith.constant dense<0.000000e+00> : vector<4x16xf32>
    %194 = tpu.matmul %192, %193, %cst_110 {dimension_numbers = #tpu.dot_dimension_numbers<[1], [0], [0], [1], [0, 0, 1, 1], [], []>} : vector<4x64xbf16>, vector<64x16xbf16>, vector<4x16xf32> -> vector<4x16xf32>
    %cst_111 = arith.constant dense<0.000000e+00> : vector<4x16xf32>
    %195 = tpu.matmul %5, %194, %cst_111 {dimension_numbers = #tpu.dot_dimension_numbers<[1], [0], [0], [1], [0, 0, 1, 1], [], []>} : vector<4x4xf32>, vector<4x16xf32>, vector<4x16xf32> -> vector<4x16xf32>
    %196 = arith.subf %194, %195 : vector<4x16xf32>
    %197 = arith.mulf %196, %196 : vector<4x16xf32>
    %cst_112 = arith.constant dense<0.000000e+00> : vector<4x16xf32>
    %198 = tpu.matmul %5, %197, %cst_112 {dimension_numbers = #tpu.dot_dimension_numbers<[1], [0], [0], [1], [0, 0, 1, 1], [], []>} : vector<4x4xf32>, vector<4x16xf32>, vector<4x16xf32> -> vector<4x16xf32>
    %cst_113 = arith.constant 9.99999974E-6 : f32
    %199 = vector.broadcast %cst_113 : f32 to vector<4x16xf32>
    %200 = arith.addf %198, %199 : vector<4x16xf32>
    %201 = math.rsqrt %200 : vector<4x16xf32>
    %202 = arith.mulf %196, %201 : vector<4x16xf32>
    %203 = arith.truncf %170 : vector<2x16xf32> to vector<2x16xbf16>
    %204 = arith.truncf %171 : vector<16x64xf32> to vector<16x64xbf16>
    %cst_114 = arith.constant dense<0.000000e+00> : vector<2x64xf32>
    %205 = tpu.matmul %203, %204, %cst_114 {dimension_numbers = #tpu.dot_dimension_numbers<[1], [0], [0], [1], [0, 0, 1, 1], [], []>} : vector<2x16xbf16>, vector<16x64xbf16>, vector<2x64xf32> -> vector<2x64xf32>
    %cst_115 = arith.constant dense<0.000000e+00> : vector<2x64xf32>
    %206 = tpu.matmul %6, %205, %cst_115 {dimension_numbers = #tpu.dot_dimension_numbers<[1], [0], [0], [1], [0, 0, 1, 1], [], []>} : vector<2x2xf32>, vector<2x64xf32>, vector<2x64xf32> -> vector<2x64xf32>
    %207 = arith.subf %205, %206 : vector<2x64xf32>
    %208 = arith.mulf %207, %207 : vector<2x64xf32>
    %cst_116 = arith.constant dense<0.000000e+00> : vector<2x64xf32>
    %209 = tpu.matmul %6, %208, %cst_116 {dimension_numbers = #tpu.dot_dimension_numbers<[1], [0], [0], [1], [0, 0, 1, 1], [], []>} : vector<2x2xf32>, vector<2x64xf32>, vector<2x64xf32> -> vector<2x64xf32>
    %cst_117 = arith.constant 9.99999974E-6 : f32
    %210 = vector.broadcast %cst_117 : f32 to vector<2x64xf32>
    %211 = arith.addf %209, %210 : vector<2x64xf32>
    %212 = math.rsqrt %211 : vector<2x64xf32>
    %213 = arith.mulf %207, %212 : vector<2x64xf32>
    %214 = vector.broadcast %173 : vector<1x64xf32> to vector<2x64xf32>
    %215 = arith.mulf %213, %214 : vector<2x64xf32>
    %216 = vector.broadcast %174 : vector<1x64xf32> to vector<2x64xf32>
    %217 = arith.addf %215, %216 : vector<2x64xf32>
    %cst_118 = arith.constant 0.000000e+00 : f32
    %218 = vector.broadcast %cst_118 : f32 to vector<2x64xf32>
    %219 = arith.maximumf %217, %218 : vector<2x64xf32>
    %220 = arith.truncf %219 : vector<2x64xf32> to vector<2x64xbf16>
    %221 = arith.truncf %172 : vector<64x16xf32> to vector<64x16xbf16>
    %cst_119 = arith.constant dense<0.000000e+00> : vector<2x16xf32>
    %222 = tpu.matmul %220, %221, %cst_119 {dimension_numbers = #tpu.dot_dimension_numbers<[1], [0], [0], [1], [0, 0, 1, 1], [], []>} : vector<2x64xbf16>, vector<64x16xbf16>, vector<2x16xf32> -> vector<2x16xf32>
    %cst_120 = arith.constant dense<0.000000e+00> : vector<2x16xf32>
    %223 = tpu.matmul %6, %222, %cst_120 {dimension_numbers = #tpu.dot_dimension_numbers<[1], [0], [0], [1], [0, 0, 1, 1], [], []>} : vector<2x2xf32>, vector<2x16xf32>, vector<2x16xf32> -> vector<2x16xf32>
    %224 = arith.subf %222, %223 : vector<2x16xf32>
    %225 = arith.mulf %224, %224 : vector<2x16xf32>
    %cst_121 = arith.constant dense<0.000000e+00> : vector<2x16xf32>
    %226 = tpu.matmul %6, %225, %cst_121 {dimension_numbers = #tpu.dot_dimension_numbers<[1], [0], [0], [1], [0, 0, 1, 1], [], []>} : vector<2x2xf32>, vector<2x16xf32>, vector<2x16xf32> -> vector<2x16xf32>
    %cst_122 = arith.constant 9.99999974E-6 : f32
    %227 = vector.broadcast %cst_122 : f32 to vector<2x16xf32>
    %228 = arith.addf %226, %227 : vector<2x16xf32>
    %229 = math.rsqrt %228 : vector<2x16xf32>
    %230 = arith.mulf %224, %229 : vector<2x16xf32>
    %c0_123 = arith.constant 0 : index
    %c0_124 = arith.constant 0 : index
    %231 = vector.load %arg12[%c0_123, %c0_124] : memref<24x192xf32, #tpu.memory_space<vmem>>, vector<24x192xf32>
    %c0_125 = arith.constant 0 : index
    %c0_126 = arith.constant 0 : index
    %232 = vector.load %arg13[%c0_125, %c0_126] : memref<24x32xf32, #tpu.memory_space<vmem>>, vector<24x32xf32>
    %c0_127 = arith.constant 0 : index
    %c0_128 = arith.constant 0 : index
    %233 = vector.load %arg14[%c0_127, %c0_128] : memref<192x32xf32, #tpu.memory_space<vmem>>, vector<192x32xf32>
    %c0_129 = arith.constant 0 : index
    %c0_130 = arith.constant 0 : index
    %234 = vector.load %arg15[%c0_129, %c0_130] : memref<32x64xf32, #tpu.memory_space<vmem>>, vector<32x64xf32>
    %c0_131 = arith.constant 0 : index
    %c0_132 = arith.constant 0 : index
    %235 = vector.load %arg16[%c0_131, %c0_132] : memref<64x32xf32, #tpu.memory_space<vmem>>, vector<64x32xf32>
    %236 = arith.truncf %231 : vector<24x192xf32> to vector<24x192xbf16>
    %237 = arith.truncf %233 : vector<192x32xf32> to vector<192x32xbf16>
    %cst_133 = arith.constant dense<0.000000e+00> : vector<24x32xf32>
    %238 = tpu.matmul %236, %237, %cst_133 {dimension_numbers = #tpu.dot_dimension_numbers<[1], [0], [0], [1], [0, 0, 1, 1], [], []>} : vector<24x192xbf16>, vector<192x32xbf16>, vector<24x32xf32> -> vector<24x32xf32>
    %239 = arith.addf %238, %232 : vector<24x32xf32>
    %240 = arith.truncf %239 : vector<24x32xf32> to vector<24x32xbf16>
    %241 = arith.truncf %234 : vector<32x64xf32> to vector<32x64xbf16>
    %cst_134 = arith.constant dense<0.000000e+00> : vector<24x64xf32>
    %242 = tpu.matmul %240, %241, %cst_134 {dimension_numbers = #tpu.dot_dimension_numbers<[1], [0], [0], [1], [0, 0, 1, 1], [], []>} : vector<24x32xbf16>, vector<32x64xbf16>, vector<24x64xf32> -> vector<24x64xf32>
    %cst_135 = arith.constant 0.000000e+00 : f32
    %243 = vector.broadcast %cst_135 : f32 to vector<24x64xf32>
    %244 = arith.maximumf %242, %243 : vector<24x64xf32>
    %245 = arith.truncf %244 : vector<24x64xf32> to vector<24x64xbf16>
    %246 = arith.truncf %235 : vector<64x32xf32> to vector<64x32xbf16>
    %cst_136 = arith.constant dense<0.000000e+00> : vector<24x32xf32>
    %247 = tpu.matmul %245, %246, %cst_136 {dimension_numbers = #tpu.dot_dimension_numbers<[1], [0], [0], [1], [0, 0, 1, 1], [], []>} : vector<24x64xbf16>, vector<64x32xbf16>, vector<24x32xf32> -> vector<24x32xf32>
    %248 = arith.addf %239, %247 : vector<24x32xf32>
    %cst_137 = arith.constant dense<0.000000e+00> : vector<4x32xf32>
    %249 = tpu.matmul %2, %248, %cst_137 {dimension_numbers = #tpu.dot_dimension_numbers<[1], [0], [0], [1], [0, 0, 1, 1], [], []>} : vector<4x24xf32>, vector<24x32xf32>, vector<4x32xf32> -> vector<4x32xf32>
    %c0_138 = arith.constant 0 : index
    %c0_139 = arith.constant 0 : index
    %250 = vector.load %arg17[%c0_138, %c0_139] : memref<32x64xf32, #tpu.memory_space<vmem>>, vector<32x64xf32>
    %c0_140 = arith.constant 0 : index
    %c0_141 = arith.constant 0 : index
    %251 = vector.load %arg20[%c0_140, %c0_141] : memref<64x64xf32, #tpu.memory_space<vmem>>, vector<64x64xf32>
    %c0_142 = arith.constant 0 : index
    %c0_143 = arith.constant 0 : index
    %252 = vector.load %arg23[%c0_142, %c0_143] : memref<64x16xf32, #tpu.memory_space<vmem>>, vector<64x16xf32>
    %c0_144 = arith.constant 0 : index
    %c0_145 = arith.constant 0 : index
    %253 = vector.load %arg18[%c0_144, %c0_145] : memref<1x64xf32, #tpu.memory_space<vmem>>, vector<1x64xf32>
    %c0_146 = arith.constant 0 : index
    %c0_147 = arith.constant 0 : index
    %254 = vector.load %arg21[%c0_146, %c0_147] : memref<1x64xf32, #tpu.memory_space<vmem>>, vector<1x64xf32>
    %c0_148 = arith.constant 0 : index
    %c0_149 = arith.constant 0 : index
    %255 = vector.load %arg19[%c0_148, %c0_149] : memref<1x64xf32, #tpu.memory_space<vmem>>, vector<1x64xf32>
    %c0_150 = arith.constant 0 : index
    %c0_151 = arith.constant 0 : index
    %256 = vector.load %arg22[%c0_150, %c0_151] : memref<1x64xf32, #tpu.memory_space<vmem>>, vector<1x64xf32>
    %257 = arith.truncf %249 : vector<4x32xf32> to vector<4x32xbf16>
    %258 = arith.truncf %250 : vector<32x64xf32> to vector<32x64xbf16>
    %cst_152 = arith.constant dense<0.000000e+00> : vector<4x64xf32>
    %259 = tpu.matmul %257, %258, %cst_152 {dimension_numbers = #tpu.dot_dimension_numbers<[1], [0], [0], [1], [0, 0, 1, 1], [], []>} : vector<4x32xbf16>, vector<32x64xbf16>, vector<4x64xf32> -> vector<4x64xf32>
    %cst_153 = arith.constant dense<0.000000e+00> : vector<4x64xf32>
    %260 = tpu.matmul %5, %259, %cst_153 {dimension_numbers = #tpu.dot_dimension_numbers<[1], [0], [0], [1], [0, 0, 1, 1], [], []>} : vector<4x4xf32>, vector<4x64xf32>, vector<4x64xf32> -> vector<4x64xf32>
    %261 = arith.subf %259, %260 : vector<4x64xf32>
    %262 = arith.mulf %261, %261 : vector<4x64xf32>
    %cst_154 = arith.constant dense<0.000000e+00> : vector<4x64xf32>
    %263 = tpu.matmul %5, %262, %cst_154 {dimension_numbers = #tpu.dot_dimension_numbers<[1], [0], [0], [1], [0, 0, 1, 1], [], []>} : vector<4x4xf32>, vector<4x64xf32>, vector<4x64xf32> -> vector<4x64xf32>
    %cst_155 = arith.constant 9.99999974E-6 : f32
    %264 = vector.broadcast %cst_155 : f32 to vector<4x64xf32>
    %265 = arith.addf %263, %264 : vector<4x64xf32>
    %266 = math.rsqrt %265 : vector<4x64xf32>
    %267 = arith.mulf %261, %266 : vector<4x64xf32>
    %268 = vector.broadcast %253 : vector<1x64xf32> to vector<4x64xf32>
    %269 = arith.mulf %267, %268 : vector<4x64xf32>
    %270 = vector.broadcast %255 : vector<1x64xf32> to vector<4x64xf32>
    %271 = arith.addf %269, %270 : vector<4x64xf32>
    %cst_156 = arith.constant 0.000000e+00 : f32
    %272 = vector.broadcast %cst_156 : f32 to vector<4x64xf32>
    %273 = arith.maximumf %271, %272 : vector<4x64xf32>
    %274 = arith.truncf %273 : vector<4x64xf32> to vector<4x64xbf16>
    %275 = arith.truncf %251 : vector<64x64xf32> to vector<64x64xbf16>
    %cst_157 = arith.constant dense<0.000000e+00> : vector<4x64xf32>
    %276 = tpu.matmul %274, %275, %cst_157 {dimension_numbers = #tpu.dot_dimension_numbers<[1], [0], [0], [1], [0, 0, 1, 1], [], []>} : vector<4x64xbf16>, vector<64x64xbf16>, vector<4x64xf32> -> vector<4x64xf32>
    %cst_158 = arith.constant dense<0.000000e+00> : vector<4x64xf32>
    %277 = tpu.matmul %5, %276, %cst_158 {dimension_numbers = #tpu.dot_dimension_numbers<[1], [0], [0], [1], [0, 0, 1, 1], [], []>} : vector<4x4xf32>, vector<4x64xf32>, vector<4x64xf32> -> vector<4x64xf32>
    %278 = arith.subf %276, %277 : vector<4x64xf32>
    %279 = arith.mulf %278, %278 : vector<4x64xf32>
    %cst_159 = arith.constant dense<0.000000e+00> : vector<4x64xf32>
    %280 = tpu.matmul %5, %279, %cst_159 {dimension_numbers = #tpu.dot_dimension_numbers<[1], [0], [0], [1], [0, 0, 1, 1], [], []>} : vector<4x4xf32>, vector<4x64xf32>, vector<4x64xf32> -> vector<4x64xf32>
    %cst_160 = arith.constant 9.99999974E-6 : f32
    %281 = vector.broadcast %cst_160 : f32 to vector<4x64xf32>
    %282 = arith.addf %280, %281 : vector<4x64xf32>
    %283 = math.rsqrt %282 : vector<4x64xf32>
    %284 = arith.mulf %278, %283 : vector<4x64xf32>
    %285 = vector.broadcast %254 : vector<1x64xf32> to vector<4x64xf32>
    %286 = arith.mulf %284, %285 : vector<4x64xf32>
    %287 = vector.broadcast %256 : vector<1x64xf32> to vector<4x64xf32>
    %288 = arith.addf %286, %287 : vector<4x64xf32>
    %cst_161 = arith.constant 0.000000e+00 : f32
    %289 = vector.broadcast %cst_161 : f32 to vector<4x64xf32>
    %290 = arith.maximumf %288, %289 : vector<4x64xf32>
    %291 = arith.truncf %290 : vector<4x64xf32> to vector<4x64xbf16>
    %292 = arith.truncf %252 : vector<64x16xf32> to vector<64x16xbf16>
    %cst_162 = arith.constant dense<0.000000e+00> : vector<4x16xf32>
    %293 = tpu.matmul %291, %292, %cst_162 {dimension_numbers = #tpu.dot_dimension_numbers<[1], [0], [0], [1], [0, 0, 1, 1], [], []>} : vector<4x64xbf16>, vector<64x16xbf16>, vector<4x16xf32> -> vector<4x16xf32>
    %cst_163 = arith.constant dense<0.000000e+00> : vector<4x16xf32>
    %294 = tpu.matmul %5, %293, %cst_163 {dimension_numbers = #tpu.dot_dimension_numbers<[1], [0], [0], [1], [0, 0, 1, 1], [], []>} : vector<4x4xf32>, vector<4x16xf32>, vector<4x16xf32> -> vector<4x16xf32>
    %295 = arith.subf %293, %294 : vector<4x16xf32>
    %296 = arith.mulf %295, %295 : vector<4x16xf32>
    %cst_164 = arith.constant dense<0.000000e+00> : vector<4x16xf32>
    %297 = tpu.matmul %5, %296, %cst_164 {dimension_numbers = #tpu.dot_dimension_numbers<[1], [0], [0], [1], [0, 0, 1, 1], [], []>} : vector<4x4xf32>, vector<4x16xf32>, vector<4x16xf32> -> vector<4x16xf32>
    %cst_165 = arith.constant 9.99999974E-6 : f32
    %298 = vector.broadcast %cst_165 : f32 to vector<4x16xf32>
    %299 = arith.addf %297, %298 : vector<4x16xf32>
    %300 = math.rsqrt %299 : vector<4x16xf32>
    %301 = arith.mulf %295, %300 : vector<4x16xf32>
    %302 = arith.mulf %202, %202 : vector<4x16xf32>
    %cst_166 = arith.constant dense<0.000000e+00> : vector<4xf32>
    %303 = vector.multi_reduction <add>, %302, %cst_166 [1] : vector<4x16xf32> to vector<4xf32>
    %304 = vector.shape_cast %303 : vector<4xf32> to vector<4x1xf32>
    %305 = math.sqrt %304 : vector<4x1xf32>
    %cst_167 = arith.constant 9.99999996E-13 : f32
    %306 = vector.broadcast %cst_167 : f32 to vector<4x1xf32>
    %307 = arith.maximumf %305, %306 : vector<4x1xf32>
    %308 = vector.broadcast %307 : vector<4x1xf32> to vector<4x16xf32>
    %309 = arith.divf %202, %308 : vector<4x16xf32>
    %310 = arith.mulf %301, %301 : vector<4x16xf32>
    %cst_168 = arith.constant dense<0.000000e+00> : vector<4xf32>
    %311 = vector.multi_reduction <add>, %310, %cst_168 [1] : vector<4x16xf32> to vector<4xf32>
    %312 = vector.shape_cast %311 : vector<4xf32> to vector<4x1xf32>
    %313 = math.sqrt %312 : vector<4x1xf32>
    %cst_169 = arith.constant 9.99999996E-13 : f32
    %314 = vector.broadcast %cst_169 : f32 to vector<4x1xf32>
    %315 = arith.maximumf %313, %314 : vector<4x1xf32>
    %316 = vector.broadcast %315 : vector<4x1xf32> to vector<4x16xf32>
    %317 = arith.divf %301, %316 : vector<4x16xf32>
    %cst_170 = arith.constant dense<0.000000e+00> : vector<4x4xf32>
    %318 = tpu.matmul %309, %317, %cst_170 {dimension_numbers = #tpu.dot_dimension_numbers<[1], [1], [0], [0], [0, 0, 1, 0], [], []>} : vector<4x16xf32>, vector<4x16xf32>, vector<4x4xf32> -> vector<4x4xf32>
    %cst_171 = arith.constant 1.000000e+00 : f32
    %319 = vector.broadcast %cst_171 : f32 to vector<4x4xf32>
    %320 = arith.divf %318, %319 : vector<4x4xf32>
    %cst_172 = arith.constant 5.000000e-01 : f32
    %321 = vector.broadcast %cst_172 : f32 to vector<4x4xf32>
    %322 = arith.cmpf ogt, %8, %321 : vector<4x4xf32>
    %cst_173 = arith.constant -1.000000e+30 : f32
    %323 = vector.broadcast %cst_173 : f32 to vector<4x4xf32>
    %324 = arith.select %322, %320, %323 : vector<4x4xi1>, vector<4x4xf32>
    %cst_174 = arith.constant dense<0xFF800000> : vector<4xf32>
    %325 = vector.multi_reduction <maximumf>, %324, %cst_174 [1] : vector<4x4xf32> to vector<4xf32>
    %326 = vector.shape_cast %325 : vector<4xf32> to vector<4x1xf32>
    %327 = vector.broadcast %326 : vector<4x1xf32> to vector<4x4xf32>
    %328 = arith.subf %324, %327 : vector<4x4xf32>
    %329 = math.exp %328 : vector<4x4xf32>
    %cst_175 = arith.constant dense<0.000000e+00> : vector<4xf32>
    %330 = vector.multi_reduction <add>, %329, %cst_175 [1] : vector<4x4xf32> to vector<4xf32>
    %331 = vector.shape_cast %330 : vector<4xf32> to vector<4x1xf32>
    %332 = math.log %331 : vector<4x1xf32>
    %333 = arith.addf %326, %332 : vector<4x1xf32>
    %334 = arith.mulf %320, %9 : vector<4x4xf32>
    %cst_176 = arith.constant dense<0.000000e+00> : vector<4xf32>
    %335 = vector.multi_reduction <add>, %334, %cst_176 [1] : vector<4x4xf32> to vector<4xf32>
    %336 = vector.shape_cast %335 : vector<4xf32> to vector<4x1xf32>
    %337 = arith.subf %333, %336 : vector<4x1xf32>
    %cst_177 = arith.constant dense<0.000000e+00> : vector<1xf32>
    %338 = vector.multi_reduction <add>, %337, %cst_177 [0] : vector<4x1xf32> to vector<1xf32>
    %339 = vector.shape_cast %338 : vector<1xf32> to vector<1x1xf32>
    %cst_178 = arith.constant 2.000000e+00 : f32
    %340 = vector.broadcast %cst_178 : f32 to vector<1x1xf32>
    %341 = arith.mulf %340, %339 : vector<1x1xf32>
    %cst_179 = arith.constant 2.000000e+00 : f32
    %342 = vector.broadcast %cst_179 : f32 to vector<1x1xf32>
    %343 = arith.divf %341, %342 : vector<1x1xf32>
    %cst_180 = arith.constant dense<0.000000e+00> : vector<4x16xf32>
    %344 = tpu.matmul %7, %230, %cst_180 {dimension_numbers = #tpu.dot_dimension_numbers<[1], [0], [0], [1], [0, 0, 1, 1], [], []>} : vector<4x2xf32>, vector<2x16xf32>, vector<4x16xf32> -> vector<4x16xf32>
    %cst_181 = arith.constant dense<0.000000e+00> : vector<4x16xf32>
    %345 = tpu.matmul %7, %170, %cst_181 {dimension_numbers = #tpu.dot_dimension_numbers<[1], [0], [0], [1], [0, 0, 1, 1], [], []>} : vector<4x2xf32>, vector<2x16xf32>, vector<4x16xf32> -> vector<4x16xf32>
    %346 = arith.mulf %344, %81 : vector<4x16xf32>
    %cst_182 = arith.constant dense<0.000000e+00> : vector<4xf32>
    %347 = vector.multi_reduction <add>, %346, %cst_182 [1] : vector<4x16xf32> to vector<4xf32>
    %348 = vector.shape_cast %347 : vector<4xf32> to vector<4x1xf32>
    %349 = arith.mulf %344, %344 : vector<4x16xf32>
    %cst_183 = arith.constant dense<0.000000e+00> : vector<4xf32>
    %350 = vector.multi_reduction <add>, %349, %cst_183 [1] : vector<4x16xf32> to vector<4xf32>
    %351 = vector.shape_cast %350 : vector<4xf32> to vector<4x1xf32>
    %352 = math.sqrt %351 : vector<4x1xf32>
    %353 = arith.mulf %81, %81 : vector<4x16xf32>
    %cst_184 = arith.constant dense<0.000000e+00> : vector<4xf32>
    %354 = vector.multi_reduction <add>, %353, %cst_184 [1] : vector<4x16xf32> to vector<4xf32>
    %355 = vector.shape_cast %354 : vector<4xf32> to vector<4x1xf32>
    %356 = math.sqrt %355 : vector<4x1xf32>
    %357 = arith.mulf %352, %356 : vector<4x1xf32>
    %cst_185 = arith.constant 9.99999993E-9 : f32
    %358 = vector.broadcast %cst_185 : f32 to vector<4x1xf32>
    %359 = arith.maximumf %357, %358 : vector<4x1xf32>
    %360 = arith.divf %348, %359 : vector<4x1xf32>
    %cst_186 = arith.constant dense<0.000000e+00> : vector<1xf32>
    %361 = vector.multi_reduction <add>, %360, %cst_186 [0] : vector<4x1xf32> to vector<1xf32>
    %362 = vector.shape_cast %361 : vector<1xf32> to vector<1x1xf32>
    %363 = arith.mulf %202, %345 : vector<4x16xf32>
    %cst_187 = arith.constant dense<0.000000e+00> : vector<4xf32>
    %364 = vector.multi_reduction <add>, %363, %cst_187 [1] : vector<4x16xf32> to vector<4xf32>
    %365 = vector.shape_cast %364 : vector<4xf32> to vector<4x1xf32>
    %366 = arith.mulf %202, %202 : vector<4x16xf32>
    %cst_188 = arith.constant dense<0.000000e+00> : vector<4xf32>
    %367 = vector.multi_reduction <add>, %366, %cst_188 [1] : vector<4x16xf32> to vector<4xf32>
    %368 = vector.shape_cast %367 : vector<4xf32> to vector<4x1xf32>
    %369 = math.sqrt %368 : vector<4x1xf32>
    %370 = arith.mulf %345, %345 : vector<4x16xf32>
    %cst_189 = arith.constant dense<0.000000e+00> : vector<4xf32>
    %371 = vector.multi_reduction <add>, %370, %cst_189 [1] : vector<4x16xf32> to vector<4xf32>
    %372 = vector.shape_cast %371 : vector<4xf32> to vector<4x1xf32>
    %373 = math.sqrt %372 : vector<4x1xf32>
    %374 = arith.mulf %369, %373 : vector<4x1xf32>
    %cst_190 = arith.constant 9.99999993E-9 : f32
    %375 = vector.broadcast %cst_190 : f32 to vector<4x1xf32>
    %376 = arith.maximumf %374, %375 : vector<4x1xf32>
    %377 = arith.divf %365, %376 : vector<4x1xf32>
    %cst_191 = arith.constant dense<0.000000e+00> : vector<1xf32>
    %378 = vector.multi_reduction <add>, %377, %cst_191 [0] : vector<4x1xf32> to vector<1xf32>
    %379 = vector.shape_cast %378 : vector<1xf32> to vector<1x1xf32>
    %380 = arith.addf %362, %379 : vector<1x1xf32>
    %cst_192 = arith.constant 2.000000e+00 : f32
    %381 = vector.broadcast %cst_192 : f32 to vector<1x1xf32>
    %382 = arith.divf %380, %381 : vector<1x1xf32>
    %cst_193 = arith.constant 4.004000e+00 : f32
    %383 = vector.broadcast %cst_193 : f32 to vector<1x1xf32>
    %384 = arith.subf %383, %382 : vector<1x1xf32>
    %cst_194 = arith.constant 1.000000e+00 : f32
    %385 = vector.broadcast %cst_194 : f32 to vector<1x1xf32>
    %386 = arith.mulf %385, %384 : vector<1x1xf32>
    %387 = arith.addf %343, %386 : vector<1x1xf32>
    %c0_195 = arith.constant 0 : index
    %c0_196 = arith.constant 0 : index
    %388 = vector.load %arg42[%c0_195, %c0_196] : memref<1x1xf32, #tpu.memory_space<vmem>>, vector<1x1xf32>
    tpu.vector_store %arg42[%c0_195, %c0_196], %387 {strides = array<i32>} : memref<1x1xf32, #tpu.memory_space<vmem>>, vector<1x1xf32>,
    return
  }
}

</mosaic_0001>

<llo_original>
// kernel: tile.14
$region0: #{tile.14}
  %s0 = inlined_call_operand.vmem [shape: f32[6,6,32], index: 0, kind: input, shape index: {}]
  %s1 = inlined_call_operand.vmem [shape: f32[36,32], index: 1, kind: output, shape index: {}]
  %v2 = vld [vmem:[%s0] sm:$0x3f]
  %vm3 = vcmask 261120
  %4 = vst.msk [vmem:[%s1] sm:$0x3f] %vm3, %v2
  %s5 = scalar_lea.vmem %s0, 8
  %v6 = vld [vmem:[%s5] sm:$0x3f]
  %vm7 = vcmask 261120
  %s8 = scalar_lea.vmem %s1, 6
  %9 = vst.msk [vmem:[%s8] sm:$0x3f] %vm7, %v6
  %s10 = scalar_lea.vmem %s0, 16
  %v11 = vld [vmem:[%s10] sm:$0x3f]
  %vm12 = vcmask 261120
  %s13 = scalar_lea.vmem %s1, 12
  %14 = vst.msk [vmem:[%s13] sm:$0x3f] %vm12, %v11
  %s15 = scalar_lea.vmem %s0, 24
  %v16 = vld [vmem:[%s15] sm:$0x3f]
  %vm17 = vcmask 261120
  %s18 = scalar_lea.vmem %s1, 18
  %19 = vst.msk [vmem:[%s18] sm:$0x3f] %vm17, %v16
  %s20 = scalar_lea.vmem %s0, 32
  %v21 = vld [vmem:[%s20] sm:$0x3f]
  %vm22 = vcmask 261120
  %s23 = scalar_lea.vmem %s1, 24
  %24 = vst.msk [vmem:[%s23] sm:$0x3f] %vm22, %v21
  %s25 = scalar_lea.vmem %s0, 40
  %v26 = vld [vmem:[%s25] sm:$0x3f]
  %vm27 = vcmask 261120
  %s28 = scalar_lea.vmem %s1, 30
  %29 = vst.msk [vmem:[%s28] sm:$0x3f] %vm27, %v26

// kernel: tile.19
$region0: #{tile.19}
  %s0 = inlined_call_operand.vmem [shape: f32[4,6,32], index: 0, kind: input, shape index: {}]
  %s1 = inlined_call_operand.vmem [shape: f32[24,32], index: 1, kind: output, shape index: {}]
  %v2 = vld [vmem:[%s0] sm:$0x3f]
  %vm3 = vcmask 261120
  %4 = vst.msk [vmem:[%s1] sm:$0x3f] %vm3, %v2
  %s5 = scalar_lea.vmem %s0, 8
  %v6 = vld [vmem:[%s5] sm:$0x3f]
  %vm7 = vcmask 261120
  %s8 = scalar_lea.vmem %s1, 6
  %9 = vst.msk [vmem:[%s8] sm:$0x3f] %vm7, %v6
  %s10 = scalar_lea.vmem %s0, 16
  %v11 = vld [vmem:[%s10] sm:$0x3f]
  %vm12 = vcmask 261120
  %s13 = scalar_lea.vmem %s1, 12
  %14 = vst.msk [vmem:[%s13] sm:$0x3f] %vm12, %v11
  %s15 = scalar_lea.vmem %s0, 24
  %v16 = vld [vmem:[%s15] sm:$0x3f]
  %vm17 = vcmask 261120
  %s18 = scalar_lea.vmem %s1, 18
  %19 = vst.msk [vmem:[%s18] sm:$0x3f] %vm17, %v16

// kernel: bridge_forward.1
$region0: #{bridge_forward.1}
  #allocation0 [shape = 'u32[]', space=smem, size = 0x4, offset = 0x4, fixed_abs, tag = 'smem constant byte address 0x4 - core index']
  #allocation1 [shape = 'u32[144,128]{1,0:T(1,128)}', space=vmem, size = 0x12000, scoped, tag = 'internal scratch']
  %s0 = inlined_call_operand.smem [shape: u32[43], index: -1, kind: input, shape index: {}]
  %s1 = sld [smem:[%s0]]
  %s2 = scalar_lea.smem %s0, 1
  %s3 = sld [smem:[%s2]]
  %s4 = scalar_lea.smem %s0, 2
  %s5 = sld [smem:[%s4]]
  %s6 = scalar_lea.smem %s0, 3
  %s7 = sld [smem:[%s6]]
  %s8 = scalar_lea.smem %s0, 4
  %s9 = sld [smem:[%s8]]
  %s10 = scalar_lea.smem %s0, 5
  %s11 = sld [smem:[%s10]]
  %s12 = scalar_lea.smem %s0, 6
  %s13 = sld [smem:[%s12]]
  %s14 = scalar_lea.smem %s0, 7
  %s15 = sld [smem:[%s14]]
  %s16 = scalar_lea.smem %s0, 8
  %s17 = sld [smem:[%s16]]
  %s18 = scalar_lea.smem %s0, 9
  %s19 = sld [smem:[%s18]]
  %s20 = scalar_lea.smem %s0, 10
  %s21 = sld [smem:[%s20]]
  %s22 = scalar_lea.smem %s0, 11
  %s23 = sld [smem:[%s22]]
  %s24 = scalar_lea.smem %s0, 12
  %s25 = sld [smem:[%s24]]
  %s26 = scalar_lea.smem %s0, 13
  %s27 = sld [smem:[%s26]]
  %s28 = scalar_lea.smem %s0, 14
  %s29 = sld [smem:[%s28]]
  %s30 = scalar_lea.smem %s0, 15
  %s31 = sld [smem:[%s30]]
  %s32 = scalar_lea.smem %s0, 16
  %s33 = sld [smem:[%s32]]
  %s34 = scalar_lea.smem %s0, 17
  %s35 = sld [smem:[%s34]]
  %s36 = scalar_lea.smem %s0, 18
  %s37 = sld [smem:[%s36]]
  %s38 = scalar_lea.smem %s0, 19
  %s39 = sld [smem:[%s38]]
  %s40 = scalar_lea.smem %s0, 20
  %s41 = sld [smem:[%s40]]
  %s42 = scalar_lea.smem %s0, 21
  %s43 = sld [smem:[%s42]]
  %s44 = scalar_lea.smem %s0, 22
  %s45 = sld [smem:[%s44]]
  %s46 = scalar_lea.smem %s0, 23
  %s47 = sld [smem:[%s46]]
  %s48 = scalar_lea.smem %s0, 24
  %s49 = sld [smem:[%s48]]
  %s50 = scalar_lea.smem %s0, 25
  %s51 = sld [smem:[%s50]]
  %s52 = scalar_lea.smem %s0, 26
  %s53 = sld [smem:[%s52]]
  %s54 = scalar_lea.smem %s0, 27
  %s55 = sld [smem:[%s54]]
  %s56 = scalar_lea.smem %s0, 28
  %s57 = sld [smem:[%s56]]
  %s58 = scalar_lea.smem %s0, 29
  %s59 = sld [smem:[%s58]]
  %s60 = scalar_lea.smem %s0, 30
  %s61 = sld [smem:[%s60]]
  %s62 = scalar_lea.smem %s0, 31
  %s63 = sld [smem:[%s62]]
  %s64 = scalar_lea.smem %s0, 32
  %s65 = sld [smem:[%s64]]
  %s66 = scalar_lea.smem %s0, 33
  %s67 = sld [smem:[%s66]]
  %s68 = scalar_lea.smem %s0, 34
  %s69 = sld [smem:[%s68]]
  %s70 = scalar_lea.smem %s0, 35
  %s71 = sld [smem:[%s70]]
  %s72 = scalar_lea.smem %s0, 36
  %s73 = sld [smem:[%s72]]
  %s74 = scalar_lea.smem %s0, 37
  %s75 = sld [smem:[%s74]]
  %s76 = scalar_lea.smem %s0, 38
  %s77 = sld [smem:[%s76]]
  %s78 = scalar_lea.smem %s0, 39
  %s79 = sld [smem:[%s78]]
  %s80 = scalar_lea.smem %s0, 40
  %s81 = sld [smem:[%s80]]
  %s82 = scalar_lea.smem %s0, 41
  %s83 = sld [smem:[%s82]]
  %s84 = scalar_lea.smem %s0, 42
  %s85 = sld [smem:[%s84]]
  %s86 = sld [smem:[#allocation0]]
  $region178: #{bridge_forward.1} parent=0
    _
  %s88 = ssub.s32 1, %s86
  %s89 = scalar_select 0, %s88, %s86
  $region1: #{bridge_forward.1} parent=0
    #allocation2 [shape = 'u8[512]{0}', space=vmem, size = 0x400, scoped, tag = 'output window, operand 0, single buffered']
    #allocation3 [shape = 's32[1]{0}', space=sflag, size = 0x4, scoped, tag = 'scoped memory for bridge_forward.1']
    %90 = vsyncpa [#allocation3], 0
    // Predicated region
    $region2: #{bridge_forward.1} parent=1 // pred_check
      _
    $region3: #{bridge_forward.1} parent=1 // pred_check_branch
      %92 = sbr.rel (0) target = $region5
    $region4: #{bridge_forward.1} parent=1 // pred_region
      _
    $region5: #{bridge_forward.1} parent=1 // pred_fallthru
      _
    // Predicated region
    $region6: #{bridge_forward.1} parent=1 // pred_check
      _
    $region7: #{bridge_forward.1} parent=1 // pred_check_branch
      %94 = sbr.rel (0) target = $region9
    $region8: #{bridge_forward.1} parent=1 // pred_region
      _
    $region9: #{bridge_forward.1} parent=1 // pred_fallthru
      _
    // Predicated region
    $region10: #{bridge_forward.1} parent=1 // pred_check
      _
    $region11: #{bridge_forward.1} parent=1 // pred_check_branch
      %96 = sbr.rel (0) target = $region13
    $region12: #{bridge_forward.1} parent=1 // pred_region
      _
    $region13: #{bridge_forward.1} parent=1 // pred_fallthru
      _
    // Predicated region
    $region14: #{bridge_forward.1} parent=1 // pred_check
      _
    $region15: #{bridge_forward.1} parent=1 // pred_check_branch
      %98 = sbr.rel (0) target = $region17
    $region16: #{bridge_forward.1} parent=1 // pred_region
      _
    $region17: #{bridge_forward.1} parent=1 // pred_fallthru
      _
    // Predicated region
    $region18: #{bridge_forward.1} parent=1 // pred_check
      _
    $region19: #{bridge_forward.1} parent=1 // pred_check_branch
      %100 = sbr.rel (0) target = $region21
    $region20: #{bridge_forward.1} parent=1 // pred_region
      _
    $region21: #{bridge_forward.1} parent=1 // pred_fallthru
      _
    // Predicated region
    $region22: #{bridge_forward.1} parent=1 // pred_check
      _
    $region23: #{bridge_forward.1} parent=1 // pred_check_branch
      %102 = sbr.rel (0) target = $region25
    $region24: #{bridge_forward.1} parent=1 // pred_region
      _
    $region25: #{bridge_forward.1} parent=1 // pred_fallthru
      _
    // Predicated region
    $region26: #{bridge_forward.1} parent=1 // pred_check
      _
    $region27: #{bridge_forward.1} parent=1 // pred_check_branch
      %104 = sbr.rel (0) target = $region29
    $region28: #{bridge_forward.1} parent=1 // pred_region
      _
    $region29: #{bridge_forward.1} parent=1 // pred_fallthru
      _
    // Predicated region
    $region30: #{bridge_forward.1} parent=1 // pred_check
      _
    $region31: #{bridge_forward.1} parent=1 // pred_check_branch
      %106 = sbr.rel (0) target = $region33
    $region32: #{bridge_forward.1} parent=1 // pred_region
      _
    $region33: #{bridge_forward.1} parent=1 // pred_fallthru
      _
    // Predicated region
    $region34: #{bridge_forward.1} parent=1 // pred_check
      _
    $region35: #{bridge_forward.1} parent=1 // pred_check_branch
      %108 = sbr.rel (0) target = $region37
    $region36: #{bridge_forward.1} parent=1 // pred_region
      _
    $region37: #{bridge_forward.1} parent=1 // pred_fallthru
      _
    // Predicated region
    $region38: #{bridge_forward.1} parent=1 // pred_check
      _
    $region39: #{bridge_forward.1} parent=1 // pred_check_branch
      %110 = sbr.rel (0) target = $region41
    $region40: #{bridge_forward.1} parent=1 // pred_region
      _
    $region41: #{bridge_forward.1} parent=1 // pred_fallthru
      _
    // Predicated region
    $region42: #{bridge_forward.1} parent=1 // pred_check
      _
    $region43: #{bridge_forward.1} parent=1 // pred_check_branch
      %112 = sbr.rel (0) target = $region45
    $region44: #{bridge_forward.1} parent=1 // pred_region
      _
    $region45: #{bridge_forward.1} parent=1 // pred_fallthru
      _
    // Predicated region
    $region46: #{bridge_forward.1} parent=1 // pred_check
      _
    $region47: #{bridge_forward.1} parent=1 // pred_check_branch
      %114 = sbr.rel (0) target = $region49
    $region48: #{bridge_forward.1} parent=1 // pred_region
      _
    $region49: #{bridge_forward.1} parent=1 // pred_fallthru
      _
    // Predicated region
    $region50: #{bridge_forward.1} parent=1 // pred_check
      _
    $region51: #{bridge_forward.1} parent=1 // pred_check_branch
      %116 = sbr.rel (0) target = $region53
    $region52: #{bridge_forward.1} parent=1 // pred_region
      _
    $region53: #{bridge_forward.1} parent=1 // pred_fallthru
      _
    // Predicated region
    $region54: #{bridge_forward.1} parent=1 // pred_check
      _
    $region55: #{bridge_forward.1} parent=1 // pred_check_branch
      %118 = sbr.rel (0) target = $region57
    $region56: #{bridge_forward.1} parent=1 // pred_region
      _
    $region57: #{bridge_forward.1} parent=1 // pred_fallthru
      _
    // Predicated region
    $region58: #{bridge_forward.1} parent=1 // pred_check
      _
    $region59: #{bridge_forward.1} parent=1 // pred_check_branch
      %120 = sbr.rel (0) target = $region61
    $region60: #{bridge_forward.1} parent=1 // pred_region
      _
    $region61: #{bridge_forward.1} parent=1 // pred_fallthru
      _
    // Predicated region
    $region62: #{bridge_forward.1} parent=1 // pred_check
      _
    $region63: #{bridge_forward.1} parent=1 // pred_check_branch
      %122 = sbr.rel (0) target = $region65
    $region64: #{bridge_forward.1} parent=1 // pred_region
      _
    $region65: #{bridge_forward.1} parent=1 // pred_fallthru
      _
    // Predicated region
    $region66: #{bridge_forward.1} parent=1 // pred_check
      _
    $region67: #{bridge_forward.1} parent=1 // pred_check_branch
      %124 = sbr.rel (0) target = $region69
    $region68: #{bridge_forward.1} parent=1 // pred_region
      _
    $region69: #{bridge_forward.1} parent=1 // pred_fallthru
      _
    // Predicated region
    $region70: #{bridge_forward.1} parent=1 // pred_check
      _
    $region71: #{bridge_forward.1} parent=1 // pred_check_branch
      %126 = sbr.rel (0) target = $region73
    $region72: #{bridge_forward.1} parent=1 // pred_region
      _
    $region73: #{bridge_forward.1} parent=1 // pred_fallthru
      _
    // Predicated region
    $region74: #{bridge_forward.1} parent=1 // pred_check
      _
    $region75: #{bridge_forward.1} parent=1 // pred_check_branch
      %128 = sbr.rel (0) target = $region77
    $region76: #{bridge_forward.1} parent=1 // pred_region
      _
    $region77: #{bridge_forward.1} parent=1 // pred_fallthru
      _
    // Predicated region
    $region78: #{bridge_forward.1} parent=1 // pred_check
      _
    $region79: #{bridge_forward.1} parent=1 // pred_check_branch
      %130 = sbr.rel (0) target = $region81
    $region80: #{bridge_forward.1} parent=1 // pred_region
      _
    $region81: #{bridge_forward.1} parent=1 // pred_fallthru
      _
    // Predicated region
    $region82: #{bridge_forward.1} parent=1 // pred_check
      _
    $region83: #{bridge_forward.1} parent=1 // pred_check_branch
      %132 = sbr.rel (0) target = $region85
    $region84: #{bridge_forward.1} parent=1 // pred_region
      _
    $region85: #{bridge_forward.1} parent=1 // pred_fallthru
      _
    // Predicated region
    $region86: #{bridge_forward.1} parent=1 // pred_check
      _
    $region87: #{bridge_forward.1} parent=1 // pred_check_branch
      %134 = sbr.rel (0) target = $region89
    $region88: #{bridge_forward.1} parent=1 // pred_region
      _
    $region89: #{bridge_forward.1} parent=1 // pred_fallthru
      _
    // Predicated region
    $region90: #{bridge_forward.1} parent=1 // pred_check
      _
    $region91: #{bridge_forward.1} parent=1 // pred_check_branch
      %136 = sbr.rel (0) target = $region93
    $region92: #{bridge_forward.1} parent=1 // pred_region
      _
    $region93: #{bridge_forward.1} parent=1 // pred_fallthru
      _
    // Predicated region
    $region94: #{bridge_forward.1} parent=1 // pred_check
      _
    $region95: #{bridge_forward.1} parent=1 // pred_check_branch
      %138 = sbr.rel (0) target = $region97
    $region96: #{bridge_forward.1} parent=1 // pred_region
      _
    $region97: #{bridge_forward.1} parent=1 // pred_fallthru
      _
    // Predicated region
    $region98: #{bridge_forward.1} parent=1 // pred_check
      _
    $region99: #{bridge_forward.1} parent=1 // pred_check_branch
      %140 = sbr.rel (0) target = $region101
    $region100: #{bridge_forward.1} parent=1 // pred_region
      _
    $region101: #{bridge_forward.1} parent=1 // pred_fallthru
      _
    // Predicated region
    $region102: #{bridge_forward.1} parent=1 // pred_check
      _
    $region103: #{bridge_forward.1} parent=1 // pred_check_branch
      %142 = sbr.rel (0) target = $region105
    $region104: #{bridge_forward.1} parent=1 // pred_region
      _
    $region105: #{bridge_forward.1} parent=1 // pred_fallthru
      _
    // Predicated region
    $region106: #{bridge_forward.1} parent=1 // pred_check
      _
    $region107: #{bridge_forward.1} parent=1 // pred_check_branch
      %144 = sbr.rel (0) target = $region109
    $region108: #{bridge_forward.1} parent=1 // pred_region
      _
    $region109: #{bridge_forward.1} parent=1 // pred_fallthru
      _
    // Predicated region
    $region110: #{bridge_forward.1} parent=1 // pred_check
      _
    $region111: #{bridge_forward.1} parent=1 // pred_check_branch
      %146 = sbr.rel (0) target = $region113
    $region112: #{bridge_forward.1} parent=1 // pred_region
      _
    $region113: #{bridge_forward.1} parent=1 // pred_fallthru
      _
    // Predicated region
    $region114: #{bridge_forward.1} parent=1 // pred_check
      _
    $region115: #{bridge_forward.1} parent=1 // pred_check_branch
      %148 = sbr.rel (0) target = $region117
    $region116: #{bridge_forward.1} parent=1 // pred_region
      _
    $region117: #{bridge_forward.1} parent=1 // pred_fallthru
      _
    // Predicated region
    $region118: #{bridge_forward.1} parent=1 // pred_check
      _
    $region119: #{bridge_forward.1} parent=1 // pred_check_branch
      %150 = sbr.rel (0) target = $region121
    $region120: #{bridge_forward.1} parent=1 // pred_region
      _
    $region121: #{bridge_forward.1} parent=1 // pred_fallthru
      _
    // Predicated region
    $region122: #{bridge_forward.1} parent=1 // pred_check
      _
    $region123: #{bridge_forward.1} parent=1 // pred_check_branch
      %152 = sbr.rel (0) target = $region125
    $region124: #{bridge_forward.1} parent=1 // pred_region
      _
    $region125: #{bridge_forward.1} parent=1 // pred_fallthru
      _
    // Predicated region
    $region126: #{bridge_forward.1} parent=1 // pred_check
      _
    $region127: #{bridge_forward.1} parent=1 // pred_check_branch
      %154 = sbr.rel (0) target = $region129
    $region128: #{bridge_forward.1} parent=1 // pred_region
      _
    $region129: #{bridge_forward.1} parent=1 // pred_fallthru
      _
    // Predicated region
    $region130: #{bridge_forward.1} parent=1 // pred_check
      _
    $region131: #{bridge_forward.1} parent=1 // pred_check_branch
      %156 = sbr.rel (0) target = $region133
    $region132: #{bridge_forward.1} parent=1 // pred_region
      _
    $region133: #{bridge_forward.1} parent=1 // pred_fallthru
      _
    // Predicated region
    $region134: #{bridge_forward.1} parent=1 // pred_check
      _
    $region135: #{bridge_forward.1} parent=1 // pred_check_branch
      %158 = sbr.rel (0) target = $region137
    $region136: #{bridge_forward.1} parent=1 // pred_region
      _
    $region137: #{bridge_forward.1} parent=1 // pred_fallthru
      _
    // Predicated region
    $region138: #{bridge_forward.1} parent=1 // pred_check
      _
    $region139: #{bridge_forward.1} parent=1 // pred_check_branch
      %160 = sbr.rel (0) target = $region141
    $region140: #{bridge_forward.1} parent=1 // pred_region
      _
    $region141: #{bridge_forward.1} parent=1 // pred_fallthru
      _
    // Predicated region
    $region142: #{bridge_forward.1} parent=1 // pred_check
      _
    $region143: #{bridge_forward.1} parent=1 // pred_check_branch
      %162 = sbr.rel (0) target = $region145
    $region144: #{bridge_forward.1} parent=1 // pred_region
      _
    $region145: #{bridge_forward.1} parent=1 // pred_fallthru
      _
    // Predicated region
    $region146: #{bridge_forward.1} parent=1 // pred_check
      _
    $region147: #{bridge_forward.1} parent=1 // pred_check_branch
      %164 = sbr.rel (0) target = $region149
    $region148: #{bridge_forward.1} parent=1 // pred_region
      _
    $region149: #{bridge_forward.1} parent=1 // pred_fallthru
      _
    // Predicated region
    $region150: #{bridge_forward.1} parent=1 // pred_check
      _
    $region151: #{bridge_forward.1} parent=1 // pred_check_branch
      %166 = sbr.rel (0) target = $region153
    $region152: #{bridge_forward.1} parent=1 // pred_region
      _
    $region153: #{bridge_forward.1} parent=1 // pred_fallthru
      _
    // Predicated region
    $region154: #{bridge_forward.1} parent=1 // pred_check
      _
    $region155: #{bridge_forward.1} parent=1 // pred_check_branch
      %168 = sbr.rel (0) target = $region157
    $region156: #{bridge_forward.1} parent=1 // pred_region
      _
    $region157: #{bridge_forward.1} parent=1 // pred_fallthru
      _
    // Predicated region
    $region158: #{bridge_forward.1} parent=1 // pred_check
      _
    $region159: #{bridge_forward.1} parent=1 // pred_check_branch
      %170 = sbr.rel (0) target = $region161
    $region160: #{bridge_forward.1} parent=1 // pred_region
      _
    $region161: #{bridge_forward.1} parent=1 // pred_fallthru
      _
    // Predicated region
    $region162: #{bridge_forward.1} parent=1 // pred_check
      _
    $region163: #{bridge_forward.1} parent=1 // pred_check_branch
      %172 = sbr.rel (0) target = $region165
    $region164: #{bridge_forward.1} parent=1 // pred_region
      _
    $region165: #{bridge_forward.1} parent=1 // pred_fallthru
      _
    // Predicated region
    $region166: #{bridge_forward.1} parent=1 // pred_check
      _
    $region167: #{bridge_forward.1} parent=1 // pred_check_branch
      %174 = sbr.rel (0) target = $region169
    $region168: #{bridge_forward.1} parent=1 // pred_region
      _
    $region169: #{bridge_forward.1} parent=1 // pred_fallthru
      _
    %v176 = vld [vmem:[%s65] sm:$0xf]
    %v177 = vld [vmem:[%s67] sm:$0x3]
    %v178 = vld [vmem:[%s69] sm:$0xf]
    %v179 = vld [vmem:[%s71] sm:$0xf]
    %v180 = vld [vmem:[%s73] sm:$0x3]
    %v181 = vld [vmem:[%s75] sm:$0xf]
    %v182 = vld [vmem:[%s77] sm:$0x3]
    %v183 = vld [vmem:[%s79] sm:$0xf]
    %v184 = vld [vmem:[%s81] sm:$0xf]
    %v185 = vld [vmem:[%s83] sm:$0xf]
    %v186 = vld [vmem:[%s1] sm:$0xff]
    %v187 = vld [vmem:[%s1 + $0x8] sm:$0xff]
    %v188 = vld [vmem:[%s1 + $0x10] sm:$0xff]
    %v189 = vld [vmem:[%s1 + $0x18] sm:$0xff]
    %v190 = vld [vmem:[%s1 + $0x20] sm:$0xff]
    %v191 = vld [vmem:[%s1 + $0x28] sm:$0xff]
    %v192 = vld [vmem:[%s1 + $0x30] sm:$0xff]
    %v193 = vld [vmem:[%s1 + $0x38] sm:$0xff]
    %v194 = vld [vmem:[%s1 + $0x40] sm:$0xf]
    %v195 = vld [vmem:[%s1 + $0x48] sm:$0xf]
    %v196 = vld [vmem:[%s3] sm:$0xff]
    %v197 = vld [vmem:[%s3 + $0x8] sm:$0xff]
    %v198 = vld [vmem:[%s3 + $0x10] sm:$0xff]
    %v199 = vld [vmem:[%s3 + $0x18] sm:$0xff]
    %v200 = vld [vmem:[%s3 + $0x20] sm:$0xf]
    %v201 = vld [vmem:[%s5] sm:$0xff]
    %v202 = vld [vmem:[%s5 + $0x8] sm:$0xff]
    %v203 = vld [vmem:[%s5 + $0x10] sm:$0xff]
    %v204 = vld [vmem:[%s5 + $0x18] sm:$0xff]
    %v205 = vld [vmem:[%s5 + $0x20] sm:$0xff]
    %v206 = vld [vmem:[%s5 + $0x28] sm:$0xff]
    %v207 = vld [vmem:[%s5 + $0x30] sm:$0xff]
    %v208 = vld [vmem:[%s5 + $0x38] sm:$0xff]
    %v209 = vld [vmem:[%s5 + $0x40] sm:$0xff]
    %v210 = vld [vmem:[%s5 + $0x48] sm:$0xff]
    %v211 = vld [vmem:[%s5 + $0x50] sm:$0xff]
    %v212 = vld [vmem:[%s5 + $0x58] sm:$0xff]
    %v213 = vld [vmem:[%s5 + $0x60] sm:$0xff]
    %v214 = vld [vmem:[%s5 + $0x68] sm:$0xff]
    %v215 = vld [vmem:[%s5 + $0x70] sm:$0xff]
    %v216 = vld [vmem:[%s5 + $0x78] sm:$0xff]
    %v217 = vld [vmem:[%s5 + $0x80] sm:$0xff]
    %v218 = vld [vmem:[%s5 + $0x88] sm:$0xff]
    %v219 = vld [vmem:[%s5 + $0x90] sm:$0xff]
    %v220 = vld [vmem:[%s5 + $0x98] sm:$0xff]
    %v221 = vld [vmem:[%s5 + $0xa0] sm:$0xff]
    %v222 = vld [vmem:[%s5 + $0xa8] sm:$0xff]
    %v223 = vld [vmem:[%s5 + $0xb0] sm:$0xff]
    %v224 = vld [vmem:[%s5 + $0xb8] sm:$0xff]
    %v225 = vld [vmem:[%s7] sm:$0xff]
    %v226 = vld [vmem:[%s7 + $0x8] sm:$0xff]
    %v227 = vld [vmem:[%s7 + $0x10] sm:$0xff]
    %v228 = vld [vmem:[%s7 + $0x18] sm:$0xff]
    %v229 = vld [vmem:[%s9] sm:$0xff]
    %v230 = vld [vmem:[%s9 + $0x8] sm:$0xff]
    %v231 = vld [vmem:[%s9 + $0x10] sm:$0xff]
    %v232 = vld [vmem:[%s9 + $0x18] sm:$0xff]
    %v233 = vld [vmem:[%s9 + $0x20] sm:$0xff]
    %v234 = vld [vmem:[%s9 + $0x28] sm:$0xff]
    %v235 = vld [vmem:[%s9 + $0x30] sm:$0xff]
    %v236 = vld [vmem:[%s9 + $0x38] sm:$0xff]
    %v237 = vpack.c.bf16 %v188, %v186
    %v238 = vpack.c.bf16 %v189, %v187
    %v239 = vpack.c.bf16 %v192, %v190
    %v240 = vpack.c.bf16 %v193, %v191
    %v241 = vpack.c.bf16 %v194, %v194
    %v242 = vpack.c.bf16 %v195, %v195
    %v243 = vpack.c.bf16 %v202, %v201
    %v244 = vpack.c.bf16 %v204, %v203
    %v245 = vpack.c.bf16 %v206, %v205
    %v246 = vpack.c.bf16 %v208, %v207
    %v247 = vpack.c.bf16 %v210, %v209
    %v248 = vpack.c.bf16 %v212, %v211
    %v249 = vpack.c.bf16 %v214, %v213
    %v250 = vpack.c.bf16 %v216, %v215
    %v251 = vpack.c.bf16 %v218, %v217
    %v252 = vpack.c.bf16 %v220, %v219
    %v253 = vpack.c.bf16 %v222, %v221
    %v254 = vpack.c.bf16 %v224, %v223
    %vm255 = vcmask 523264
    %v257 = vsel %vm255, %v238, 0
    %v260 = vsel %vm255, %v240, 0
    %v263 = vsel %vm255, %v242, 0
    %265 = vmatprep.subr.bf16.mxu0 0
    %266 = vmatpush1.bf16.msra.mxu0 %v243
    %267 = vmatprep.subr.bf16.mxu0 0
    %268 = vmatpush1.bf16.msra.mxu0 %v244
    %269 = vmatprep.subr.bf16.mxu0 0
    %270 = vmatpush1.bf16.msra.mxu0 %v245
    %271 = vmatprep.subr.bf16.mxu0 0
    %272 = vmatpush1.bf16.msra.mxu0 %v246
    %273 = vmatprep.subr.bf16.mxu0 0
    %274 = vmatpush1.bf16.msra.mxu0 %v247
    %275 = vmatprep.subr.bf16.mxu0 0
    %276 = vmatpush1.bf16.msra.mxu0 %v248
    %277 = vmatprep.subr.bf16.mxu0 0
    %278 = vmatpush1.bf16.msra.mxu0 %v249
    %279 = vmatprep.subr.bf16.mxu0 0
    %280 = vmatpush1.bf16.msra.mxu0 %v250
    %281 = vmatprep.subr.bf16.mxu0 0
    %282 = vmatpush1.bf16.msra.mxu0 %v251
    %283 = vmatprep.subr.bf16.mxu0 0
    %284 = vmatpush1.bf16.msra.mxu0 %v252
    %285 = vmatprep.subr.bf16.mxu0 0
    %286 = vmatpush1.bf16.msra.mxu0 %v253
    %287 = vmatprep.subr.bf16.mxu0 0
    %288 = vmatpush1.bf16.msra.mxu0 %v254
    %289 = vmatprep.subr.bf16.mxu0 0
    %290 = vmatpush1.bf16.msra.mxu0 0
    %291 = vmatprep.subr.bf16.mxu0 0
    %292 = vmatpush1.bf16.msra.mxu0 0
    %293 = vmatprep.subr.bf16.mxu0 0
    %294 = vmatpush1.bf16.msra.mxu0 0
    %295 = vmatprep.subr.bf16.mxu0 0
    %296 = vmatpush1.bf16.msra.mxu0 0
    %297 = vmatprep.mubr.bf16.mxu0 %v257
    %298 = vmatmul.mubr.bf16.gmra.mrb[0].mxu0 %v237
    %v299 = vpop.f32.mrb[0].mxu0
    %v300 = vadd.f32 %v196, %v299
    %v301 = vpop.f32.mrb[0].mxu0
    %v302 = vpop.f32.mrb[0].mxu0
    %v303 = vadd.f32 %v197, %v302
    %v304 = vpop.f32.mrb[0].mxu0
    %305 = vmatprep.mubr.bf16.mxu0 %v260
    %306 = vmatmul.mubr.bf16.gmra.mrb[0].mxu0 %v239
    %v307 = vpop.f32.mrb[0].mxu0
    %v308 = vadd.f32 %v198, %v307
    %v309 = vpop.f32.mrb[0].mxu0
    %v310 = vpop.f32.mrb[0].mxu0
    %v311 = vadd.f32 %v199, %v310
    %v312 = vpop.f32.mrb[0].mxu0
    %313 = vmatprep.mubr.bf16.mxu0 %v263
    %314 = vmatmul.mubr.bf16.gmra.mrb[0].mxu0 %v241
    %v315 = vpop.f32.mrb[0].mxu0
    %v316 = vadd.f32 %v200, %v315
    %v317 = vpop.f32.mrb[0].mxu0
    %v318 = vpop.f32.mrb[0].mxu0
    %v319 = vpop.f32.mrb[0].mxu0
    %320 = vdwg.mxu0
    %v321 = vpack.c.bf16 %v303, %v300
    %v322 = vpack.c.bf16 %v311, %v308
    %v323 = vpack.c.bf16 %v316, %v316
    %v324 = vpack.c.bf16 %v226, %v225
    %v325 = vpack.c.bf16 %v228, %v227
    %vm326 = vcmask 261120
    %v328 = vsel %vm326, %v321, 0
    %v331 = vsel %vm326, %v322, 0
    %v334 = vsel %vm326, %v323, 0
    %336 = vmatprep.subr.bf16.mxu0 0
    %337 = vmatpush1.bf16.msra.mxu0 %v324
    %338 = vmatprep.subr.bf16.mxu0 0
    %339 = vmatpush1.bf16.msra.mxu0 %v325
    %340 = vmatprep.subr.bf16.mxu0 0
    %341 = vmatpush1.bf16.msra.mxu0 0
    %342 = vmatprep.subr.bf16.mxu0 0
    %343 = vmatpush1.bf16.msra.mxu0 0
    %344 = vmatprep.subr.bf16.mxu0 0
    %345 = vmatpush1.bf16.msra.mxu0 0
    %346 = vmatprep.subr.bf16.mxu0 0
    %347 = vmatpush1.bf16.msra.mxu0 0
    %348 = vmatprep.subr.bf16.mxu0 0
    %349 = vmatpush1.bf16.msra.mxu0 0
    %350 = vmatprep.subr.bf16.mxu0 0
    %351 = vmatpush1.bf16.msra.mxu0 0
    %352 = vmatprep.subr.bf16.mxu0 0
    %353 = vmatpush1.bf16.msra.mxu0 0
    %354 = vmatprep.subr.bf16.mxu0 0
    %355 = vmatpush1.bf16.msra.mxu0 0
    %356 = vmatprep.subr.bf16.mxu0 0
    %357 = vmatpush1.bf16.msra.mxu0 0
    %358 = vmatprep.subr.bf16.mxu0 0
    %359 = vmatpush1.bf16.msra.mxu0 0
    %360 = vmatprep.subr.bf16.mxu0 0
    %361 = vmatpush1.bf16.msra.mxu0 0
    %362 = vmatprep.subr.bf16.mxu0 0
    %363 = vmatpush1.bf16.msra.mxu0 0
    %364 = vmatprep.subr.bf16.mxu0 0
    %365 = vmatpush1.bf16.msra.mxu0 0
    %366 = vmatprep.subr.bf16.mxu0 0
    %367 = vmatpush1.bf16.msra.mxu0 0
    %368 = vmatprep.mubr.bf16.mxu0 0
    %369 = vmatmul.mubr.bf16.gmra.mrb[0].mxu0 %v328
    %v370 = vpop.f32.mrb[0].mxu0
    %v371 = vadd.f32 0.0, %v370
    %v372 = vpop.f32.mrb[0].mxu0
    %v373 = vpop.f32.mrb[0].mxu0
    %v374 = vadd.f32 0.0, %v373
    %v375 = vpop.f32.mrb[0].mxu0
    %376 = vmatprep.mubr.bf16.mxu0 0
    %377 = vmatmul.mubr.bf16.gmra.mrb[0].mxu0 %v331
    %v378 = vpop.f32.mrb[0].mxu0
    %v379 = vadd.f32 0.0, %v378
    %v380 = vpop.f32.mrb[0].mxu0
    %v381 = vpop.f32.mrb[0].mxu0
    %v382 = vadd.f32 0.0, %v381
    %v383 = vpop.f32.mrb[0].mxu0
    %384 = vmatprep.mubr.bf16.mxu0 0
    %385 = vmatmul.mubr.bf16.gmra.mrb[0].mxu0 %v334
    %v386 = vpop.f32.mrb[0].mxu0
    %v387 = vadd.f32 0.0, %v386
    %v388 = vpop.f32.mrb[0].mxu0
    %v389 = vpop.f32.mrb[0].mxu0
    %v390 = vpop.f32.mrb[0].mxu0
    %391 = vdwg.mxu0
    %v392 = vmax.f32 %v371, 0.0
    %v393 = vmax.f32 %v374, 0.0
    %v394 = vmax.f32 %v379, 0.0
    %v395 = vmax.f32 %v382, 0.0
    %v396 = vmax.f32 %v387, 0.0
    %v397 = vpack.c.bf16 %v393, %v392
    %v398 = vpack.c.bf16 %v395, %v394
    %v399 = vpack.c.bf16 %v396, %v396
    %v400 = vpack.c.bf16 %v230, %v229
    %v401 = vpack.c.bf16 %v232, %v231
    %v402 = vpack.c.bf16 %v234, %v233
    %v403 = vpack.c.bf16 %v236, %v235
    %v405 = vsel %vm255, %v397, 0
    %v408 = vsel %vm255, %v398, 0
    %v411 = vsel %vm255, %v399, 0
    %413 = vmatprep.subr.bf16.mxu0 0
    %414 = vmatpush1.bf16.msra.mxu0 %v400
    %415 = vmatprep.subr.bf16.mxu0 0
    %416 = vmatpush1.bf16.msra.mxu0 %v401
    %417 = vmatprep.subr.bf16.mxu0 0
    %418 = vmatpush1.bf16.msra.mxu0 %v402
    %419 = vmatprep.subr.bf16.mxu0 0
    %420 = vmatpush1.bf16.msra.mxu0 %v403
    %421 = vmatprep.subr.bf16.mxu0 0
    %422 = vmatpush1.bf16.msra.mxu0 0
    %423 = vmatprep.subr.bf16.mxu0 0
    %424 = vmatpush1.bf16.msra.mxu0 0
    %425 = vmatprep.subr.bf16.mxu0 0
    %426 = vmatpush1.bf16.msra.mxu0 0
    %427 = vmatprep.subr.bf16.mxu0 0
    %428 = vmatpush1.bf16.msra.mxu0 0
    %429 = vmatprep.subr.bf16.mxu0 0
    %430 = vmatpush1.bf16.msra.mxu0 0
    %431 = vmatprep.subr.bf16.mxu0 0
    %432 = vmatpush1.bf16.msra.mxu0 0
    %433 = vmatprep.subr.bf16.mxu0 0
    %434 = vmatpush1.bf16.msra.mxu0 0
    %435 = vmatprep.subr.bf16.mxu0 0
    %436 = vmatpush1.bf16.msra.mxu0 0
    %437 = vmatprep.subr.bf16.mxu0 0
    %438 = vmatpush1.bf16.msra.mxu0 0
    %439 = vmatprep.subr.bf16.mxu0 0
    %440 = vmatpush1.bf16.msra.mxu0 0
    %441 = vmatprep.subr.bf16.mxu0 0
    %442 = vmatpush1.bf16.msra.mxu0 0
    %443 = vmatprep.subr.bf16.mxu0 0
    %444 = vmatpush1.bf16.msra.mxu0 0
    %445 = vmatprep.mubr.bf16.mxu0 0
    %446 = vmatmul.mubr.bf16.gmra.mrb[0].mxu0 %v405
    %v447 = vpop.f32.mrb[0].mxu0
    %v448 = vadd.f32 0.0, %v447
    %v449 = vpop.f32.mrb[0].mxu0
    %v450 = vpop.f32.mrb[0].mxu0
    %v451 = vadd.f32 0.0, %v450
    %v452 = vpop.f32.mrb[0].mxu0
    %453 = vmatprep.mubr.bf16.mxu0 0
    %454 = vmatmul.mubr.bf16.gmra.mrb[0].mxu0 %v408
    %v455 = vpop.f32.mrb[0].mxu0
    %v456 = vadd.f32 0.0, %v455
    %v457 = vpop.f32.mrb[0].mxu0
    %v458 = vpop.f32.mrb[0].mxu0
    %v459 = vadd.f32 0.0, %v458
    %v460 = vpop.f32.mrb[0].mxu0
    %461 = vmatprep.mubr.bf16.mxu0 0
    %462 = vmatmul.mubr.bf16.gmra.mrb[0].mxu0 %v411
    %v463 = vpop.f32.mrb[0].mxu0
    %v464 = vadd.f32 0.0, %v463
    %v465 = vpop.f32.mrb[0].mxu0
    %v466 = vpop.f32.mrb[0].mxu0
    %v467 = vpop.f32.mrb[0].mxu0
    %468 = vdwg.mxu0
    %v469 = vadd.f32 %v300, %v448
    %v470 = vadd.f32 %v303, %v451
    %v471 = vadd.f32 %v308, %v456
    %v472 = vadd.f32 %v311, %v459
    %v473 = vadd.f32 %v316, %v464
    %vm474 = vcmask 293888
    %v476 = vsel %vm474, %v176, 0
    %vm478 = vcmask 1043456
    %v480 = vsel %vm478, %v473, 0
    %482 = vmatprep.subr.mxu0 0.0
    %483 = vmatpush1.msra.mxu0 %v469
    %484 = vmatprep.subr.mxu0 0.0
    %485 = vmatpush1.msra.mxu0 %v470
    %486 = vmatprep.subr.mxu0 0.0
    %487 = vmatpush1.msra.mxu0 %v471
    %488 = vmatprep.subr.mxu0 0.0
    %489 = vmatpush1.msra.mxu0 %v472
    %490 = vmatprep.subr.mxu0 0.0
    %491 = vmatpush1.msra.mxu0 %v480
    %492 = vmatprep.subr.mxu0 0.0
    %493 = vmatpush1.msra.mxu0 0.0
    %494 = vmatprep.subr.mxu0 0.0
    %495 = vmatpush1.msra.mxu0 0.0
    %496 = vmatprep.subr.mxu0 0.0
    %497 = vmatpush1.msra.mxu0 0.0
    %498 = vmatprep.subr.mxu0 0.0
    %499 = vmatpush1.msra.mxu0 0.0
    %500 = vmatprep.subr.mxu0 0.0
    %501 = vmatpush1.msra.mxu0 0.0
    %502 = vmatprep.subr.mxu0 0.0
    %503 = vmatpush1.msra.mxu0 0.0
    %504 = vmatprep.subr.mxu0 0.0
    %505 = vmatpush1.msra.mxu0 0.0
    %506 = vmatprep.subr.mxu0 0.0
    %507 = vmatpush1.msra.mxu0 0.0
    %508 = vmatprep.subr.mxu0 0.0
    %509 = vmatpush1.msra.mxu0 0.0
    %510 = vmatprep.subr.mxu0 0.0
    %511 = vmatpush1.msra.mxu0 0.0
    %512 = vmatprep.subr.mxu0 0.0
    %513 = vmatpush1.msra.mxu0 0.0
    %514 = vmatprep.subr.mxu0 0.0
    %515 = vmatpush1.msra.mxu0 0.0
    %516 = vmatprep.subr.mxu0 0.0
    %517 = vmatpush1.msra.mxu0 0.0
    %518 = vmatprep.subr.mxu0 0.0
    %519 = vmatpush1.msra.mxu0 0.0
    %520 = vmatprep.subr.mxu0 0.0
    %521 = vmatpush1.msra.mxu0 0.0
    %522 = vmatprep.subr.mxu0 0.0
    %523 = vmatpush1.msra.mxu0 0.0
    %524 = vmatprep.subr.mxu0 0.0
    %525 = vmatpush1.msra.mxu0 0.0
    %526 = vmatprep.subr.mxu0 0.0
    %527 = vmatpush1.msra.mxu0 0.0
    %528 = vmatprep.subr.mxu0 0.0
    %529 = vmatpush1.msra.mxu0 0.0
    %530 = vmatprep.subr.mxu0 0.0
    %531 = vmatpush1.msra.mxu0 0.0
    %532 = vmatprep.subr.mxu0 0.0
    %533 = vmatpush1.msra.mxu0 0.0
    %534 = vmatprep.subr.mxu0 0.0
    %535 = vmatpush1.msra.mxu0 0.0
    %536 = vmatprep.subr.mxu0 0.0
    %537 = vmatpush1.msra.mxu0 0.0
    %538 = vmatprep.subr.mxu0 0.0
    %539 = vmatpush1.msra.mxu0 0.0
    %540 = vmatprep.subr.mxu0 0.0
    %541 = vmatpush1.msra.mxu0 0.0
    %542 = vmatprep.subr.mxu0 0.0
    %543 = vmatpush1.msra.mxu0 0.0
    %544 = vmatprep.subr.mxu0 0.0
    %545 = vmatpush1.msra.mxu0 0.0
    %546 = vmatprep.mubr.f32.mxu0 0.0
    %547 = vmatmul.mubr.f32.gmra.mrb[0].mxu0 %v476
    %v548 = vpop.f32.mrb[0].mxu0
    %v549 = vadd.f32 0.0, %v548
    %v550 = vpop.f32.mrb[0].mxu0
    %551 = vdwg.mxu0
    %v553 = vsel %vm474, %v177, 0
    %555 = vmatprep.subr.mxu0 0.0
    %556 = vmatpush1.msra.mxu0 %v469
    %557 = vmatprep.subr.mxu0 0.0
    %558 = vmatpush1.msra.mxu0 %v470
    %559 = vmatprep.subr.mxu0 0.0
    %560 = vmatpush1.msra.mxu0 %v471
    %561 = vmatprep.subr.mxu0 0.0
    %562 = vmatpush1.msra.mxu0 %v472
    %563 = vmatprep.subr.mxu0 0.0
    %564 = vmatpush1.msra.mxu0 %v480
    %565 = vmatprep.subr.mxu0 0.0
    %566 = vmatpush1.msra.mxu0 0.0
    %567 = vmatprep.subr.mxu0 0.0
    %568 = vmatpush1.msra.mxu0 0.0
    %569 = vmatprep.subr.mxu0 0.0
    %570 = vmatpush1.msra.mxu0 0.0
    %571 = vmatprep.subr.mxu0 0.0
    %572 = vmatpush1.msra.mxu0 0.0
    %573 = vmatprep.subr.mxu0 0.0
    %574 = vmatpush1.msra.mxu0 0.0
    %575 = vmatprep.subr.mxu0 0.0
    %576 = vmatpush1.msra.mxu0 0.0
    %577 = vmatprep.subr.mxu0 0.0
    %578 = vmatpush1.msra.mxu0 0.0
    %579 = vmatprep.subr.mxu0 0.0
    %580 = vmatpush1.msra.mxu0 0.0
    %581 = vmatprep.subr.mxu0 0.0
    %582 = vmatpush1.msra.mxu0 0.0
    %583 = vmatprep.subr.mxu0 0.0
    %584 = vmatpush1.msra.mxu0 0.0
    %585 = vmatprep.subr.mxu0 0.0
    %586 = vmatpush1.msra.mxu0 0.0
    %587 = vmatprep.subr.mxu0 0.0
    %588 = vmatpush1.msra.mxu0 0.0
    %589 = vmatprep.subr.mxu0 0.0
    %590 = vmatpush1.msra.mxu0 0.0
    %591 = vmatprep.subr.mxu0 0.0
    %592 = vmatpush1.msra.mxu0 0.0
    %593 = vmatprep.subr.mxu0 0.0
    %594 = vmatpush1.msra.mxu0 0.0
    %595 = vmatprep.subr.mxu0 0.0
    %596 = vmatpush1.msra.mxu0 0.0
    %597 = vmatprep.subr.mxu0 0.0
    %598 = vmatpush1.msra.mxu0 0.0
    %599 = vmatprep.subr.mxu0 0.0
    %600 = vmatpush1.msra.mxu0 0.0
    %601 = vmatprep.subr.mxu0 0.0
    %602 = vmatpush1.msra.mxu0 0.0
    %603 = vmatprep.subr.mxu0 0.0
    %604 = vmatpush1.msra.mxu0 0.0
    %605 = vmatprep.subr.mxu0 0.0
    %606 = vmatpush1.msra.mxu0 0.0
    %607 = vmatprep.subr.mxu0 0.0
    %608 = vmatpush1.msra.mxu0 0.0
    %609 = vmatprep.subr.mxu0 0.0
    %610 = vmatpush1.msra.mxu0 0.0
    %611 = vmatprep.subr.mxu0 0.0
    %612 = vmatpush1.msra.mxu0 0.0
    %613 = vmatprep.subr.mxu0 0.0
    %614 = vmatpush1.msra.mxu0 0.0
    %615 = vmatprep.subr.mxu0 0.0
    %616 = vmatpush1.msra.mxu0 0.0
    %617 = vmatprep.subr.mxu0 0.0
    %618 = vmatpush1.msra.mxu0 0.0
    %619 = vmatprep.mubr.f32.mxu0 0.0
    %620 = vmatmul.mubr.f32.gmra.mrb[0].mxu0 %v553
    %v621 = vpop.f32.mrb[0].mxu0
    %v622 = vadd.f32 0.0, %v621
    %v623 = vpop.f32.mrb[0].mxu0
    %624 = vdwg.mxu0
    %v625 = vld [vmem:[%s11] sm:$0xff]
    %v626 = vld [vmem:[%s11 + $0x8] sm:$0xff]
    %v627 = vld [vmem:[%s11 + $0x10] sm:$0xff]
    %v628 = vld [vmem:[%s11 + $0x18] sm:$0xff]
    %v629 = vld [vmem:[%s17] sm:$0xff]
    %v630 = vld [vmem:[%s17 + $0x8] sm:$0xff]
    %v631 = vld [vmem:[%s17 + $0x10] sm:$0xff]
    %v632 = vld [vmem:[%s17 + $0x18] sm:$0xff]
    %v633 = vld [vmem:[%s17 + $0x20] sm:$0xff]
    %v634 = vld [vmem:[%s17 + $0x28] sm:$0xff]
    %v635 = vld [vmem:[%s17 + $0x30] sm:$0xff]
    %v636 = vld [vmem:[%s17 + $0x38] sm:$0xff]
    %v637 = vld [vmem:[%s23] sm:$0xff]
    %v638 = vld [vmem:[%s23 + $0x8] sm:$0xff]
    %v639 = vld [vmem:[%s23 + $0x10] sm:$0xff]
    %v640 = vld [vmem:[%s23 + $0x18] sm:$0xff]
    %v641 = vld [vmem:[%s23 + $0x20] sm:$0xff]
    %v642 = vld [vmem:[%s23 + $0x28] sm:$0xff]
    %v643 = vld [vmem:[%s23 + $0x30] sm:$0xff]
    %v644 = vld [vmem:[%s23 + $0x38] sm:$0xff]
    %v645 = vld [vmem:[%s13] sm:$0x1]
    %v646 = vld [vmem:[%s19] sm:$0x1]
    %v647 = vld [vmem:[%s15] sm:$0x1]
    %v648 = vld [vmem:[%s21] sm:$0x1]
    %v649 = vpack.c.bf16 %v549, %v549
    %v650 = vpack.c.bf16 %v626, %v625
    %v651 = vpack.c.bf16 %v628, %v627
    %v653 = vsel %vm326, %v649, 0
    %655 = vmatprep.subr.bf16.mxu0 0
    %656 = vmatpush1.bf16.msra.mxu0 %v650
    %657 = vmatprep.subr.bf16.mxu0 0
    %658 = vmatpush1.bf16.msra.mxu0 %v651
    %659 = vmatprep.subr.bf16.mxu0 0
    %660 = vmatpush1.bf16.msra.mxu0 0
    %661 = vmatprep.subr.bf16.mxu0 0
    %662 = vmatpush1.bf16.msra.mxu0 0
    %663 = vmatprep.subr.bf16.mxu0 0
    %664 = vmatpush1.bf16.msra.mxu0 0
    %665 = vmatprep.subr.bf16.mxu0 0
    %666 = vmatpush1.bf16.msra.mxu0 0
    %667 = vmatprep.subr.bf16.mxu0 0
    %668 = vmatpush1.bf16.msra.mxu0 0
    %669 = vmatprep.subr.bf16.mxu0 0
    %670 = vmatpush1.bf16.msra.mxu0 0
    %671 = vmatprep.subr.bf16.mxu0 0
    %672 = vmatpush1.bf16.msra.mxu0 0
    %673 = vmatprep.subr.bf16.mxu0 0
    %674 = vmatpush1.bf16.msra.mxu0 0
    %675 = vmatprep.subr.bf16.mxu0 0
    %676 = vmatpush1.bf16.msra.mxu0 0
    %677 = vmatprep.subr.bf16.mxu0 0
    %678 = vmatpush1.bf16.msra.mxu0 0
    %679 = vmatprep.subr.bf16.mxu0 0
    %680 = vmatpush1.bf16.msra.mxu0 0
    %681 = vmatprep.subr.bf16.mxu0 0
    %682 = vmatpush1.bf16.msra.mxu0 0
    %683 = vmatprep.subr.bf16.mxu0 0
    %684 = vmatpush1.bf16.msra.mxu0 0
    %685 = vmatprep.subr.bf16.mxu0 0
    %686 = vmatpush1.bf16.msra.mxu0 0
    %687 = vmatprep.mubr.bf16.mxu0 0
    %688 = vmatmul.mubr.bf16.gmra.mrb[0].mxu0 %v653
    %v689 = vpop.f32.mrb[0].mxu0
    %v690 = vadd.f32 0.0, %v689
    %v691 = vpop.f32.mrb[0].mxu0
    %v692 = vpop.f32.mrb[0].mxu0
    %v693 = vpop.f32.mrb[0].mxu0
    %694 = vdwg.mxu0
    %vm695 = vcmask 31744
    %v697 = vsel %vm695, %v181, 0
    %v700 = vsel %vm478, %v690, 0
    %702 = vmatprep.subr.mxu0 0.0
    %703 = vmatpush1.msra.mxu0 %v700
    %704 = vmatprep.subr.mxu0 0.0
    %705 = vmatpush1.msra.mxu0 0.0
    %706 = vmatprep.subr.mxu0 0.0
    %707 = vmatpush1.msra.mxu0 0.0
    %708 = vmatprep.subr.mxu0 0.0
    %709 = vmatpush1.msra.mxu0 0.0
    %710 = vmatprep.subr.mxu0 0.0
    %711 = vmatpush1.msra.mxu0 0.0
    %712 = vmatprep.subr.mxu0 0.0
    %713 = vmatpush1.msra.mxu0 0.0
    %714 = vmatprep.subr.mxu0 0.0
    %715 = vmatpush1.msra.mxu0 0.0
    %716 = vmatprep.subr.mxu0 0.0
    %717 = vmatpush1.msra.mxu0 0.0
    %718 = vmatprep.subr.mxu0 0.0
    %719 = vmatpush1.msra.mxu0 0.0
    %720 = vmatprep.subr.mxu0 0.0
    %721 = vmatpush1.msra.mxu0 0.0
    %722 = vmatprep.subr.mxu0 0.0
    %723 = vmatpush1.msra.mxu0 0.0
    %724 = vmatprep.subr.mxu0 0.0
    %725 = vmatpush1.msra.mxu0 0.0
    %726 = vmatprep.subr.mxu0 0.0
    %727 = vmatpush1.msra.mxu0 0.0
    %728 = vmatprep.subr.mxu0 0.0
    %729 = vmatpush1.msra.mxu0 0.0
    %730 = vmatprep.subr.mxu0 0.0
    %731 = vmatpush1.msra.mxu0 0.0
    %732 = vmatprep.subr.mxu0 0.0
    %733 = vmatpush1.msra.mxu0 0.0
    %734 = vmatprep.subr.mxu0 0.0
    %735 = vmatpush1.msra.mxu0 0.0
    %736 = vmatprep.subr.mxu0 0.0
    %737 = vmatpush1.msra.mxu0 0.0
    %738 = vmatprep.subr.mxu0 0.0
    %739 = vmatpush1.msra.mxu0 0.0
    %740 = vmatprep.subr.mxu0 0.0
    %741 = vmatpush1.msra.mxu0 0.0
    %742 = vmatprep.subr.mxu0 0.0
    %743 = vmatpush1.msra.mxu0 0.0
    %744 = vmatprep.subr.mxu0 0.0
    %745 = vmatpush1.msra.mxu0 0.0
    %746 = vmatprep.subr.mxu0 0.0
    %747 = vmatpush1.msra.mxu0 0.0
    %748 = vmatprep.subr.mxu0 0.0
    %749 = vmatpush1.msra.mxu0 0.0
    %750 = vmatprep.subr.mxu0 0.0
    %751 = vmatpush1.msra.mxu0 0.0
    %752 = vmatprep.subr.mxu0 0.0
    %753 = vmatpush1.msra.mxu0 0.0
    %754 = vmatprep.subr.mxu0 0.0
    %755 = vmatpush1.msra.mxu0 0.0
    %756 = vmatprep.subr.mxu0 0.0
    %757 = vmatpush1.msra.mxu0 0.0
    %758 = vmatprep.subr.mxu0 0.0
    %759 = vmatpush1.msra.mxu0 0.0
    %760 = vmatprep.subr.mxu0 0.0
    %761 = vmatpush1.msra.mxu0 0.0
    %762 = vmatprep.subr.mxu0 0.0
    %763 = vmatpush1.msra.mxu0 0.0
    %764 = vmatprep.subr.mxu0 0.0
    %765 = vmatpush1.msra.mxu0 0.0
    %766 = vmatprep.mubr.f32.mxu0 0.0
    %767 = vmatmul.mubr.f32.gmra.mrb[0].mxu0 %v697
    %v768 = vpop.f32.mrb[0].mxu0
    %v769 = vadd.f32 0.0, %v768
    %v770 = vpop.f32.mrb[0].mxu0
    %771 = vdwg.mxu0
    %v772 = vsub.f32 %v690, %v769
    %v773 = vmul.f32 %v772, %v772
    %v775 = vsel %vm478, %v773, 0
    %777 = vmatprep.subr.mxu0 0.0
    %778 = vmatpush1.msra.mxu0 %v775
    %779 = vmatprep.subr.mxu0 0.0
    %780 = vmatpush1.msra.mxu0 0.0
    %781 = vmatprep.subr.mxu0 0.0
    %782 = vmatpush1.msra.mxu0 0.0
    %783 = vmatprep.subr.mxu0 0.0
    %784 = vmatpush1.msra.mxu0 0.0
    %785 = vmatprep.subr.mxu0 0.0
    %786 = vmatpush1.msra.mxu0 0.0
    %787 = vmatprep.subr.mxu0 0.0
    %788 = vmatpush1.msra.mxu0 0.0
    %789 = vmatprep.subr.mxu0 0.0
    %790 = vmatpush1.msra.mxu0 0.0
    %791 = vmatprep.subr.mxu0 0.0
    %792 = vmatpush1.msra.mxu0 0.0
    %793 = vmatprep.subr.mxu0 0.0
    %794 = vmatpush1.msra.mxu0 0.0
    %795 = vmatprep.subr.mxu0 0.0
    %796 = vmatpush1.msra.mxu0 0.0
    %797 = vmatprep.subr.mxu0 0.0
    %798 = vmatpush1.msra.mxu0 0.0
    %799 = vmatprep.subr.mxu0 0.0
    %800 = vmatpush1.msra.mxu0 0.0
    %801 = vmatprep.subr.mxu0 0.0
    %802 = vmatpush1.msra.mxu0 0.0
    %803 = vmatprep.subr.mxu0 0.0
    %804 = vmatpush1.msra.mxu0 0.0
    %805 = vmatprep.subr.mxu0 0.0
    %806 = vmatpush1.msra.mxu0 0.0
    %807 = vmatprep.subr.mxu0 0.0
    %808 = vmatpush1.msra.mxu0 0.0
    %809 = vmatprep.subr.mxu0 0.0
    %810 = vmatpush1.msra.mxu0 0.0
    %811 = vmatprep.subr.mxu0 0.0
    %812 = vmatpush1.msra.mxu0 0.0
    %813 = vmatprep.subr.mxu0 0.0
    %814 = vmatpush1.msra.mxu0 0.0
    %815 = vmatprep.subr.mxu0 0.0
    %816 = vmatpush1.msra.mxu0 0.0
    %817 = vmatprep.subr.mxu0 0.0
    %818 = vmatpush1.msra.mxu0 0.0
    %819 = vmatprep.subr.mxu0 0.0
    %820 = vmatpush1.msra.mxu0 0.0
    %821 = vmatprep.subr.mxu0 0.0
    %822 = vmatpush1.msra.mxu0 0.0
    %823 = vmatprep.subr.mxu0 0.0
    %824 = vmatpush1.msra.mxu0 0.0
    %825 = vmatprep.subr.mxu0 0.0
    %826 = vmatpush1.msra.mxu0 0.0
    %827 = vmatprep.subr.mxu0 0.0
    %828 = vmatpush1.msra.mxu0 0.0
    %829 = vmatprep.subr.mxu0 0.0
    %830 = vmatpush1.msra.mxu0 0.0
    %831 = vmatprep.subr.mxu0 0.0
    %832 = vmatpush1.msra.mxu0 0.0
    %833 = vmatprep.subr.mxu0 0.0
    %834 = vmatpush1.msra.mxu0 0.0
    %835 = vmatprep.subr.mxu0 0.0
    %836 = vmatpush1.msra.mxu0 0.0
    %837 = vmatprep.subr.mxu0 0.0
    %838 = vmatpush1.msra.mxu0 0.0
    %839 = vmatprep.subr.mxu0 0.0
    %840 = vmatpush1.msra.mxu0 0.0
    %841 = vmatprep.mubr.f32.mxu0 0.0
    %842 = vmatmul.mubr.f32.gmra.mrb[0].mxu0 %v697
    %v843 = vpop.f32.mrb[0].mxu0
    %v844 = vadd.f32 1e-05, %v843
    %v845 = vpop.f32.mrb[0].mxu0
    %846 = vdwg.mxu0
    %v847 = vrsqrt.pop %v844
    %v848 = vmul.f32 %v772, %v847
    %v850 = vlaneseq
    %v851 = vshrl.u32 %v850, 7
    %v852 = vsub.s32 0, %v851
    %v853 = vrot.slane %v645, %v852
    %v855 = vmul.f32 %v848, %v853
    %v857 = vlaneseq
    %v858 = vshrl.u32 %v857, 7
    %v859 = vsub.s32 0, %v858
    %v860 = vrot.slane %v647, %v859
    %v862 = vadd.f32 %v855, %v860
    %v863 = vmax.f32 %v862, 0.0
    %v864 = vpack.c.bf16 %v863, %v863
    %v865 = vpack.c.bf16 %v630, %v629
    %v866 = vpack.c.bf16 %v632, %v631
    %v867 = vpack.c.bf16 %v634, %v633
    %v868 = vpack.c.bf16 %v636, %v635
    %v870 = vsel %vm255, %v864, 0
    %872 = vmatprep.subr.bf16.mxu0 0
    %873 = vmatpush1.bf16.msra.mxu0 %v865
    %874 = vmatprep.subr.bf16.mxu0 0
    %875 = vmatpush1.bf16.msra.mxu0 %v866
    %876 = vmatprep.subr.bf16.mxu0 0
    %877 = vmatpush1.bf16.msra.mxu0 %v867
    %878 = vmatprep.subr.bf16.mxu0 0
    %879 = vmatpush1.bf16.msra.mxu0 %v868
    %880 = vmatprep.subr.bf16.mxu0 0
    %881 = vmatpush1.bf16.msra.mxu0 0
    %882 = vmatprep.subr.bf16.mxu0 0
    %883 = vmatpush1.bf16.msra.mxu0 0
    %884 = vmatprep.subr.bf16.mxu0 0
    %885 = vmatpush1.bf16.msra.mxu0 0
    %886 = vmatprep.subr.bf16.mxu0 0
    %887 = vmatpush1.bf16.msra.mxu0 0
    %888 = vmatprep.subr.bf16.mxu0 0
    %889 = vmatpush1.bf16.msra.mxu0 0
    %890 = vmatprep.subr.bf16.mxu0 0
    %891 = vmatpush1.bf16.msra.mxu0 0
    %892 = vmatprep.subr.bf16.mxu0 0
    %893 = vmatpush1.bf16.msra.mxu0 0
    %894 = vmatprep.subr.bf16.mxu0 0
    %895 = vmatpush1.bf16.msra.mxu0 0
    %896 = vmatprep.subr.bf16.mxu0 0
    %897 = vmatpush1.bf16.msra.mxu0 0
    %898 = vmatprep.subr.bf16.mxu0 0
    %899 = vmatpush1.bf16.msra.mxu0 0
    %900 = vmatprep.subr.bf16.mxu0 0
    %901 = vmatpush1.bf16.msra.mxu0 0
    %902 = vmatprep.subr.bf16.mxu0 0
    %903 = vmatpush1.bf16.msra.mxu0 0
    %904 = vmatprep.mubr.bf16.mxu0 0
    %905 = vmatmul.mubr.bf16.gmra.mrb[0].mxu0 %v870
    %v906 = vpop.f32.mrb[0].mxu0
    %v907 = vadd.f32 0.0, %v906
    %v908 = vpop.f32.mrb[0].mxu0
    %v909 = vpop.f32.mrb[0].mxu0
    %v910 = vpop.f32.mrb[0].mxu0
    %911 = vdwg.mxu0
    %v913 = vsel %vm478, %v907, 0
    %915 = vmatprep.subr.mxu0 0.0
    %916 = vmatpush1.msra.mxu0 %v913
    %917 = vmatprep.subr.mxu0 0.0
    %918 = vmatpush1.msra.mxu0 0.0
    %919 = vmatprep.subr.mxu0 0.0
    %920 = vmatpush1.msra.mxu0 0.0
    %921 = vmatprep.subr.mxu0 0.0
    %922 = vmatpush1.msra.mxu0 0.0
    %923 = vmatprep.subr.mxu0 0.0
    %924 = vmatpush1.msra.mxu0 0.0
    %925 = vmatprep.subr.mxu0 0.0
    %926 = vmatpush1.msra.mxu0 0.0
    %927 = vmatprep.subr.mxu0 0.0
    %928 = vmatpush1.msra.mxu0 0.0
    %929 = vmatprep.subr.mxu0 0.0
    %930 = vmatpush1.msra.mxu0 0.0
    %931 = vmatprep.subr.mxu0 0.0
    %932 = vmatpush1.msra.mxu0 0.0
    %933 = vmatprep.subr.mxu0 0.0
    %934 = vmatpush1.msra.mxu0 0.0
    %935 = vmatprep.subr.mxu0 0.0
    %936 = vmatpush1.msra.mxu0 0.0
    %937 = vmatprep.subr.mxu0 0.0
    %938 = vmatpush1.msra.mxu0 0.0
    %939 = vmatprep.subr.mxu0 0.0
    %940 = vmatpush1.msra.mxu0 0.0
    %941 = vmatprep.subr.mxu0 0.0
    %942 = vmatpush1.msra.mxu0 0.0
    %943 = vmatprep.subr.mxu0 0.0
    %944 = vmatpush1.msra.mxu0 0.0
    %945 = vmatprep.subr.mxu0 0.0
    %946 = vmatpush1.msra.mxu0 0.0
    %947 = vmatprep.subr.mxu0 0.0
    %948 = vmatpush1.msra.mxu0 0.0
    %949 = vmatprep.subr.mxu0 0.0
    %950 = vmatpush1.msra.mxu0 0.0
    %951 = vmatprep.subr.mxu0 0.0
    %952 = vmatpush1.msra.mxu0 0.0
    %953 = vmatprep.subr.mxu0 0.0
    %954 = vmatpush1.msra.mxu0 0.0
    %955 = vmatprep.subr.mxu0 0.0
    %956 = vmatpush1.msra.mxu0 0.0
    %957 = vmatprep.subr.mxu0 0.0
    %958 = vmatpush1.msra.mxu0 0.0
    %959 = vmatprep.subr.mxu0 0.0
    %960 = vmatpush1.msra.mxu0 0.0
    %961 = vmatprep.subr.mxu0 0.0
    %962 = vmatpush1.msra.mxu0 0.0
    %963 = vmatprep.subr.mxu0 0.0
    %964 = vmatpush1.msra.mxu0 0.0
    %965 = vmatprep.subr.mxu0 0.0
    %966 = vmatpush1.msra.mxu0 0.0
    %967 = vmatprep.subr.mxu0 0.0
    %968 = vmatpush1.msra.mxu0 0.0
    %969 = vmatprep.subr.mxu0 0.0
    %970 = vmatpush1.msra.mxu0 0.0
    %971 = vmatprep.subr.mxu0 0.0
    %972 = vmatpush1.msra.mxu0 0.0
    %973 = vmatprep.subr.mxu0 0.0
    %974 = vmatpush1.msra.mxu0 0.0
    %975 = vmatprep.subr.mxu0 0.0
    %976 = vmatpush1.msra.mxu0 0.0
    %977 = vmatprep.subr.mxu0 0.0
    %978 = vmatpush1.msra.mxu0 0.0
    %979 = vmatprep.mubr.f32.mxu0 0.0
    %980 = vmatmul.mubr.f32.gmra.mrb[0].mxu0 %v697
    %v981 = vpop.f32.mrb[0].mxu0
    %v982 = vadd.f32 0.0, %v981
    %v983 = vpop.f32.mrb[0].mxu0
    %984 = vdwg.mxu0
    %v985 = vsub.f32 %v907, %v982
    %v986 = vmul.f32 %v985, %v985
    %v988 = vsel %vm478, %v986, 0
    %990 = vmatprep.subr.mxu0 0.0
    %991 = vmatpush1.msra.mxu0 %v988
    %992 = vmatprep.subr.mxu0 0.0
    %993 = vmatpush1.msra.mxu0 0.0
    %994 = vmatprep.subr.mxu0 0.0
    %995 = vmatpush1.msra.mxu0 0.0
    %996 = vmatprep.subr.mxu0 0.0
    %997 = vmatpush1.msra.mxu0 0.0
    %998 = vmatprep.subr.mxu0 0.0
    %999 = vmatpush1.msra.mxu0 0.0
    %1000 = vmatprep.subr.mxu0 0.0
    %1001 = vmatpush1.msra.mxu0 0.0
    %1002 = vmatprep.subr.mxu0 0.0
    %1003 = vmatpush1.msra.mxu0 0.0
    %1004 = vmatprep.subr.mxu0 0.0
    %1005 = vmatpush1.msra.mxu0 0.0
    %1006 = vmatprep.subr.mxu0 0.0
    %1007 = vmatpush1.msra.mxu0 0.0
    %1008 = vmatprep.subr.mxu0 0.0
    %1009 = vmatpush1.msra.mxu0 0.0
    %1010 = vmatprep.subr.mxu0 0.0
    %1011 = vmatpush1.msra.mxu0 0.0
    %1012 = vmatprep.subr.mxu0 0.0
    %1013 = vmatpush1.msra.mxu0 0.0
    %1014 = vmatprep.subr.mxu0 0.0
    %1015 = vmatpush1.msra.mxu0 0.0
    %1016 = vmatprep.subr.mxu0 0.0
    %1017 = vmatpush1.msra.mxu0 0.0
    %1018 = vmatprep.subr.mxu0 0.0
    %1019 = vmatpush1.msra.mxu0 0.0
    %1020 = vmatprep.subr.mxu0 0.0
    %1021 = vmatpush1.msra.mxu0 0.0
    %1022 = vmatprep.subr.mxu0 0.0
    %1023 = vmatpush1.msra.mxu0 0.0
    %1024 = vmatprep.subr.mxu0 0.0
    %1025 = vmatpush1.msra.mxu0 0.0
    %1026 = vmatprep.subr.mxu0 0.0
    %1027 = vmatpush1.msra.mxu0 0.0
    %1028 = vmatprep.subr.mxu0 0.0
    %1029 = vmatpush1.msra.mxu0 0.0
    %1030 = vmatprep.subr.mxu0 0.0
    %1031 = vmatpush1.msra.mxu0 0.0
    %1032 = vmatprep.subr.mxu0 0.0
    %1033 = vmatpush1.msra.mxu0 0.0
    %1034 = vmatprep.subr.mxu0 0.0
    %1035 = vmatpush1.msra.mxu0 0.0
    %1036 = vmatprep.subr.mxu0 0.0
    %1037 = vmatpush1.msra.mxu0 0.0
    %1038 = vmatprep.subr.mxu0 0.0
    %1039 = vmatpush1.msra.mxu0 0.0
    %1040 = vmatprep.subr.mxu0 0.0
    %1041 = vmatpush1.msra.mxu0 0.0
    %1042 = vmatprep.subr.mxu0 0.0
    %1043 = vmatpush1.msra.mxu0 0.0
    %1044 = vmatprep.subr.mxu0 0.0
    %1045 = vmatpush1.msra.mxu0 0.0
    %1046 = vmatprep.subr.mxu0 0.0
    %1047 = vmatpush1.msra.mxu0 0.0
    %1048 = vmatprep.subr.mxu0 0.0
    %1049 = vmatpush1.msra.mxu0 0.0
    %1050 = vmatprep.subr.mxu0 0.0
    %1051 = vmatpush1.msra.mxu0 0.0
    %1052 = vmatprep.subr.mxu0 0.0
    %1053 = vmatpush1.msra.mxu0 0.0
    %1054 = vmatprep.mubr.f32.mxu0 0.0
    %1055 = vmatmul.mubr.f32.gmra.mrb[0].mxu0 %v697
    %v1056 = vpop.f32.mrb[0].mxu0
    %v1057 = vadd.f32 1e-05, %v1056
    %v1058 = vpop.f32.mrb[0].mxu0
    %1059 = vdwg.mxu0
    %v1060 = vrsqrt.pop %v1057
    %v1061 = vmul.f32 %v985, %v1060
    %v1063 = vlaneseq
    %v1064 = vshrl.u32 %v1063, 7
    %v1065 = vsub.s32 0, %v1064
    %v1066 = vrot.slane %v646, %v1065
    %v1068 = vmul.f32 %v1061, %v1066
    %v1070 = vlaneseq
    %v1071 = vshrl.u32 %v1070, 7
    %v1072 = vsub.s32 0, %v1071
    %v1073 = vrot.slane %v648, %v1072
    %v1075 = vadd.f32 %v1068, %v1073
    %v1076 = vmax.f32 %v1075, 0.0
    %v1077 = vpack.c.bf16 %v1076, %v1076
    %v1078 = vpack.c.bf16 %v638, %v637
    %v1079 = vpack.c.bf16 %v640, %v639
    %v1080 = vpack.c.bf16 %v642, %v641
    %v1081 = vpack.c.bf16 %v644, %v643
    %v1083 = vsel %vm255, %v1077, 0
    %1085 = vmatprep.subr.bf16.mxu0 0
    %1086 = vmatpush1.bf16.msra.mxu0 %v1078
    %1087 = vmatprep.subr.bf16.mxu0 0
    %1088 = vmatpush1.bf16.msra.mxu0 %v1079
    %1089 = vmatprep.subr.bf16.mxu0 0
    %1090 = vmatpush1.bf16.msra.mxu0 %v1080
    %1091 = vmatprep.subr.bf16.mxu0 0
    %1092 = vmatpush1.bf16.msra.mxu0 %v1081
    %1093 = vmatprep.subr.bf16.mxu0 0
    %1094 = vmatpush1.bf16.msra.mxu0 0
    %1095 = vmatprep.subr.bf16.mxu0 0
    %1096 = vmatpush1.bf16.msra.mxu0 0
    %1097 = vmatprep.subr.bf16.mxu0 0
    %1098 = vmatpush1.bf16.msra.mxu0 0
    %1099 = vmatprep.subr.bf16.mxu0 0
    %1100 = vmatpush1.bf16.msra.mxu0 0
    %1101 = vmatprep.subr.bf16.mxu0 0
    %1102 = vmatpush1.bf16.msra.mxu0 0
    %1103 = vmatprep.subr.bf16.mxu0 0
    %1104 = vmatpush1.bf16.msra.mxu0 0
    %1105 = vmatprep.subr.bf16.mxu0 0
    %1106 = vmatpush1.bf16.msra.mxu0 0
    %1107 = vmatprep.subr.bf16.mxu0 0
    %1108 = vmatpush1.bf16.msra.mxu0 0
    %1109 = vmatprep.subr.bf16.mxu0 0
    %1110 = vmatpush1.bf16.msra.mxu0 0
    %1111 = vmatprep.subr.bf16.mxu0 0
    %1112 = vmatpush1.bf16.msra.mxu0 0
    %1113 = vmatprep.subr.bf16.mxu0 0
    %1114 = vmatpush1.bf16.msra.mxu0 0
    %1115 = vmatprep.subr.bf16.mxu0 0
    %1116 = vmatpush1.bf16.msra.mxu0 0
    %1117 = vmatprep.mubr.bf16.mxu0 0
    %1118 = vmatmul.mubr.bf16.gmra.mrb[0].mxu0 %v1083
    %v1119 = vpop.f32.mrb[0].mxu0
    %v1120 = vadd.f32 0.0, %v1119
    %v1121 = vpop.f32.mrb[0].mxu0
    %v1122 = vpop.f32.mrb[0].mxu0
    %v1123 = vpop.f32.mrb[0].mxu0
    %1124 = vdwg.mxu0
    %v1126 = vsel %vm478, %v1120, 0
    %1128 = vmatprep.subr.mxu0 0.0
    %1129 = vmatpush1.msra.mxu0 %v1126
    %1130 = vmatprep.subr.mxu0 0.0
    %1131 = vmatpush1.msra.mxu0 0.0
    %1132 = vmatprep.subr.mxu0 0.0
    %1133 = vmatpush1.msra.mxu0 0.0
    %1134 = vmatprep.subr.mxu0 0.0
    %1135 = vmatpush1.msra.mxu0 0.0
    %1136 = vmatprep.subr.mxu0 0.0
    %1137 = vmatpush1.msra.mxu0 0.0
    %1138 = vmatprep.subr.mxu0 0.0
    %1139 = vmatpush1.msra.mxu0 0.0
    %1140 = vmatprep.subr.mxu0 0.0
    %1141 = vmatpush1.msra.mxu0 0.0
    %1142 = vmatprep.subr.mxu0 0.0
    %1143 = vmatpush1.msra.mxu0 0.0
    %1144 = vmatprep.subr.mxu0 0.0
    %1145 = vmatpush1.msra.mxu0 0.0
    %1146 = vmatprep.subr.mxu0 0.0
    %1147 = vmatpush1.msra.mxu0 0.0
    %1148 = vmatprep.subr.mxu0 0.0
    %1149 = vmatpush1.msra.mxu0 0.0
    %1150 = vmatprep.subr.mxu0 0.0
    %1151 = vmatpush1.msra.mxu0 0.0
    %1152 = vmatprep.subr.mxu0 0.0
    %1153 = vmatpush1.msra.mxu0 0.0
    %1154 = vmatprep.subr.mxu0 0.0
    %1155 = vmatpush1.msra.mxu0 0.0
    %1156 = vmatprep.subr.mxu0 0.0
    %1157 = vmatpush1.msra.mxu0 0.0
    %1158 = vmatprep.subr.mxu0 0.0
    %1159 = vmatpush1.msra.mxu0 0.0
    %1160 = vmatprep.subr.mxu0 0.0
    %1161 = vmatpush1.msra.mxu0 0.0
    %1162 = vmatprep.subr.mxu0 0.0
    %1163 = vmatpush1.msra.mxu0 0.0
    %1164 = vmatprep.subr.mxu0 0.0
    %1165 = vmatpush1.msra.mxu0 0.0
    %1166 = vmatprep.subr.mxu0 0.0
    %1167 = vmatpush1.msra.mxu0 0.0
    %1168 = vmatprep.subr.mxu0 0.0
    %1169 = vmatpush1.msra.mxu0 0.0
    %1170 = vmatprep.subr.mxu0 0.0
    %1171 = vmatpush1.msra.mxu0 0.0
    %1172 = vmatprep.subr.mxu0 0.0
    %1173 = vmatpush1.msra.mxu0 0.0
    %1174 = vmatprep.subr.mxu0 0.0
    %1175 = vmatpush1.msra.mxu0 0.0
    %1176 = vmatprep.subr.mxu0 0.0
    %1177 = vmatpush1.msra.mxu0 0.0
    %1178 = vmatprep.subr.mxu0 0.0
    %1179 = vmatpush1.msra.mxu0 0.0
    %1180 = vmatprep.subr.mxu0 0.0
    %1181 = vmatpush1.msra.mxu0 0.0
    %1182 = vmatprep.subr.mxu0 0.0
    %1183 = vmatpush1.msra.mxu0 0.0
    %1184 = vmatprep.subr.mxu0 0.0
    %1185 = vmatpush1.msra.mxu0 0.0
    %1186 = vmatprep.subr.mxu0 0.0
    %1187 = vmatpush1.msra.mxu0 0.0
    %1188 = vmatprep.subr.mxu0 0.0
    %1189 = vmatpush1.msra.mxu0 0.0
    %1190 = vmatprep.subr.mxu0 0.0
    %1191 = vmatpush1.msra.mxu0 0.0
    %1192 = vmatprep.mubr.f32.mxu0 0.0
    %1193 = vmatmul.mubr.f32.gmra.mrb[0].mxu0 %v697
    %v1194 = vpop.f32.mrb[0].mxu0
    %v1195 = vadd.f32 0.0, %v1194
    %v1196 = vpop.f32.mrb[0].mxu0
    %1197 = vdwg.mxu0
    %v1198 = vsub.f32 %v1120, %v1195
    %v1199 = vmul.f32 %v1198, %v1198
    %v1201 = vsel %vm478, %v1199, 0
    %1203 = vmatprep.subr.mxu0 0.0
    %1204 = vmatpush1.msra.mxu0 %v1201
    %1205 = vmatprep.subr.mxu0 0.0
    %1206 = vmatpush1.msra.mxu0 0.0
    %1207 = vmatprep.subr.mxu0 0.0
    %1208 = vmatpush1.msra.mxu0 0.0
    %1209 = vmatprep.subr.mxu0 0.0
    %1210 = vmatpush1.msra.mxu0 0.0
    %1211 = vmatprep.subr.mxu0 0.0
    %1212 = vmatpush1.msra.mxu0 0.0
    %1213 = vmatprep.subr.mxu0 0.0
    %1214 = vmatpush1.msra.mxu0 0.0
    %1215 = vmatprep.subr.mxu0 0.0
    %1216 = vmatpush1.msra.mxu0 0.0
    %1217 = vmatprep.subr.mxu0 0.0
    %1218 = vmatpush1.msra.mxu0 0.0
    %1219 = vmatprep.subr.mxu0 0.0
    %1220 = vmatpush1.msra.mxu0 0.0
    %1221 = vmatprep.subr.mxu0 0.0
    %1222 = vmatpush1.msra.mxu0 0.0
    %1223 = vmatprep.subr.mxu0 0.0
    %1224 = vmatpush1.msra.mxu0 0.0
    %1225 = vmatprep.subr.mxu0 0.0
    %1226 = vmatpush1.msra.mxu0 0.0
    %1227 = vmatprep.subr.mxu0 0.0
    %1228 = vmatpush1.msra.mxu0 0.0
    %1229 = vmatprep.subr.mxu0 0.0
    %1230 = vmatpush1.msra.mxu0 0.0
    %1231 = vmatprep.subr.mxu0 0.0
    %1232 = vmatpush1.msra.mxu0 0.0
    %1233 = vmatprep.subr.mxu0 0.0
    %1234 = vmatpush1.msra.mxu0 0.0
    %1235 = vmatprep.subr.mxu0 0.0
    %1236 = vmatpush1.msra.mxu0 0.0
    %1237 = vmatprep.subr.mxu0 0.0
    %1238 = vmatpush1.msra.mxu0 0.0
    %1239 = vmatprep.subr.mxu0 0.0
    %1240 = vmatpush1.msra.mxu0 0.0
    %1241 = vmatprep.subr.mxu0 0.0
    %1242 = vmatpush1.msra.mxu0 0.0
    %1243 = vmatprep.subr.mxu0 0.0
    %1244 = vmatpush1.msra.mxu0 0.0
    %1245 = vmatprep.subr.mxu0 0.0
    %1246 = vmatpush1.msra.mxu0 0.0
    %1247 = vmatprep.subr.mxu0 0.0
    %1248 = vmatpush1.msra.mxu0 0.0
    %1249 = vmatprep.subr.mxu0 0.0
    %1250 = vmatpush1.msra.mxu0 0.0
    %1251 = vmatprep.subr.mxu0 0.0
    %1252 = vmatpush1.msra.mxu0 0.0
    %1253 = vmatprep.subr.mxu0 0.0
    %1254 = vmatpush1.msra.mxu0 0.0
    %1255 = vmatprep.subr.mxu0 0.0
    %1256 = vmatpush1.msra.mxu0 0.0
    %1257 = vmatprep.subr.mxu0 0.0
    %1258 = vmatpush1.msra.mxu0 0.0
    %1259 = vmatprep.subr.mxu0 0.0
    %1260 = vmatpush1.msra.mxu0 0.0
    %1261 = vmatprep.subr.mxu0 0.0
    %1262 = vmatpush1.msra.mxu0 0.0
    %1263 = vmatprep.subr.mxu0 0.0
    %1264 = vmatpush1.msra.mxu0 0.0
    %1265 = vmatprep.subr.mxu0 0.0
    %1266 = vmatpush1.msra.mxu0 0.0
    %1267 = vmatprep.mubr.f32.mxu0 0.0
    %1268 = vmatmul.mubr.f32.gmra.mrb[0].mxu0 %v697
    %v1269 = vpop.f32.mrb[0].mxu0
    %v1270 = vadd.f32 1e-05, %v1269
    %v1271 = vpop.f32.mrb[0].mxu0
    %1272 = vdwg.mxu0
    %v1273 = vrsqrt.pop %v1270
    %v1274 = vmul.f32 %v1198, %v1273
    %v1275 = vld [vmem:[%s57] sm:$0xff]
    %v1276 = vld [vmem:[%s57 + $0x8] sm:$0xff]
    %v1277 = vld [vmem:[%s57 + $0x10] sm:$0xff]
    %v1278 = vld [vmem:[%s57 + $0x18] sm:$0xff]
    %v1279 = vpack.c.bf16 %v622, %v622
    %v1280 = vpack.c.bf16 %v1276, %v1275
    %v1281 = vpack.c.bf16 %v1278, %v1277
    %v1283 = vsel %vm326, %v1279, 0
    %1285 = vmatprep.subr.bf16.mxu0 0
    %1286 = vmatpush1.bf16.msra.mxu0 %v1280
    %1287 = vmatprep.subr.bf16.mxu0 0
    %1288 = vmatpush1.bf16.msra.mxu0 %v1281
    %1289 = vmatprep.subr.bf16.mxu0 0
    %1290 = vmatpush1.bf16.msra.mxu0 0
    %1291 = vmatprep.subr.bf16.mxu0 0
    %1292 = vmatpush1.bf16.msra.mxu0 0
    %1293 = vmatprep.subr.bf16.mxu0 0
    %1294 = vmatpush1.bf16.msra.mxu0 0
    %1295 = vmatprep.subr.bf16.mxu0 0
    %1296 = vmatpush1.bf16.msra.mxu0 0
    %1297 = vmatprep.subr.bf16.mxu0 0
    %1298 = vmatpush1.bf16.msra.mxu0 0
    %1299 = vmatprep.subr.bf16.mxu0 0
    %1300 = vmatpush1.bf16.msra.mxu0 0
    %1301 = vmatprep.subr.bf16.mxu0 0
    %1302 = vmatpush1.bf16.msra.mxu0 0
    %1303 = vmatprep.subr.bf16.mxu0 0
    %1304 = vmatpush1.bf16.msra.mxu0 0
    %1305 = vmatprep.subr.bf16.mxu0 0
    %1306 = vmatpush1.bf16.msra.mxu0 0
    %1307 = vmatprep.subr.bf16.mxu0 0
    %1308 = vmatpush1.bf16.msra.mxu0 0
    %1309 = vmatprep.subr.bf16.mxu0 0
    %1310 = vmatpush1.bf16.msra.mxu0 0
    %1311 = vmatprep.subr.bf16.mxu0 0
    %1312 = vmatpush1.bf16.msra.mxu0 0
    %1313 = vmatprep.subr.bf16.mxu0 0
    %1314 = vmatpush1.bf16.msra.mxu0 0
    %1315 = vmatprep.subr.bf16.mxu0 0
    %1316 = vmatpush1.bf16.msra.mxu0 0
    %1317 = vmatprep.mubr.bf16.mxu0 0
    %1318 = vmatmul.mubr.bf16.gmra.mrb[0].mxu0 %v1283
    %v1319 = vpop.f32.mrb[0].mxu0
    %v1320 = vadd.f32 0.0, %v1319
    %v1321 = vpop.f32.mrb[0].mxu0
    %v1322 = vpop.f32.mrb[0].mxu0
    %v1323 = vpop.f32.mrb[0].mxu0
    %1324 = vdwg.mxu0
    %v1325 = vld [vmem:[%s59] sm:$0x1]
    %v1326 = vld [vmem:[%s61] sm:$0x1]
    %vm1327 = vcmask 15360
    %v1329 = vsel %vm1327, %v182, 0
    %vm1331 = vcmask 1041408
    %v1333 = vsel %vm1331, %v1320, 0
    %1335 = vmatprep.subr.mxu0 0.0
    %1336 = vmatpush1.msra.mxu0 %v1333
    %1337 = vmatprep.subr.mxu0 0.0
    %1338 = vmatpush1.msra.mxu0 0.0
    %1339 = vmatprep.subr.mxu0 0.0
    %1340 = vmatpush1.msra.mxu0 0.0
    %1341 = vmatprep.subr.mxu0 0.0
    %1342 = vmatpush1.msra.mxu0 0.0
    %1343 = vmatprep.subr.mxu0 0.0
    %1344 = vmatpush1.msra.mxu0 0.0
    %1345 = vmatprep.subr.mxu0 0.0
    %1346 = vmatpush1.msra.mxu0 0.0
    %1347 = vmatprep.subr.mxu0 0.0
    %1348 = vmatpush1.msra.mxu0 0.0
    %1349 = vmatprep.subr.mxu0 0.0
    %1350 = vmatpush1.msra.mxu0 0.0
    %1351 = vmatprep.subr.mxu0 0.0
    %1352 = vmatpush1.msra.mxu0 0.0
    %1353 = vmatprep.subr.mxu0 0.0
    %1354 = vmatpush1.msra.mxu0 0.0
    %1355 = vmatprep.subr.mxu0 0.0
    %1356 = vmatpush1.msra.mxu0 0.0
    %1357 = vmatprep.subr.mxu0 0.0
    %1358 = vmatpush1.msra.mxu0 0.0
    %1359 = vmatprep.subr.mxu0 0.0
    %1360 = vmatpush1.msra.mxu0 0.0
    %1361 = vmatprep.subr.mxu0 0.0
    %1362 = vmatpush1.msra.mxu0 0.0
    %1363 = vmatprep.subr.mxu0 0.0
    %1364 = vmatpush1.msra.mxu0 0.0
    %1365 = vmatprep.subr.mxu0 0.0
    %1366 = vmatpush1.msra.mxu0 0.0
    %1367 = vmatprep.subr.mxu0 0.0
    %1368 = vmatpush1.msra.mxu0 0.0
    %1369 = vmatprep.subr.mxu0 0.0
    %1370 = vmatpush1.msra.mxu0 0.0
    %1371 = vmatprep.subr.mxu0 0.0
    %1372 = vmatpush1.msra.mxu0 0.0
    %1373 = vmatprep.subr.mxu0 0.0
    %1374 = vmatpush1.msra.mxu0 0.0
    %1375 = vmatprep.subr.mxu0 0.0
    %1376 = vmatpush1.msra.mxu0 0.0
    %1377 = vmatprep.subr.mxu0 0.0
    %1378 = vmatpush1.msra.mxu0 0.0
    %1379 = vmatprep.subr.mxu0 0.0
    %1380 = vmatpush1.msra.mxu0 0.0
    %1381 = vmatprep.subr.mxu0 0.0
    %1382 = vmatpush1.msra.mxu0 0.0
    %1383 = vmatprep.subr.mxu0 0.0
    %1384 = vmatpush1.msra.mxu0 0.0
    %1385 = vmatprep.subr.mxu0 0.0
    %1386 = vmatpush1.msra.mxu0 0.0
    %1387 = vmatprep.subr.mxu0 0.0
    %1388 = vmatpush1.msra.mxu0 0.0
    %1389 = vmatprep.subr.mxu0 0.0
    %1390 = vmatpush1.msra.mxu0 0.0
    %1391 = vmatprep.subr.mxu0 0.0
    %1392 = vmatpush1.msra.mxu0 0.0
    %1393 = vmatprep.subr.mxu0 0.0
    %1394 = vmatpush1.msra.mxu0 0.0
    %1395 = vmatprep.subr.mxu0 0.0
    %1396 = vmatpush1.msra.mxu0 0.0
    %1397 = vmatprep.subr.mxu0 0.0
    %1398 = vmatpush1.msra.mxu0 0.0
    %1399 = vmatprep.mubr.f32.mxu0 0.0
    %1400 = vmatmul.mubr.f32.gmra.mrb[0].mxu0 %v1329
    %v1401 = vpop.f32.mrb[0].mxu0
    %v1402 = vadd.f32 0.0, %v1401
    %v1403 = vpop.f32.mrb[0].mxu0
    %1404 = vdwg.mxu0
    %v1405 = vsub.f32 %v1320, %v1402
    %v1406 = vmul.f32 %v1405, %v1405
    %v1408 = vsel %vm1331, %v1406, 0
    %1410 = vmatprep.subr.mxu0 0.0
    %1411 = vmatpush1.msra.mxu0 %v1408
    %1412 = vmatprep.subr.mxu0 0.0
    %1413 = vmatpush1.msra.mxu0 0.0
    %1414 = vmatprep.subr.mxu0 0.0
    %1415 = vmatpush1.msra.mxu0 0.0
    %1416 = vmatprep.subr.mxu0 0.0
    %1417 = vmatpush1.msra.mxu0 0.0
    %1418 = vmatprep.subr.mxu0 0.0
    %1419 = vmatpush1.msra.mxu0 0.0
    %1420 = vmatprep.subr.mxu0 0.0
    %1421 = vmatpush1.msra.mxu0 0.0
    %1422 = vmatprep.subr.mxu0 0.0
    %1423 = vmatpush1.msra.mxu0 0.0
    %1424 = vmatprep.subr.mxu0 0.0
    %1425 = vmatpush1.msra.mxu0 0.0
    %1426 = vmatprep.subr.mxu0 0.0
    %1427 = vmatpush1.msra.mxu0 0.0
    %1428 = vmatprep.subr.mxu0 0.0
    %1429 = vmatpush1.msra.mxu0 0.0
    %1430 = vmatprep.subr.mxu0 0.0
    %1431 = vmatpush1.msra.mxu0 0.0
    %1432 = vmatprep.subr.mxu0 0.0
    %1433 = vmatpush1.msra.mxu0 0.0
    %1434 = vmatprep.subr.mxu0 0.0
    %1435 = vmatpush1.msra.mxu0 0.0
    %1436 = vmatprep.subr.mxu0 0.0
    %1437 = vmatpush1.msra.mxu0 0.0
    %1438 = vmatprep.subr.mxu0 0.0
    %1439 = vmatpush1.msra.mxu0 0.0
    %1440 = vmatprep.subr.mxu0 0.0
    %1441 = vmatpush1.msra.mxu0 0.0
    %1442 = vmatprep.subr.mxu0 0.0
    %1443 = vmatpush1.msra.mxu0 0.0
    %1444 = vmatprep.subr.mxu0 0.0
    %1445 = vmatpush1.msra.mxu0 0.0
    %1446 = vmatprep.subr.mxu0 0.0
    %1447 = vmatpush1.msra.mxu0 0.0
    %1448 = vmatprep.subr.mxu0 0.0
    %1449 = vmatpush1.msra.mxu0 0.0
    %1450 = vmatprep.subr.mxu0 0.0
    %1451 = vmatpush1.msra.mxu0 0.0
    %1452 = vmatprep.subr.mxu0 0.0
    %1453 = vmatpush1.msra.mxu0 0.0
    %1454 = vmatprep.subr.mxu0 0.0
    %1455 = vmatpush1.msra.mxu0 0.0
    %1456 = vmatprep.subr.mxu0 0.0
    %1457 = vmatpush1.msra.mxu0 0.0
    %1458 = vmatprep.subr.mxu0 0.0
    %1459 = vmatpush1.msra.mxu0 0.0
    %1460 = vmatprep.subr.mxu0 0.0
    %1461 = vmatpush1.msra.mxu0 0.0
    %1462 = vmatprep.subr.mxu0 0.0
    %1463 = vmatpush1.msra.mxu0 0.0
    %1464 = vmatprep.subr.mxu0 0.0
    %1465 = vmatpush1.msra.mxu0 0.0
    %1466 = vmatprep.subr.mxu0 0.0
    %1467 = vmatpush1.msra.mxu0 0.0
    %1468 = vmatprep.subr.mxu0 0.0
    %1469 = vmatpush1.msra.mxu0 0.0
    %1470 = vmatprep.subr.mxu0 0.0
    %1471 = vmatpush1.msra.mxu0 0.0
    %1472 = vmatprep.subr.mxu0 0.0
    %1473 = vmatpush1.msra.mxu0 0.0
    %1474 = vmatprep.mubr.f32.mxu0 0.0
    %1475 = vmatmul.mubr.f32.gmra.mrb[0].mxu0 %v1329
    %v1476 = vpop.f32.mrb[0].mxu0
    %v1477 = vadd.f32 1e-05, %v1476
    %v1478 = vpop.f32.mrb[0].mxu0
    %1479 = vdwg.mxu0
    %v1480 = vrsqrt.pop %v1477
    %v1481 = vmul.f32 %v1405, %v1480
    %v1483 = vlaneseq
    %v1484 = vshrl.u32 %v1483, 7
    %v1485 = vsub.s32 0, %v1484
    %v1486 = vrot.slane %v1325, %v1485
    %v1488 = vmul.f32 %v1481, %v1486
    %v1490 = vlaneseq
    %v1491 = vshrl.u32 %v1490, 7
    %v1492 = vsub.s32 0, %v1491
    %v1493 = vrot.slane %v1326, %v1492
    %v1495 = vadd.f32 %v1488, %v1493
    %v1496 = vmax.f32 %v1495, 0.0
    %v1497 = vld [vmem:[%s63] sm:$0xff]
    %v1498 = vld [vmem:[%s63 + $0x8] sm:$0xff]
    %v1499 = vld [vmem:[%s63 + $0x10] sm:$0xff]
    %v1500 = vld [vmem:[%s63 + $0x18] sm:$0xff]
    %v1501 = vld [vmem:[%s63 + $0x20] sm:$0xff]
    %v1502 = vld [vmem:[%s63 + $0x28] sm:$0xff]
    %v1503 = vld [vmem:[%s63 + $0x30] sm:$0xff]
    %v1504 = vld [vmem:[%s63 + $0x38] sm:$0xff]
    %v1505 = vpack.c.bf16 %v1496, %v1496
    %v1506 = vpack.c.bf16 %v1498, %v1497
    %v1507 = vpack.c.bf16 %v1500, %v1499
    %v1508 = vpack.c.bf16 %v1502, %v1501
    %v1509 = vpack.c.bf16 %v1504, %v1503
    %v1511 = vsel %vm255, %v1505, 0
    %1513 = vmatprep.subr.bf16.mxu0 0
    %1514 = vmatpush1.bf16.msra.mxu0 %v1506
    %1515 = vmatprep.subr.bf16.mxu0 0
    %1516 = vmatpush1.bf16.msra.mxu0 %v1507
    %1517 = vmatprep.subr.bf16.mxu0 0
    %1518 = vmatpush1.bf16.msra.mxu0 %v1508
    %1519 = vmatprep.subr.bf16.mxu0 0
    %1520 = vmatpush1.bf16.msra.mxu0 %v1509
    %1521 = vmatprep.subr.bf16.mxu0 0
    %1522 = vmatpush1.bf16.msra.mxu0 0
    %1523 = vmatprep.subr.bf16.mxu0 0
    %1524 = vmatpush1.bf16.msra.mxu0 0
    %1525 = vmatprep.subr.bf16.mxu0 0
    %1526 = vmatpush1.bf16.msra.mxu0 0
    %1527 = vmatprep.subr.bf16.mxu0 0
    %1528 = vmatpush1.bf16.msra.mxu0 0
    %1529 = vmatprep.subr.bf16.mxu0 0
    %1530 = vmatpush1.bf16.msra.mxu0 0
    %1531 = vmatprep.subr.bf16.mxu0 0
    %1532 = vmatpush1.bf16.msra.mxu0 0
    %1533 = vmatprep.subr.bf16.mxu0 0
    %1534 = vmatpush1.bf16.msra.mxu0 0
    %1535 = vmatprep.subr.bf16.mxu0 0
    %1536 = vmatpush1.bf16.msra.mxu0 0
    %1537 = vmatprep.subr.bf16.mxu0 0
    %1538 = vmatpush1.bf16.msra.mxu0 0
    %1539 = vmatprep.subr.bf16.mxu0 0
    %1540 = vmatpush1.bf16.msra.mxu0 0
    %1541 = vmatprep.subr.bf16.mxu0 0
    %1542 = vmatpush1.bf16.msra.mxu0 0
    %1543 = vmatprep.subr.bf16.mxu0 0
    %1544 = vmatpush1.bf16.msra.mxu0 0
    %1545 = vmatprep.mubr.bf16.mxu0 0
    %1546 = vmatmul.mubr.bf16.gmra.mrb[0].mxu0 %v1511
    %v1547 = vpop.f32.mrb[0].mxu0
    %v1548 = vadd.f32 0.0, %v1547
    %v1549 = vpop.f32.mrb[0].mxu0
    %v1550 = vpop.f32.mrb[0].mxu0
    %v1551 = vpop.f32.mrb[0].mxu0
    %1552 = vdwg.mxu0
    %v1554 = vsel %vm1331, %v1548, 0
    %1556 = vmatprep.subr.mxu0 0.0
    %1557 = vmatpush1.msra.mxu0 %v1554
    %1558 = vmatprep.subr.mxu0 0.0
    %1559 = vmatpush1.msra.mxu0 0.0
    %1560 = vmatprep.subr.mxu0 0.0
    %1561 = vmatpush1.msra.mxu0 0.0
    %1562 = vmatprep.subr.mxu0 0.0
    %1563 = vmatpush1.msra.mxu0 0.0
    %1564 = vmatprep.subr.mxu0 0.0
    %1565 = vmatpush1.msra.mxu0 0.0
    %1566 = vmatprep.subr.mxu0 0.0
    %1567 = vmatpush1.msra.mxu0 0.0
    %1568 = vmatprep.subr.mxu0 0.0
    %1569 = vmatpush1.msra.mxu0 0.0
    %1570 = vmatprep.subr.mxu0 0.0
    %1571 = vmatpush1.msra.mxu0 0.0
    %1572 = vmatprep.subr.mxu0 0.0
    %1573 = vmatpush1.msra.mxu0 0.0
    %1574 = vmatprep.subr.mxu0 0.0
    %1575 = vmatpush1.msra.mxu0 0.0
    %1576 = vmatprep.subr.mxu0 0.0
    %1577 = vmatpush1.msra.mxu0 0.0
    %1578 = vmatprep.subr.mxu0 0.0
    %1579 = vmatpush1.msra.mxu0 0.0
    %1580 = vmatprep.subr.mxu0 0.0
    %1581 = vmatpush1.msra.mxu0 0.0
    %1582 = vmatprep.subr.mxu0 0.0
    %1583 = vmatpush1.msra.mxu0 0.0
    %1584 = vmatprep.subr.mxu0 0.0
    %1585 = vmatpush1.msra.mxu0 0.0
    %1586 = vmatprep.subr.mxu0 0.0
    %1587 = vmatpush1.msra.mxu0 0.0
    %1588 = vmatprep.subr.mxu0 0.0
    %1589 = vmatpush1.msra.mxu0 0.0
    %1590 = vmatprep.subr.mxu0 0.0
    %1591 = vmatpush1.msra.mxu0 0.0
    %1592 = vmatprep.subr.mxu0 0.0
    %1593 = vmatpush1.msra.mxu0 0.0
    %1594 = vmatprep.subr.mxu0 0.0
    %1595 = vmatpush1.msra.mxu0 0.0
    %1596 = vmatprep.subr.mxu0 0.0
    %1597 = vmatpush1.msra.mxu0 0.0
    %1598 = vmatprep.subr.mxu0 0.0
    %1599 = vmatpush1.msra.mxu0 0.0
    %1600 = vmatprep.subr.mxu0 0.0
    %1601 = vmatpush1.msra.mxu0 0.0
    %1602 = vmatprep.subr.mxu0 0.0
    %1603 = vmatpush1.msra.mxu0 0.0
    %1604 = vmatprep.subr.mxu0 0.0
    %1605 = vmatpush1.msra.mxu0 0.0
    %1606 = vmatprep.subr.mxu0 0.0
    %1607 = vmatpush1.msra.mxu0 0.0
    %1608 = vmatprep.subr.mxu0 0.0
    %1609 = vmatpush1.msra.mxu0 0.0
    %1610 = vmatprep.subr.mxu0 0.0
    %1611 = vmatpush1.msra.mxu0 0.0
    %1612 = vmatprep.subr.mxu0 0.0
    %1613 = vmatpush1.msra.mxu0 0.0
    %1614 = vmatprep.subr.mxu0 0.0
    %1615 = vmatpush1.msra.mxu0 0.0
    %1616 = vmatprep.subr.mxu0 0.0
    %1617 = vmatpush1.msra.mxu0 0.0
    %1618 = vmatprep.subr.mxu0 0.0
    %1619 = vmatpush1.msra.mxu0 0.0
    %1620 = vmatprep.mubr.f32.mxu0 0.0
    %1621 = vmatmul.mubr.f32.gmra.mrb[0].mxu0 %v1329
    %v1622 = vpop.f32.mrb[0].mxu0
    %v1623 = vadd.f32 0.0, %v1622
    %v1624 = vpop.f32.mrb[0].mxu0
    %1625 = vdwg.mxu0
    %v1626 = vsub.f32 %v1548, %v1623
    %v1627 = vmul.f32 %v1626, %v1626
    %v1629 = vsel %vm1331, %v1627, 0
    %1631 = vmatprep.subr.mxu0 0.0
    %1632 = vmatpush1.msra.mxu0 %v1629
    %1633 = vmatprep.subr.mxu0 0.0
    %1634 = vmatpush1.msra.mxu0 0.0
    %1635 = vmatprep.subr.mxu0 0.0
    %1636 = vmatpush1.msra.mxu0 0.0
    %1637 = vmatprep.subr.mxu0 0.0
    %1638 = vmatpush1.msra.mxu0 0.0
    %1639 = vmatprep.subr.mxu0 0.0
    %1640 = vmatpush1.msra.mxu0 0.0
    %1641 = vmatprep.subr.mxu0 0.0
    %1642 = vmatpush1.msra.mxu0 0.0
    %1643 = vmatprep.subr.mxu0 0.0
    %1644 = vmatpush1.msra.mxu0 0.0
    %1645 = vmatprep.subr.mxu0 0.0
    %1646 = vmatpush1.msra.mxu0 0.0
    %1647 = vmatprep.subr.mxu0 0.0
    %1648 = vmatpush1.msra.mxu0 0.0
    %1649 = vmatprep.subr.mxu0 0.0
    %1650 = vmatpush1.msra.mxu0 0.0
    %1651 = vmatprep.subr.mxu0 0.0
    %1652 = vmatpush1.msra.mxu0 0.0
    %1653 = vmatprep.subr.mxu0 0.0
    %1654 = vmatpush1.msra.mxu0 0.0
    %1655 = vmatprep.subr.mxu0 0.0
    %1656 = vmatpush1.msra.mxu0 0.0
    %1657 = vmatprep.subr.mxu0 0.0
    %1658 = vmatpush1.msra.mxu0 0.0
    %1659 = vmatprep.subr.mxu0 0.0
    %1660 = vmatpush1.msra.mxu0 0.0
    %1661 = vmatprep.subr.mxu0 0.0
    %1662 = vmatpush1.msra.mxu0 0.0
    %1663 = vmatprep.subr.mxu0 0.0
    %1664 = vmatpush1.msra.mxu0 0.0
    %1665 = vmatprep.subr.mxu0 0.0
    %1666 = vmatpush1.msra.mxu0 0.0
    %1667 = vmatprep.subr.mxu0 0.0
    %1668 = vmatpush1.msra.mxu0 0.0
    %1669 = vmatprep.subr.mxu0 0.0
    %1670 = vmatpush1.msra.mxu0 0.0
    %1671 = vmatprep.subr.mxu0 0.0
    %1672 = vmatpush1.msra.mxu0 0.0
    %1673 = vmatprep.subr.mxu0 0.0
    %1674 = vmatpush1.msra.mxu0 0.0
    %1675 = vmatprep.subr.mxu0 0.0
    %1676 = vmatpush1.msra.mxu0 0.0
    %1677 = vmatprep.subr.mxu0 0.0
    %1678 = vmatpush1.msra.mxu0 0.0
    %1679 = vmatprep.subr.mxu0 0.0
    %1680 = vmatpush1.msra.mxu0 0.0
    %1681 = vmatprep.subr.mxu0 0.0
    %1682 = vmatpush1.msra.mxu0 0.0
    %1683 = vmatprep.subr.mxu0 0.0
    %1684 = vmatpush1.msra.mxu0 0.0
    %1685 = vmatprep.subr.mxu0 0.0
    %1686 = vmatpush1.msra.mxu0 0.0
    %1687 = vmatprep.subr.mxu0 0.0
    %1688 = vmatpush1.msra.mxu0 0.0
    %1689 = vmatprep.subr.mxu0 0.0
    %1690 = vmatpush1.msra.mxu0 0.0
    %1691 = vmatprep.subr.mxu0 0.0
    %1692 = vmatpush1.msra.mxu0 0.0
    %1693 = vmatprep.subr.mxu0 0.0
    %1694 = vmatpush1.msra.mxu0 0.0
    %1695 = vmatprep.mubr.f32.mxu0 0.0
    %1696 = vmatmul.mubr.f32.gmra.mrb[0].mxu0 %v1329
    %v1697 = vpop.f32.mrb[0].mxu0
    %v1698 = vadd.f32 1e-05, %v1697
    %v1699 = vpop.f32.mrb[0].mxu0
    %1700 = vdwg.mxu0
    %v1701 = vrsqrt.pop %v1698
    %v1702 = vmul.f32 %v1626, %v1701
    %vm1703 = vcmask 25600
    %v1704 = vsel %vm1703, %v1702, -inf
    %1705 = vmax.xlane.f32.xlu0 %v1704
    %v1706 = vpop.xlane.xlu0 %1705
    %v1707 = vsub.f32 %v1702, %v1706
    %v1708 = vmul.f32 %v1707, 1.442695
    %v1709 = vpow.pop %v1708
    %v1710 = vsel %vm1703, %v1709, 0.0
    %1711 = vadd.xlane.f32.xlu0 %v1710
    %v1712 = vpop.xlane.xlu0 %1711
    %v1713 = vrcp.pop %v1712
    %v1714 = vmul.f32 %v1709, %v1713
    %v1716 = vsel %vm695, %v1714, 0
    %v1719 = vsel %vm478, %v179, 0
    %1721 = vmatprep.subr.mxu0 0.0
    %1722 = vmatpush1.msra.mxu0 %v1719
    %1723 = vmatprep.subr.mxu0 0.0
    %1724 = vmatpush1.msra.mxu0 0.0
    %1725 = vmatprep.subr.mxu0 0.0
    %1726 = vmatpush1.msra.mxu0 0.0
    %1727 = vmatprep.subr.mxu0 0.0
    %1728 = vmatpush1.msra.mxu0 0.0
    %1729 = vmatprep.subr.mxu0 0.0
    %1730 = vmatpush1.msra.mxu0 0.0
    %1731 = vmatprep.subr.mxu0 0.0
    %1732 = vmatpush1.msra.mxu0 0.0
    %1733 = vmatprep.subr.mxu0 0.0
    %1734 = vmatpush1.msra.mxu0 0.0
    %1735 = vmatprep.subr.mxu0 0.0
    %1736 = vmatpush1.msra.mxu0 0.0
    %1737 = vmatprep.subr.mxu0 0.0
    %1738 = vmatpush1.msra.mxu0 0.0
    %1739 = vmatprep.subr.mxu0 0.0
    %1740 = vmatpush1.msra.mxu0 0.0
    %1741 = vmatprep.subr.mxu0 0.0
    %1742 = vmatpush1.msra.mxu0 0.0
    %1743 = vmatprep.subr.mxu0 0.0
    %1744 = vmatpush1.msra.mxu0 0.0
    %1745 = vmatprep.subr.mxu0 0.0
    %1746 = vmatpush1.msra.mxu0 0.0
    %1747 = vmatprep.subr.mxu0 0.0
    %1748 = vmatpush1.msra.mxu0 0.0
    %1749 = vmatprep.subr.mxu0 0.0
    %1750 = vmatpush1.msra.mxu0 0.0
    %1751 = vmatprep.subr.mxu0 0.0
    %1752 = vmatpush1.msra.mxu0 0.0
    %1753 = vmatprep.subr.mxu0 0.0
    %1754 = vmatpush1.msra.mxu0 0.0
    %1755 = vmatprep.subr.mxu0 0.0
    %1756 = vmatpush1.msra.mxu0 0.0
    %1757 = vmatprep.subr.mxu0 0.0
    %1758 = vmatpush1.msra.mxu0 0.0
    %1759 = vmatprep.subr.mxu0 0.0
    %1760 = vmatpush1.msra.mxu0 0.0
    %1761 = vmatprep.subr.mxu0 0.0
    %1762 = vmatpush1.msra.mxu0 0.0
    %1763 = vmatprep.subr.mxu0 0.0
    %1764 = vmatpush1.msra.mxu0 0.0
    %1765 = vmatprep.subr.mxu0 0.0
    %1766 = vmatpush1.msra.mxu0 0.0
    %1767 = vmatprep.subr.mxu0 0.0
    %1768 = vmatpush1.msra.mxu0 0.0
    %1769 = vmatprep.subr.mxu0 0.0
    %1770 = vmatpush1.msra.mxu0 0.0
    %1771 = vmatprep.subr.mxu0 0.0
    %1772 = vmatpush1.msra.mxu0 0.0
    %1773 = vmatprep.subr.mxu0 0.0
    %1774 = vmatpush1.msra.mxu0 0.0
    %1775 = vmatprep.subr.mxu0 0.0
    %1776 = vmatpush1.msra.mxu0 0.0
    %1777 = vmatprep.subr.mxu0 0.0
    %1778 = vmatpush1.msra.mxu0 0.0
    %1779 = vmatprep.subr.mxu0 0.0
    %1780 = vmatpush1.msra.mxu0 0.0
    %1781 = vmatprep.subr.mxu0 0.0
    %1782 = vmatpush1.msra.mxu0 0.0
    %1783 = vmatprep.subr.mxu0 0.0
    %1784 = vmatpush1.msra.mxu0 0.0
    %1785 = vmatprep.mubr.f32.mxu0 0.0
    %1786 = vmatmul.mubr.f32.gmra.mrb[0].mxu0 %v1716
    %v1787 = vpop.f32.mrb[0].mxu0
    %v1788 = vadd.f32 0.0, %v1787
    %v1789 = vpop.f32.mrb[0].mxu0
    %1790 = vdwg.mxu0
    %v1791 = vmul.f32 %v1788, %v180
    %v1793 = vsel %vm474, %v1791, 0
    %1795 = vmatprep.subr.mxu0 0.0
    %1796 = vmatpush1.msra.mxu0 %v469
    %1797 = vmatprep.subr.mxu0 0.0
    %1798 = vmatpush1.msra.mxu0 %v470
    %1799 = vmatprep.subr.mxu0 0.0
    %1800 = vmatpush1.msra.mxu0 %v471
    %1801 = vmatprep.subr.mxu0 0.0
    %1802 = vmatpush1.msra.mxu0 %v472
    %1803 = vmatprep.subr.mxu0 0.0
    %1804 = vmatpush1.msra.mxu0 %v480
    %1805 = vmatprep.subr.mxu0 0.0
    %1806 = vmatpush1.msra.mxu0 0.0
    %1807 = vmatprep.subr.mxu0 0.0
    %1808 = vmatpush1.msra.mxu0 0.0
    %1809 = vmatprep.subr.mxu0 0.0
    %1810 = vmatpush1.msra.mxu0 0.0
    %1811 = vmatprep.subr.mxu0 0.0
    %1812 = vmatpush1.msra.mxu0 0.0
    %1813 = vmatprep.subr.mxu0 0.0
    %1814 = vmatpush1.msra.mxu0 0.0
    %1815 = vmatprep.subr.mxu0 0.0
    %1816 = vmatpush1.msra.mxu0 0.0
    %1817 = vmatprep.subr.mxu0 0.0
    %1818 = vmatpush1.msra.mxu0 0.0
    %1819 = vmatprep.subr.mxu0 0.0
    %1820 = vmatpush1.msra.mxu0 0.0
    %1821 = vmatprep.subr.mxu0 0.0
    %1822 = vmatpush1.msra.mxu0 0.0
    %1823 = vmatprep.subr.mxu0 0.0
    %1824 = vmatpush1.msra.mxu0 0.0
    %1825 = vmatprep.subr.mxu0 0.0
    %1826 = vmatpush1.msra.mxu0 0.0
    %1827 = vmatprep.subr.mxu0 0.0
    %1828 = vmatpush1.msra.mxu0 0.0
    %1829 = vmatprep.subr.mxu0 0.0
    %1830 = vmatpush1.msra.mxu0 0.0
    %1831 = vmatprep.subr.mxu0 0.0
    %1832 = vmatpush1.msra.mxu0 0.0
    %1833 = vmatprep.subr.mxu0 0.0
    %1834 = vmatpush1.msra.mxu0 0.0
    %1835 = vmatprep.subr.mxu0 0.0
    %1836 = vmatpush1.msra.mxu0 0.0
    %1837 = vmatprep.subr.mxu0 0.0
    %1838 = vmatpush1.msra.mxu0 0.0
    %1839 = vmatprep.subr.mxu0 0.0
    %1840 = vmatpush1.msra.mxu0 0.0
    %1841 = vmatprep.subr.mxu0 0.0
    %1842 = vmatpush1.msra.mxu0 0.0
    %1843 = vmatprep.subr.mxu0 0.0
    %1844 = vmatpush1.msra.mxu0 0.0
    %1845 = vmatprep.subr.mxu0 0.0
    %1846 = vmatpush1.msra.mxu0 0.0
    %1847 = vmatprep.subr.mxu0 0.0
    %1848 = vmatpush1.msra.mxu0 0.0
    %1849 = vmatprep.subr.mxu0 0.0
    %1850 = vmatpush1.msra.mxu0 0.0
    %1851 = vmatprep.subr.mxu0 0.0
    %1852 = vmatpush1.msra.mxu0 0.0
    %1853 = vmatprep.subr.mxu0 0.0
    %1854 = vmatpush1.msra.mxu0 0.0
    %1855 = vmatprep.subr.mxu0 0.0
    %1856 = vmatpush1.msra.mxu0 0.0
    %1857 = vmatprep.subr.mxu0 0.0
    %1858 = vmatpush1.msra.mxu0 0.0
    %1859 = vmatprep.mubr.f32.mxu0 0.0
    %1860 = vmatmul.mubr.f32.gmra.mrb[0].mxu0 %v1793
    %v1861 = vpop.f32.mrb[0].mxu0
    %v1862 = vadd.f32 0.0, %v1861
    %v1863 = vpop.f32.mrb[0].mxu0
    %1864 = vdwg.mxu0
    %v1865 = vpack.c.bf16 %v1862, %v1862
    %v1867 = vsel %vm326, %v1865, 0
    %1869 = vmatprep.subr.bf16.mxu0 0
    %1870 = vmatpush1.bf16.msra.mxu0 %v650
    %1871 = vmatprep.subr.bf16.mxu0 0
    %1872 = vmatpush1.bf16.msra.mxu0 %v651
    %1873 = vmatprep.subr.bf16.mxu0 0
    %1874 = vmatpush1.bf16.msra.mxu0 0
    %1875 = vmatprep.subr.bf16.mxu0 0
    %1876 = vmatpush1.bf16.msra.mxu0 0
    %1877 = vmatprep.subr.bf16.mxu0 0
    %1878 = vmatpush1.bf16.msra.mxu0 0
    %1879 = vmatprep.subr.bf16.mxu0 0
    %1880 = vmatpush1.bf16.msra.mxu0 0
    %1881 = vmatprep.subr.bf16.mxu0 0
    %1882 = vmatpush1.bf16.msra.mxu0 0
    %1883 = vmatprep.subr.bf16.mxu0 0
    %1884 = vmatpush1.bf16.msra.mxu0 0
    %1885 = vmatprep.subr.bf16.mxu0 0
    %1886 = vmatpush1.bf16.msra.mxu0 0
    %1887 = vmatprep.subr.bf16.mxu0 0
    %1888 = vmatpush1.bf16.msra.mxu0 0
    %1889 = vmatprep.subr.bf16.mxu0 0
    %1890 = vmatpush1.bf16.msra.mxu0 0
    %1891 = vmatprep.subr.bf16.mxu0 0
    %1892 = vmatpush1.bf16.msra.mxu0 0
    %1893 = vmatprep.subr.bf16.mxu0 0
    %1894 = vmatpush1.bf16.msra.mxu0 0
    %1895 = vmatprep.subr.bf16.mxu0 0
    %1896 = vmatpush1.bf16.msra.mxu0 0
    %1897 = vmatprep.subr.bf16.mxu0 0
    %1898 = vmatpush1.bf16.msra.mxu0 0
    %1899 = vmatprep.subr.bf16.mxu0 0
    %1900 = vmatpush1.bf16.msra.mxu0 0
    %1901 = vmatprep.mubr.bf16.mxu0 0
    %1902 = vmatmul.mubr.bf16.gmra.mrb[0].mxu0 %v1867
    %v1903 = vpop.f32.mrb[0].mxu0
    %v1904 = vadd.f32 0.0, %v1903
    %v1905 = vpop.f32.mrb[0].mxu0
    %v1906 = vpop.f32.mrb[0].mxu0
    %v1907 = vpop.f32.mrb[0].mxu0
    %1908 = vdwg.mxu0
    %v1910 = vsel %vm1331, %v1904, 0
    %1912 = vmatprep.subr.mxu0 0.0
    %1913 = vmatpush1.msra.mxu0 %v1910
    %1914 = vmatprep.subr.mxu0 0.0
    %1915 = vmatpush1.msra.mxu0 0.0
    %1916 = vmatprep.subr.mxu0 0.0
    %1917 = vmatpush1.msra.mxu0 0.0
    %1918 = vmatprep.subr.mxu0 0.0
    %1919 = vmatpush1.msra.mxu0 0.0
    %1920 = vmatprep.subr.mxu0 0.0
    %1921 = vmatpush1.msra.mxu0 0.0
    %1922 = vmatprep.subr.mxu0 0.0
    %1923 = vmatpush1.msra.mxu0 0.0
    %1924 = vmatprep.subr.mxu0 0.0
    %1925 = vmatpush1.msra.mxu0 0.0
    %1926 = vmatprep.subr.mxu0 0.0
    %1927 = vmatpush1.msra.mxu0 0.0
    %1928 = vmatprep.subr.mxu0 0.0
    %1929 = vmatpush1.msra.mxu0 0.0
    %1930 = vmatprep.subr.mxu0 0.0
    %1931 = vmatpush1.msra.mxu0 0.0
    %1932 = vmatprep.subr.mxu0 0.0
    %1933 = vmatpush1.msra.mxu0 0.0
    %1934 = vmatprep.subr.mxu0 0.0
    %1935 = vmatpush1.msra.mxu0 0.0
    %1936 = vmatprep.subr.mxu0 0.0
    %1937 = vmatpush1.msra.mxu0 0.0
    %1938 = vmatprep.subr.mxu0 0.0
    %1939 = vmatpush1.msra.mxu0 0.0
    %1940 = vmatprep.subr.mxu0 0.0
    %1941 = vmatpush1.msra.mxu0 0.0
    %1942 = vmatprep.subr.mxu0 0.0
    %1943 = vmatpush1.msra.mxu0 0.0
    %1944 = vmatprep.subr.mxu0 0.0
    %1945 = vmatpush1.msra.mxu0 0.0
    %1946 = vmatprep.subr.mxu0 0.0
    %1947 = vmatpush1.msra.mxu0 0.0
    %1948 = vmatprep.subr.mxu0 0.0
    %1949 = vmatpush1.msra.mxu0 0.0
    %1950 = vmatprep.subr.mxu0 0.0
    %1951 = vmatpush1.msra.mxu0 0.0
    %1952 = vmatprep.subr.mxu0 0.0
    %1953 = vmatpush1.msra.mxu0 0.0
    %1954 = vmatprep.subr.mxu0 0.0
    %1955 = vmatpush1.msra.mxu0 0.0
    %1956 = vmatprep.subr.mxu0 0.0
    %1957 = vmatpush1.msra.mxu0 0.0
    %1958 = vmatprep.subr.mxu0 0.0
    %1959 = vmatpush1.msra.mxu0 0.0
    %1960 = vmatprep.subr.mxu0 0.0
    %1961 = vmatpush1.msra.mxu0 0.0
    %1962 = vmatprep.subr.mxu0 0.0
    %1963 = vmatpush1.msra.mxu0 0.0
    %1964 = vmatprep.subr.mxu0 0.0
    %1965 = vmatpush1.msra.mxu0 0.0
    %1966 = vmatprep.subr.mxu0 0.0
    %1967 = vmatpush1.msra.mxu0 0.0
    %1968 = vmatprep.subr.mxu0 0.0
    %1969 = vmatpush1.msra.mxu0 0.0
    %1970 = vmatprep.subr.mxu0 0.0
    %1971 = vmatpush1.msra.mxu0 0.0
    %1972 = vmatprep.subr.mxu0 0.0
    %1973 = vmatpush1.msra.mxu0 0.0
    %1974 = vmatprep.subr.mxu0 0.0
    %1975 = vmatpush1.msra.mxu0 0.0
    %1976 = vmatprep.mubr.f32.mxu0 0.0
    %1977 = vmatmul.mubr.f32.gmra.mrb[0].mxu0 %v1329
    %v1978 = vpop.f32.mrb[0].mxu0
    %v1979 = vadd.f32 0.0, %v1978
    %v1980 = vpop.f32.mrb[0].mxu0
    %1981 = vdwg.mxu0
    %v1982 = vsub.f32 %v1904, %v1979
    %v1983 = vmul.f32 %v1982, %v1982
    %v1985 = vsel %vm1331, %v1983, 0
    %1987 = vmatprep.subr.mxu0 0.0
    %1988 = vmatpush1.msra.mxu0 %v1985
    %1989 = vmatprep.subr.mxu0 0.0
    %1990 = vmatpush1.msra.mxu0 0.0
    %1991 = vmatprep.subr.mxu0 0.0
    %1992 = vmatpush1.msra.mxu0 0.0
    %1993 = vmatprep.subr.mxu0 0.0
    %1994 = vmatpush1.msra.mxu0 0.0
    %1995 = vmatprep.subr.mxu0 0.0
    %1996 = vmatpush1.msra.mxu0 0.0
    %1997 = vmatprep.subr.mxu0 0.0
    %1998 = vmatpush1.msra.mxu0 0.0
    %1999 = vmatprep.subr.mxu0 0.0
    %2000 = vmatpush1.msra.mxu0 0.0
    %2001 = vmatprep.subr.mxu0 0.0
    %2002 = vmatpush1.msra.mxu0 0.0
    %2003 = vmatprep.subr.mxu0 0.0
    %2004 = vmatpush1.msra.mxu0 0.0
    %2005 = vmatprep.subr.mxu0 0.0
    %2006 = vmatpush1.msra.mxu0 0.0
    %2007 = vmatprep.subr.mxu0 0.0
    %2008 = vmatpush1.msra.mxu0 0.0
    %2009 = vmatprep.subr.mxu0 0.0
    %2010 = vmatpush1.msra.mxu0 0.0
    %2011 = vmatprep.subr.mxu0 0.0
    %2012 = vmatpush1.msra.mxu0 0.0
    %2013 = vmatprep.subr.mxu0 0.0
    %2014 = vmatpush1.msra.mxu0 0.0
    %2015 = vmatprep.subr.mxu0 0.0
    %2016 = vmatpush1.msra.mxu0 0.0
    %2017 = vmatprep.subr.mxu0 0.0
    %2018 = vmatpush1.msra.mxu0 0.0
    %2019 = vmatprep.subr.mxu0 0.0
    %2020 = vmatpush1.msra.mxu0 0.0
    %2021 = vmatprep.subr.mxu0 0.0
    %2022 = vmatpush1.msra.mxu0 0.0
    %2023 = vmatprep.subr.mxu0 0.0
    %2024 = vmatpush1.msra.mxu0 0.0
    %2025 = vmatprep.subr.mxu0 0.0
    %2026 = vmatpush1.msra.mxu0 0.0
    %2027 = vmatprep.subr.mxu0 0.0
    %2028 = vmatpush1.msra.mxu0 0.0
    %2029 = vmatprep.subr.mxu0 0.0
    %2030 = vmatpush1.msra.mxu0 0.0
    %2031 = vmatprep.subr.mxu0 0.0
    %2032 = vmatpush1.msra.mxu0 0.0
    %2033 = vmatprep.subr.mxu0 0.0
    %2034 = vmatpush1.msra.mxu0 0.0
    %2035 = vmatprep.subr.mxu0 0.0
    %2036 = vmatpush1.msra.mxu0 0.0
    %2037 = vmatprep.subr.mxu0 0.0
    %2038 = vmatpush1.msra.mxu0 0.0
    %2039 = vmatprep.subr.mxu0 0.0
    %2040 = vmatpush1.msra.mxu0 0.0
    %2041 = vmatprep.subr.mxu0 0.0
    %2042 = vmatpush1.msra.mxu0 0.0
    %2043 = vmatprep.subr.mxu0 0.0
    %2044 = vmatpush1.msra.mxu0 0.0
    %2045 = vmatprep.subr.mxu0 0.0
    %2046 = vmatpush1.msra.mxu0 0.0
    %2047 = vmatprep.subr.mxu0 0.0
    %2048 = vmatpush1.msra.mxu0 0.0
    %2049 = vmatprep.subr.mxu0 0.0
    %2050 = vmatpush1.msra.mxu0 0.0
    %2051 = vmatprep.mubr.f32.mxu0 0.0
    %2052 = vmatmul.mubr.f32.gmra.mrb[0].mxu0 %v1329
    %v2053 = vpop.f32.mrb[0].mxu0
    %v2054 = vadd.f32 1e-05, %v2053
    %v2055 = vpop.f32.mrb[0].mxu0
    %2056 = vdwg.mxu0
    %v2057 = vrsqrt.pop %v2054
    %v2058 = vmul.f32 %v1982, %v2057
    %v2059 = vmul.f32 %v2058, %v853
    %v2060 = vadd.f32 %v2059, %v860
    %v2061 = vmax.f32 %v2060, 0.0
    %v2062 = vpack.c.bf16 %v2061, %v2061
    %v2064 = vsel %vm255, %v2062, 0
    %2066 = vmatprep.subr.bf16.mxu0 0
    %2067 = vmatpush1.bf16.msra.mxu0 %v865
    %2068 = vmatprep.subr.bf16.mxu0 0
    %2069 = vmatpush1.bf16.msra.mxu0 %v866
    %2070 = vmatprep.subr.bf16.mxu0 0
    %2071 = vmatpush1.bf16.msra.mxu0 %v867
    %2072 = vmatprep.subr.bf16.mxu0 0
    %2073 = vmatpush1.bf16.msra.mxu0 %v868
    %2074 = vmatprep.subr.bf16.mxu0 0
    %2075 = vmatpush1.bf16.msra.mxu0 0
    %2076 = vmatprep.subr.bf16.mxu0 0
    %2077 = vmatpush1.bf16.msra.mxu0 0
    %2078 = vmatprep.subr.bf16.mxu0 0
    %2079 = vmatpush1.bf16.msra.mxu0 0
    %2080 = vmatprep.subr.bf16.mxu0 0
    %2081 = vmatpush1.bf16.msra.mxu0 0
    %2082 = vmatprep.subr.bf16.mxu0 0
    %2083 = vmatpush1.bf16.msra.mxu0 0
    %2084 = vmatprep.subr.bf16.mxu0 0
    %2085 = vmatpush1.bf16.msra.mxu0 0
    %2086 = vmatprep.subr.bf16.mxu0 0
    %2087 = vmatpush1.bf16.msra.mxu0 0
    %2088 = vmatprep.subr.bf16.mxu0 0
    %2089 = vmatpush1.bf16.msra.mxu0 0
    %2090 = vmatprep.subr.bf16.mxu0 0
    %2091 = vmatpush1.bf16.msra.mxu0 0
    %2092 = vmatprep.subr.bf16.mxu0 0
    %2093 = vmatpush1.bf16.msra.mxu0 0
    %2094 = vmatprep.subr.bf16.mxu0 0
    %2095 = vmatpush1.bf16.msra.mxu0 0
    %2096 = vmatprep.subr.bf16.mxu0 0
    %2097 = vmatpush1.bf16.msra.mxu0 0
    %2098 = vmatprep.mubr.bf16.mxu0 0
    %2099 = vmatmul.mubr.bf16.gmra.mrb[0].mxu0 %v2064
    %v2100 = vpop.f32.mrb[0].mxu0
    %v2101 = vadd.f32 0.0, %v2100
    %v2102 = vpop.f32.mrb[0].mxu0
    %v2103 = vpop.f32.mrb[0].mxu0
    %v2104 = vpop.f32.mrb[0].mxu0
    %2105 = vdwg.mxu0
    %v2107 = vsel %vm1331, %v2101, 0
    %2109 = vmatprep.subr.mxu0 0.0
    %2110 = vmatpush1.msra.mxu0 %v2107
    %2111 = vmatprep.subr.mxu0 0.0
    %2112 = vmatpush1.msra.mxu0 0.0
    %2113 = vmatprep.subr.mxu0 0.0
    %2114 = vmatpush1.msra.mxu0 0.0
    %2115 = vmatprep.subr.mxu0 0.0
    %2116 = vmatpush1.msra.mxu0 0.0
    %2117 = vmatprep.subr.mxu0 0.0
    %2118 = vmatpush1.msra.mxu0 0.0
    %2119 = vmatprep.subr.mxu0 0.0
    %2120 = vmatpush1.msra.mxu0 0.0
    %2121 = vmatprep.subr.mxu0 0.0
    %2122 = vmatpush1.msra.mxu0 0.0
    %2123 = vmatprep.subr.mxu0 0.0
    %2124 = vmatpush1.msra.mxu0 0.0
    %2125 = vmatprep.subr.mxu0 0.0
    %2126 = vmatpush1.msra.mxu0 0.0
    %2127 = vmatprep.subr.mxu0 0.0
    %2128 = vmatpush1.msra.mxu0 0.0
    %2129 = vmatprep.subr.mxu0 0.0
    %2130 = vmatpush1.msra.mxu0 0.0
    %2131 = vmatprep.subr.mxu0 0.0
    %2132 = vmatpush1.msra.mxu0 0.0
    %2133 = vmatprep.subr.mxu0 0.0
    %2134 = vmatpush1.msra.mxu0 0.0
    %2135 = vmatprep.subr.mxu0 0.0
    %2136 = vmatpush1.msra.mxu0 0.0
    %2137 = vmatprep.subr.mxu0 0.0
    %2138 = vmatpush1.msra.mxu0 0.0
    %2139 = vmatprep.subr.mxu0 0.0
    %2140 = vmatpush1.msra.mxu0 0.0
    %2141 = vmatprep.subr.mxu0 0.0
    %2142 = vmatpush1.msra.mxu0 0.0
    %2143 = vmatprep.subr.mxu0 0.0
    %2144 = vmatpush1.msra.mxu0 0.0
    %2145 = vmatprep.subr.mxu0 0.0
    %2146 = vmatpush1.msra.mxu0 0.0
    %2147 = vmatprep.subr.mxu0 0.0
    %2148 = vmatpush1.msra.mxu0 0.0
    %2149 = vmatprep.subr.mxu0 0.0
    %2150 = vmatpush1.msra.mxu0 0.0
    %2151 = vmatprep.subr.mxu0 0.0
    %2152 = vmatpush1.msra.mxu0 0.0
    %2153 = vmatprep.subr.mxu0 0.0
    %2154 = vmatpush1.msra.mxu0 0.0
    %2155 = vmatprep.subr.mxu0 0.0
    %2156 = vmatpush1.msra.mxu0 0.0
    %2157 = vmatprep.subr.mxu0 0.0
    %2158 = vmatpush1.msra.mxu0 0.0
    %2159 = vmatprep.subr.mxu0 0.0
    %2160 = vmatpush1.msra.mxu0 0.0
    %2161 = vmatprep.subr.mxu0 0.0
    %2162 = vmatpush1.msra.mxu0 0.0
    %2163 = vmatprep.subr.mxu0 0.0
    %2164 = vmatpush1.msra.mxu0 0.0
    %2165 = vmatprep.subr.mxu0 0.0
    %2166 = vmatpush1.msra.mxu0 0.0
    %2167 = vmatprep.subr.mxu0 0.0
    %2168 = vmatpush1.msra.mxu0 0.0
    %2169 = vmatprep.subr.mxu0 0.0
    %2170 = vmatpush1.msra.mxu0 0.0
    %2171 = vmatprep.subr.mxu0 0.0
    %2172 = vmatpush1.msra.mxu0 0.0
    %2173 = vmatprep.mubr.f32.mxu0 0.0
    %2174 = vmatmul.mubr.f32.gmra.mrb[0].mxu0 %v1329
    %v2175 = vpop.f32.mrb[0].mxu0
    %v2176 = vadd.f32 0.0, %v2175
    %v2177 = vpop.f32.mrb[0].mxu0
    %2178 = vdwg.mxu0
    %v2179 = vsub.f32 %v2101, %v2176
    %v2180 = vmul.f32 %v2179, %v2179
    %v2182 = vsel %vm1331, %v2180, 0
    %2184 = vmatprep.subr.mxu0 0.0
    %2185 = vmatpush1.msra.mxu0 %v2182
    %2186 = vmatprep.subr.mxu0 0.0
    %2187 = vmatpush1.msra.mxu0 0.0
    %2188 = vmatprep.subr.mxu0 0.0
    %2189 = vmatpush1.msra.mxu0 0.0
    %2190 = vmatprep.subr.mxu0 0.0
    %2191 = vmatpush1.msra.mxu0 0.0
    %2192 = vmatprep.subr.mxu0 0.0
    %2193 = vmatpush1.msra.mxu0 0.0
    %2194 = vmatprep.subr.mxu0 0.0
    %2195 = vmatpush1.msra.mxu0 0.0
    %2196 = vmatprep.subr.mxu0 0.0
    %2197 = vmatpush1.msra.mxu0 0.0
    %2198 = vmatprep.subr.mxu0 0.0
    %2199 = vmatpush1.msra.mxu0 0.0
    %2200 = vmatprep.subr.mxu0 0.0
    %2201 = vmatpush1.msra.mxu0 0.0
    %2202 = vmatprep.subr.mxu0 0.0
    %2203 = vmatpush1.msra.mxu0 0.0
    %2204 = vmatprep.subr.mxu0 0.0
    %2205 = vmatpush1.msra.mxu0 0.0
    %2206 = vmatprep.subr.mxu0 0.0
    %2207 = vmatpush1.msra.mxu0 0.0
    %2208 = vmatprep.subr.mxu0 0.0
    %2209 = vmatpush1.msra.mxu0 0.0
    %2210 = vmatprep.subr.mxu0 0.0
    %2211 = vmatpush1.msra.mxu0 0.0
    %2212 = vmatprep.subr.mxu0 0.0
    %2213 = vmatpush1.msra.mxu0 0.0
    %2214 = vmatprep.subr.mxu0 0.0
    %2215 = vmatpush1.msra.mxu0 0.0
    %2216 = vmatprep.subr.mxu0 0.0
    %2217 = vmatpush1.msra.mxu0 0.0
    %2218 = vmatprep.subr.mxu0 0.0
    %2219 = vmatpush1.msra.mxu0 0.0
    %2220 = vmatprep.subr.mxu0 0.0
    %2221 = vmatpush1.msra.mxu0 0.0
    %2222 = vmatprep.subr.mxu0 0.0
    %2223 = vmatpush1.msra.mxu0 0.0
    %2224 = vmatprep.subr.mxu0 0.0
    %2225 = vmatpush1.msra.mxu0 0.0
    %2226 = vmatprep.subr.mxu0 0.0
    %2227 = vmatpush1.msra.mxu0 0.0
    %2228 = vmatprep.subr.mxu0 0.0
    %2229 = vmatpush1.msra.mxu0 0.0
    %2230 = vmatprep.subr.mxu0 0.0
    %2231 = vmatpush1.msra.mxu0 0.0
    %2232 = vmatprep.subr.mxu0 0.0
    %2233 = vmatpush1.msra.mxu0 0.0
    %2234 = vmatprep.subr.mxu0 0.0
    %2235 = vmatpush1.msra.mxu0 0.0
    %2236 = vmatprep.subr.mxu0 0.0
    %2237 = vmatpush1.msra.mxu0 0.0
    %2238 = vmatprep.subr.mxu0 0.0
    %2239 = vmatpush1.msra.mxu0 0.0
    %2240 = vmatprep.subr.mxu0 0.0
    %2241 = vmatpush1.msra.mxu0 0.0
    %2242 = vmatprep.subr.mxu0 0.0
    %2243 = vmatpush1.msra.mxu0 0.0
    %2244 = vmatprep.subr.mxu0 0.0
    %2245 = vmatpush1.msra.mxu0 0.0
    %2246 = vmatprep.subr.mxu0 0.0
    %2247 = vmatpush1.msra.mxu0 0.0
    %2248 = vmatprep.mubr.f32.mxu0 0.0
    %2249 = vmatmul.mubr.f32.gmra.mrb[0].mxu0 %v1329
    %v2250 = vpop.f32.mrb[0].mxu0
    %v2251 = vadd.f32 1e-05, %v2250
    %v2252 = vpop.f32.mrb[0].mxu0
    %2253 = vdwg.mxu0
    %v2254 = vrsqrt.pop %v2251
    %v2255 = vmul.f32 %v2179, %v2254
    %v2256 = vmul.f32 %v2255, %v1066
    %v2257 = vadd.f32 %v2256, %v1073
    %v2258 = vmax.f32 %v2257, 0.0
    %v2259 = vpack.c.bf16 %v2258, %v2258
    %v2261 = vsel %vm255, %v2259, 0
    %2263 = vmatprep.subr.bf16.mxu0 0
    %2264 = vmatpush1.bf16.msra.mxu0 %v1078
    %2265 = vmatprep.subr.bf16.mxu0 0
    %2266 = vmatpush1.bf16.msra.mxu0 %v1079
    %2267 = vmatprep.subr.bf16.mxu0 0
    %2268 = vmatpush1.bf16.msra.mxu0 %v1080
    %2269 = vmatprep.subr.bf16.mxu0 0
    %2270 = vmatpush1.bf16.msra.mxu0 %v1081
    %2271 = vmatprep.subr.bf16.mxu0 0
    %2272 = vmatpush1.bf16.msra.mxu0 0
    %2273 = vmatprep.subr.bf16.mxu0 0
    %2274 = vmatpush1.bf16.msra.mxu0 0
    %2275 = vmatprep.subr.bf16.mxu0 0
    %2276 = vmatpush1.bf16.msra.mxu0 0
    %2277 = vmatprep.subr.bf16.mxu0 0
    %2278 = vmatpush1.bf16.msra.mxu0 0
    %2279 = vmatprep.subr.bf16.mxu0 0
    %2280 = vmatpush1.bf16.msra.mxu0 0
    %2281 = vmatprep.subr.bf16.mxu0 0
    %2282 = vmatpush1.bf16.msra.mxu0 0
    %2283 = vmatprep.subr.bf16.mxu0 0
    %2284 = vmatpush1.bf16.msra.mxu0 0
    %2285 = vmatprep.subr.bf16.mxu0 0
    %2286 = vmatpush1.bf16.msra.mxu0 0
    %2287 = vmatprep.subr.bf16.mxu0 0
    %2288 = vmatpush1.bf16.msra.mxu0 0
    %2289 = vmatprep.subr.bf16.mxu0 0
    %2290 = vmatpush1.bf16.msra.mxu0 0
    %2291 = vmatprep.subr.bf16.mxu0 0
    %2292 = vmatpush1.bf16.msra.mxu0 0
    %2293 = vmatprep.subr.bf16.mxu0 0
    %2294 = vmatpush1.bf16.msra.mxu0 0
    %2295 = vmatprep.mubr.bf16.mxu0 0
    %2296 = vmatmul.mubr.bf16.gmra.mrb[0].mxu0 %v2261
    %v2297 = vpop.f32.mrb[0].mxu0
    %v2298 = vadd.f32 0.0, %v2297
    %v2299 = vpop.f32.mrb[0].mxu0
    %v2300 = vpop.f32.mrb[0].mxu0
    %v2301 = vpop.f32.mrb[0].mxu0
    %2302 = vdwg.mxu0
    %v2304 = vsel %vm1331, %v2298, 0
    %2306 = vmatprep.subr.mxu0 0.0
    %2307 = vmatpush1.msra.mxu0 %v2304
    %2308 = vmatprep.subr.mxu0 0.0
    %2309 = vmatpush1.msra.mxu0 0.0
    %2310 = vmatprep.subr.mxu0 0.0
    %2311 = vmatpush1.msra.mxu0 0.0
    %2312 = vmatprep.subr.mxu0 0.0
    %2313 = vmatpush1.msra.mxu0 0.0
    %2314 = vmatprep.subr.mxu0 0.0
    %2315 = vmatpush1.msra.mxu0 0.0
    %2316 = vmatprep.subr.mxu0 0.0
    %2317 = vmatpush1.msra.mxu0 0.0
    %2318 = vmatprep.subr.mxu0 0.0
    %2319 = vmatpush1.msra.mxu0 0.0
    %2320 = vmatprep.subr.mxu0 0.0
    %2321 = vmatpush1.msra.mxu0 0.0
    %2322 = vmatprep.subr.mxu0 0.0
    %2323 = vmatpush1.msra.mxu0 0.0
    %2324 = vmatprep.subr.mxu0 0.0
    %2325 = vmatpush1.msra.mxu0 0.0
    %2326 = vmatprep.subr.mxu0 0.0
    %2327 = vmatpush1.msra.mxu0 0.0
    %2328 = vmatprep.subr.mxu0 0.0
    %2329 = vmatpush1.msra.mxu0 0.0
    %2330 = vmatprep.subr.mxu0 0.0
    %2331 = vmatpush1.msra.mxu0 0.0
    %2332 = vmatprep.subr.mxu0 0.0
    %2333 = vmatpush1.msra.mxu0 0.0
    %2334 = vmatprep.subr.mxu0 0.0
    %2335 = vmatpush1.msra.mxu0 0.0
    %2336 = vmatprep.subr.mxu0 0.0
    %2337 = vmatpush1.msra.mxu0 0.0
    %2338 = vmatprep.subr.mxu0 0.0
    %2339 = vmatpush1.msra.mxu0 0.0
    %2340 = vmatprep.subr.mxu0 0.0
    %2341 = vmatpush1.msra.mxu0 0.0
    %2342 = vmatprep.subr.mxu0 0.0
    %2343 = vmatpush1.msra.mxu0 0.0
    %2344 = vmatprep.subr.mxu0 0.0
    %2345 = vmatpush1.msra.mxu0 0.0
    %2346 = vmatprep.subr.mxu0 0.0
    %2347 = vmatpush1.msra.mxu0 0.0
    %2348 = vmatprep.subr.mxu0 0.0
    %2349 = vmatpush1.msra.mxu0 0.0
    %2350 = vmatprep.subr.mxu0 0.0
    %2351 = vmatpush1.msra.mxu0 0.0
    %2352 = vmatprep.subr.mxu0 0.0
    %2353 = vmatpush1.msra.mxu0 0.0
    %2354 = vmatprep.subr.mxu0 0.0
    %2355 = vmatpush1.msra.mxu0 0.0
    %2356 = vmatprep.subr.mxu0 0.0
    %2357 = vmatpush1.msra.mxu0 0.0
    %2358 = vmatprep.subr.mxu0 0.0
    %2359 = vmatpush1.msra.mxu0 0.0
    %2360 = vmatprep.subr.mxu0 0.0
    %2361 = vmatpush1.msra.mxu0 0.0
    %2362 = vmatprep.subr.mxu0 0.0
    %2363 = vmatpush1.msra.mxu0 0.0
    %2364 = vmatprep.subr.mxu0 0.0
    %2365 = vmatpush1.msra.mxu0 0.0
    %2366 = vmatprep.subr.mxu0 0.0
    %2367 = vmatpush1.msra.mxu0 0.0
    %2368 = vmatprep.subr.mxu0 0.0
    %2369 = vmatpush1.msra.mxu0 0.0
    %2370 = vmatprep.mubr.f32.mxu0 0.0
    %2371 = vmatmul.mubr.f32.gmra.mrb[0].mxu0 %v1329
    %v2372 = vpop.f32.mrb[0].mxu0
    %v2373 = vadd.f32 0.0, %v2372
    %v2374 = vpop.f32.mrb[0].mxu0
    %2375 = vdwg.mxu0
    %v2376 = vsub.f32 %v2298, %v2373
    %v2377 = vmul.f32 %v2376, %v2376
    %v2379 = vsel %vm1331, %v2377, 0
    %2381 = vmatprep.subr.mxu0 0.0
    %2382 = vmatpush1.msra.mxu0 %v2379
    %2383 = vmatprep.subr.mxu0 0.0
    %2384 = vmatpush1.msra.mxu0 0.0
    %2385 = vmatprep.subr.mxu0 0.0
    %2386 = vmatpush1.msra.mxu0 0.0
    %2387 = vmatprep.subr.mxu0 0.0
    %2388 = vmatpush1.msra.mxu0 0.0
    %2389 = vmatprep.subr.mxu0 0.0
    %2390 = vmatpush1.msra.mxu0 0.0
    %2391 = vmatprep.subr.mxu0 0.0
    %2392 = vmatpush1.msra.mxu0 0.0
    %2393 = vmatprep.subr.mxu0 0.0
    %2394 = vmatpush1.msra.mxu0 0.0
    %2395 = vmatprep.subr.mxu0 0.0
    %2396 = vmatpush1.msra.mxu0 0.0
    %2397 = vmatprep.subr.mxu0 0.0
    %2398 = vmatpush1.msra.mxu0 0.0
    %2399 = vmatprep.subr.mxu0 0.0
    %2400 = vmatpush1.msra.mxu0 0.0
    %2401 = vmatprep.subr.mxu0 0.0
    %2402 = vmatpush1.msra.mxu0 0.0
    %2403 = vmatprep.subr.mxu0 0.0
    %2404 = vmatpush1.msra.mxu0 0.0
    %2405 = vmatprep.subr.mxu0 0.0
    %2406 = vmatpush1.msra.mxu0 0.0
    %2407 = vmatprep.subr.mxu0 0.0
    %2408 = vmatpush1.msra.mxu0 0.0
    %2409 = vmatprep.subr.mxu0 0.0
    %2410 = vmatpush1.msra.mxu0 0.0
    %2411 = vmatprep.subr.mxu0 0.0
    %2412 = vmatpush1.msra.mxu0 0.0
    %2413 = vmatprep.subr.mxu0 0.0
    %2414 = vmatpush1.msra.mxu0 0.0
    %2415 = vmatprep.subr.mxu0 0.0
    %2416 = vmatpush1.msra.mxu0 0.0
    %2417 = vmatprep.subr.mxu0 0.0
    %2418 = vmatpush1.msra.mxu0 0.0
    %2419 = vmatprep.subr.mxu0 0.0
    %2420 = vmatpush1.msra.mxu0 0.0
    %2421 = vmatprep.subr.mxu0 0.0
    %2422 = vmatpush1.msra.mxu0 0.0
    %2423 = vmatprep.subr.mxu0 0.0
    %2424 = vmatpush1.msra.mxu0 0.0
    %2425 = vmatprep.subr.mxu0 0.0
    %2426 = vmatpush1.msra.mxu0 0.0
    %2427 = vmatprep.subr.mxu0 0.0
    %2428 = vmatpush1.msra.mxu0 0.0
    %2429 = vmatprep.subr.mxu0 0.0
    %2430 = vmatpush1.msra.mxu0 0.0
    %2431 = vmatprep.subr.mxu0 0.0
    %2432 = vmatpush1.msra.mxu0 0.0
    %2433 = vmatprep.subr.mxu0 0.0
    %2434 = vmatpush1.msra.mxu0 0.0
    %2435 = vmatprep.subr.mxu0 0.0
    %2436 = vmatpush1.msra.mxu0 0.0
    %2437 = vmatprep.subr.mxu0 0.0
    %2438 = vmatpush1.msra.mxu0 0.0
    %2439 = vmatprep.subr.mxu0 0.0
    %2440 = vmatpush1.msra.mxu0 0.0
    %2441 = vmatprep.subr.mxu0 0.0
    %2442 = vmatpush1.msra.mxu0 0.0
    %2443 = vmatprep.subr.mxu0 0.0
    %2444 = vmatpush1.msra.mxu0 0.0
    %2445 = vmatprep.mubr.f32.mxu0 0.0
    %2446 = vmatmul.mubr.f32.gmra.mrb[0].mxu0 %v1329
    %v2447 = vpop.f32.mrb[0].mxu0
    %v2448 = vadd.f32 1e-05, %v2447
    %v2449 = vpop.f32.mrb[0].mxu0
    %2450 = vdwg.mxu0
    %v2451 = vrsqrt.pop %v2448
    %v2452 = vmul.f32 %v2376, %v2451
    %v2453 = vld [vmem:[%s49] sm:$0xff]
    %v2454 = vld [vmem:[%s49 + $0x8] sm:$0xff]
    %v2455 = vld [vmem:[%s55] sm:$0xff]
    %v2456 = vld [vmem:[%s55 + $0x8] sm:$0xff]
    %v2457 = vld [vmem:[%s55 + $0x10] sm:$0xff]
    %v2458 = vld [vmem:[%s55 + $0x18] sm:$0xff]
    %v2459 = vld [vmem:[%s55 + $0x20] sm:$0xff]
    %v2460 = vld [vmem:[%s55 + $0x28] sm:$0xff]
    %v2461 = vld [vmem:[%s55 + $0x30] sm:$0xff]
    %v2462 = vld [vmem:[%s55 + $0x38] sm:$0xff]
    %v2463 = vld [vmem:[%s51] sm:$0x1]
    %v2464 = vld [vmem:[%s53] sm:$0x1]
    %v2465 = vpack.c.bf16 %v1274, %v1274
    %v2466 = vpack.c.bf16 %v2454, %v2453
    %vm2467 = vcmask 130048
    %v2469 = vsel %vm2467, %v2465, 0
    %2471 = vmatprep.subr.bf16.mxu0 0
    %2472 = vmatpush1.bf16.msra.mxu0 %v2466
    %2473 = vmatprep.subr.bf16.mxu0 0
    %2474 = vmatpush1.bf16.msra.mxu0 0
    %2475 = vmatprep.subr.bf16.mxu0 0
    %2476 = vmatpush1.bf16.msra.mxu0 0
    %2477 = vmatprep.subr.bf16.mxu0 0
    %2478 = vmatpush1.bf16.msra.mxu0 0
    %2479 = vmatprep.subr.bf16.mxu0 0
    %2480 = vmatpush1.bf16.msra.mxu0 0
    %2481 = vmatprep.subr.bf16.mxu0 0
    %2482 = vmatpush1.bf16.msra.mxu0 0
    %2483 = vmatprep.subr.bf16.mxu0 0
    %2484 = vmatpush1.bf16.msra.mxu0 0
    %2485 = vmatprep.subr.bf16.mxu0 0
    %2486 = vmatpush1.bf16.msra.mxu0 0
    %2487 = vmatprep.subr.bf16.mxu0 0
    %2488 = vmatpush1.bf16.msra.mxu0 0
    %2489 = vmatprep.subr.bf16.mxu0 0
    %2490 = vmatpush1.bf16.msra.mxu0 0
    %2491 = vmatprep.subr.bf16.mxu0 0
    %2492 = vmatpush1.bf16.msra.mxu0 0
    %2493 = vmatprep.subr.bf16.mxu0 0
    %2494 = vmatpush1.bf16.msra.mxu0 0
    %2495 = vmatprep.subr.bf16.mxu0 0
    %2496 = vmatpush1.bf16.msra.mxu0 0
    %2497 = vmatprep.subr.bf16.mxu0 0
    %2498 = vmatpush1.bf16.msra.mxu0 0
    %2499 = vmatprep.subr.bf16.mxu0 0
    %2500 = vmatpush1.bf16.msra.mxu0 0
    %2501 = vmatprep.subr.bf16.mxu0 0
    %2502 = vmatpush1.bf16.msra.mxu0 0
    %2503 = vmatprep.mubr.bf16.mxu0 0
    %2504 = vmatmul.mubr.bf16.gmra.mrb[0].mxu0 %v2469
    %v2505 = vpop.f32.mrb[0].mxu0
    %v2506 = vadd.f32 0.0, %v2505
    %v2507 = vpop.f32.mrb[0].mxu0
    %v2508 = vpop.f32.mrb[0].mxu0
    %v2509 = vpop.f32.mrb[0].mxu0
    %2510 = vdwg.mxu0
    %v2512 = vsel %vm478, %v2506, 0
    %2514 = vmatprep.subr.mxu0 0.0
    %2515 = vmatpush1.msra.mxu0 %v2512
    %2516 = vmatprep.subr.mxu0 0.0
    %2517 = vmatpush1.msra.mxu0 0.0
    %2518 = vmatprep.subr.mxu0 0.0
    %2519 = vmatpush1.msra.mxu0 0.0
    %2520 = vmatprep.subr.mxu0 0.0
    %2521 = vmatpush1.msra.mxu0 0.0
    %2522 = vmatprep.subr.mxu0 0.0
    %2523 = vmatpush1.msra.mxu0 0.0
    %2524 = vmatprep.subr.mxu0 0.0
    %2525 = vmatpush1.msra.mxu0 0.0
    %2526 = vmatprep.subr.mxu0 0.0
    %2527 = vmatpush1.msra.mxu0 0.0
    %2528 = vmatprep.subr.mxu0 0.0
    %2529 = vmatpush1.msra.mxu0 0.0
    %2530 = vmatprep.subr.mxu0 0.0
    %2531 = vmatpush1.msra.mxu0 0.0
    %2532 = vmatprep.subr.mxu0 0.0
    %2533 = vmatpush1.msra.mxu0 0.0
    %2534 = vmatprep.subr.mxu0 0.0
    %2535 = vmatpush1.msra.mxu0 0.0
    %2536 = vmatprep.subr.mxu0 0.0
    %2537 = vmatpush1.msra.mxu0 0.0
    %2538 = vmatprep.subr.mxu0 0.0
    %2539 = vmatpush1.msra.mxu0 0.0
    %2540 = vmatprep.subr.mxu0 0.0
    %2541 = vmatpush1.msra.mxu0 0.0
    %2542 = vmatprep.subr.mxu0 0.0
    %2543 = vmatpush1.msra.mxu0 0.0
    %2544 = vmatprep.subr.mxu0 0.0
    %2545 = vmatpush1.msra.mxu0 0.0
    %2546 = vmatprep.subr.mxu0 0.0
    %2547 = vmatpush1.msra.mxu0 0.0
    %2548 = vmatprep.subr.mxu0 0.0
    %2549 = vmatpush1.msra.mxu0 0.0
    %2550 = vmatprep.subr.mxu0 0.0
    %2551 = vmatpush1.msra.mxu0 0.0
    %2552 = vmatprep.subr.mxu0 0.0
    %2553 = vmatpush1.msra.mxu0 0.0
    %2554 = vmatprep.subr.mxu0 0.0
    %2555 = vmatpush1.msra.mxu0 0.0
    %2556 = vmatprep.subr.mxu0 0.0
    %2557 = vmatpush1.msra.mxu0 0.0
    %2558 = vmatprep.subr.mxu0 0.0
    %2559 = vmatpush1.msra.mxu0 0.0
    %2560 = vmatprep.subr.mxu0 0.0
    %2561 = vmatpush1.msra.mxu0 0.0
    %2562 = vmatprep.subr.mxu0 0.0
    %2563 = vmatpush1.msra.mxu0 0.0
    %2564 = vmatprep.subr.mxu0 0.0
    %2565 = vmatpush1.msra.mxu0 0.0
    %2566 = vmatprep.subr.mxu0 0.0
    %2567 = vmatpush1.msra.mxu0 0.0
    %2568 = vmatprep.subr.mxu0 0.0
    %2569 = vmatpush1.msra.mxu0 0.0
    %2570 = vmatprep.subr.mxu0 0.0
    %2571 = vmatpush1.msra.mxu0 0.0
    %2572 = vmatprep.subr.mxu0 0.0
    %2573 = vmatpush1.msra.mxu0 0.0
    %2574 = vmatprep.subr.mxu0 0.0
    %2575 = vmatpush1.msra.mxu0 0.0
    %2576 = vmatprep.subr.mxu0 0.0
    %2577 = vmatpush1.msra.mxu0 0.0
    %2578 = vmatprep.mubr.f32.mxu0 0.0
    %2579 = vmatmul.mubr.f32.gmra.mrb[0].mxu0 %v697
    %v2580 = vpop.f32.mrb[0].mxu0
    %v2581 = vadd.f32 0.0, %v2580
    %v2582 = vpop.f32.mrb[0].mxu0
    %2583 = vdwg.mxu0
    %v2584 = vsub.f32 %v2506, %v2581
    %v2585 = vmul.f32 %v2584, %v2584
    %v2587 = vsel %vm478, %v2585, 0
    %2589 = vmatprep.subr.mxu0 0.0
    %2590 = vmatpush1.msra.mxu0 %v2587
    %2591 = vmatprep.subr.mxu0 0.0
    %2592 = vmatpush1.msra.mxu0 0.0
    %2593 = vmatprep.subr.mxu0 0.0
    %2594 = vmatpush1.msra.mxu0 0.0
    %2595 = vmatprep.subr.mxu0 0.0
    %2596 = vmatpush1.msra.mxu0 0.0
    %2597 = vmatprep.subr.mxu0 0.0
    %2598 = vmatpush1.msra.mxu0 0.0
    %2599 = vmatprep.subr.mxu0 0.0
    %2600 = vmatpush1.msra.mxu0 0.0
    %2601 = vmatprep.subr.mxu0 0.0
    %2602 = vmatpush1.msra.mxu0 0.0
    %2603 = vmatprep.subr.mxu0 0.0
    %2604 = vmatpush1.msra.mxu0 0.0
    %2605 = vmatprep.subr.mxu0 0.0
    %2606 = vmatpush1.msra.mxu0 0.0
    %2607 = vmatprep.subr.mxu0 0.0
    %2608 = vmatpush1.msra.mxu0 0.0
    %2609 = vmatprep.subr.mxu0 0.0
    %2610 = vmatpush1.msra.mxu0 0.0
    %2611 = vmatprep.subr.mxu0 0.0
    %2612 = vmatpush1.msra.mxu0 0.0
    %2613 = vmatprep.subr.mxu0 0.0
    %2614 = vmatpush1.msra.mxu0 0.0
    %2615 = vmatprep.subr.mxu0 0.0
    %2616 = vmatpush1.msra.mxu0 0.0
    %2617 = vmatprep.subr.mxu0 0.0
    %2618 = vmatpush1.msra.mxu0 0.0
    %2619 = vmatprep.subr.mxu0 0.0
    %2620 = vmatpush1.msra.mxu0 0.0
    %2621 = vmatprep.subr.mxu0 0.0
    %2622 = vmatpush1.msra.mxu0 0.0
    %2623 = vmatprep.subr.mxu0 0.0
    %2624 = vmatpush1.msra.mxu0 0.0
    %2625 = vmatprep.subr.mxu0 0.0
    %2626 = vmatpush1.msra.mxu0 0.0
    %2627 = vmatprep.subr.mxu0 0.0
    %2628 = vmatpush1.msra.mxu0 0.0
    %2629 = vmatprep.subr.mxu0 0.0
    %2630 = vmatpush1.msra.mxu0 0.0
    %2631 = vmatprep.subr.mxu0 0.0
    %2632 = vmatpush1.msra.mxu0 0.0
    %2633 = vmatprep.subr.mxu0 0.0
    %2634 = vmatpush1.msra.mxu0 0.0
    %2635 = vmatprep.subr.mxu0 0.0
    %2636 = vmatpush1.msra.mxu0 0.0
    %2637 = vmatprep.subr.mxu0 0.0
    %2638 = vmatpush1.msra.mxu0 0.0
    %2639 = vmatprep.subr.mxu0 0.0
    %2640 = vmatpush1.msra.mxu0 0.0
    %2641 = vmatprep.subr.mxu0 0.0
    %2642 = vmatpush1.msra.mxu0 0.0
    %2643 = vmatprep.subr.mxu0 0.0
    %2644 = vmatpush1.msra.mxu0 0.0
    %2645 = vmatprep.subr.mxu0 0.0
    %2646 = vmatpush1.msra.mxu0 0.0
    %2647 = vmatprep.subr.mxu0 0.0
    %2648 = vmatpush1.msra.mxu0 0.0
    %2649 = vmatprep.subr.mxu0 0.0
    %2650 = vmatpush1.msra.mxu0 0.0
    %2651 = vmatprep.subr.mxu0 0.0
    %2652 = vmatpush1.msra.mxu0 0.0
    %2653 = vmatprep.mubr.f32.mxu0 0.0
    %2654 = vmatmul.mubr.f32.gmra.mrb[0].mxu0 %v697
    %v2655 = vpop.f32.mrb[0].mxu0
    %v2656 = vadd.f32 1e-05, %v2655
    %v2657 = vpop.f32.mrb[0].mxu0
    %2658 = vdwg.mxu0
    %v2659 = vrsqrt.pop %v2656
    %v2660 = vmul.f32 %v2584, %v2659
    %v2662 = vlaneseq
    %v2663 = vshrl.u32 %v2662, 7
    %v2664 = vsub.s32 0, %v2663
    %v2665 = vrot.slane %v2463, %v2664
    %v2667 = vmul.f32 %v2660, %v2665
    %v2669 = vlaneseq
    %v2670 = vshrl.u32 %v2669, 7
    %v2671 = vsub.s32 0, %v2670
    %v2672 = vrot.slane %v2464, %v2671
    %v2674 = vadd.f32 %v2667, %v2672
    %v2675 = vmax.f32 %v2674, 0.0
    %v2676 = vpack.c.bf16 %v2675, %v2675
    %v2677 = vpack.c.bf16 %v2456, %v2455
    %v2678 = vpack.c.bf16 %v2458, %v2457
    %v2679 = vpack.c.bf16 %v2460, %v2459
    %v2680 = vpack.c.bf16 %v2462, %v2461
    %v2682 = vsel %vm255, %v2676, 0
    %2684 = vmatprep.subr.bf16.mxu0 0
    %2685 = vmatpush1.bf16.msra.mxu0 %v2677
    %2686 = vmatprep.subr.bf16.mxu0 0
    %2687 = vmatpush1.bf16.msra.mxu0 %v2678
    %2688 = vmatprep.subr.bf16.mxu0 0
    %2689 = vmatpush1.bf16.msra.mxu0 %v2679
    %2690 = vmatprep.subr.bf16.mxu0 0
    %2691 = vmatpush1.bf16.msra.mxu0 %v2680
    %2692 = vmatprep.subr.bf16.mxu0 0
    %2693 = vmatpush1.bf16.msra.mxu0 0
    %2694 = vmatprep.subr.bf16.mxu0 0
    %2695 = vmatpush1.bf16.msra.mxu0 0
    %2696 = vmatprep.subr.bf16.mxu0 0
    %2697 = vmatpush1.bf16.msra.mxu0 0
    %2698 = vmatprep.subr.bf16.mxu0 0
    %2699 = vmatpush1.bf16.msra.mxu0 0
    %2700 = vmatprep.subr.bf16.mxu0 0
    %2701 = vmatpush1.bf16.msra.mxu0 0
    %2702 = vmatprep.subr.bf16.mxu0 0
    %2703 = vmatpush1.bf16.msra.mxu0 0
    %2704 = vmatprep.subr.bf16.mxu0 0
    %2705 = vmatpush1.bf16.msra.mxu0 0
    %2706 = vmatprep.subr.bf16.mxu0 0
    %2707 = vmatpush1.bf16.msra.mxu0 0
    %2708 = vmatprep.subr.bf16.mxu0 0
    %2709 = vmatpush1.bf16.msra.mxu0 0
    %2710 = vmatprep.subr.bf16.mxu0 0
    %2711 = vmatpush1.bf16.msra.mxu0 0
    %2712 = vmatprep.subr.bf16.mxu0 0
    %2713 = vmatpush1.bf16.msra.mxu0 0
    %2714 = vmatprep.subr.bf16.mxu0 0
    %2715 = vmatpush1.bf16.msra.mxu0 0
    %2716 = vmatprep.mubr.bf16.mxu0 0
    %2717 = vmatmul.mubr.bf16.gmra.mrb[0].mxu0 %v2682
    %v2718 = vpop.f32.mrb[0].mxu0
    %v2719 = vadd.f32 0.0, %v2718
    %v2720 = vpop.f32.mrb[0].mxu0
    %v2721 = vpop.f32.mrb[0].mxu0
    %v2722 = vpop.f32.mrb[0].mxu0
    %2723 = vdwg.mxu0
    %v2725 = vsel %vm478, %v2719, 0
    %2727 = vmatprep.subr.mxu0 0.0
    %2728 = vmatpush1.msra.mxu0 %v2725
    %2729 = vmatprep.subr.mxu0 0.0
    %2730 = vmatpush1.msra.mxu0 0.0
    %2731 = vmatprep.subr.mxu0 0.0
    %2732 = vmatpush1.msra.mxu0 0.0
    %2733 = vmatprep.subr.mxu0 0.0
    %2734 = vmatpush1.msra.mxu0 0.0
    %2735 = vmatprep.subr.mxu0 0.0
    %2736 = vmatpush1.msra.mxu0 0.0
    %2737 = vmatprep.subr.mxu0 0.0
    %2738 = vmatpush1.msra.mxu0 0.0
    %2739 = vmatprep.subr.mxu0 0.0
    %2740 = vmatpush1.msra.mxu0 0.0
    %2741 = vmatprep.subr.mxu0 0.0
    %2742 = vmatpush1.msra.mxu0 0.0
    %2743 = vmatprep.subr.mxu0 0.0
    %2744 = vmatpush1.msra.mxu0 0.0
    %2745 = vmatprep.subr.mxu0 0.0
    %2746 = vmatpush1.msra.mxu0 0.0
    %2747 = vmatprep.subr.mxu0 0.0
    %2748 = vmatpush1.msra.mxu0 0.0
    %2749 = vmatprep.subr.mxu0 0.0
    %2750 = vmatpush1.msra.mxu0 0.0
    %2751 = vmatprep.subr.mxu0 0.0
    %2752 = vmatpush1.msra.mxu0 0.0
    %2753 = vmatprep.subr.mxu0 0.0
    %2754 = vmatpush1.msra.mxu0 0.0
    %2755 = vmatprep.subr.mxu0 0.0
    %2756 = vmatpush1.msra.mxu0 0.0
    %2757 = vmatprep.subr.mxu0 0.0
    %2758 = vmatpush1.msra.mxu0 0.0
    %2759 = vmatprep.subr.mxu0 0.0
    %2760 = vmatpush1.msra.mxu0 0.0
    %2761 = vmatprep.subr.mxu0 0.0
    %2762 = vmatpush1.msra.mxu0 0.0
    %2763 = vmatprep.subr.mxu0 0.0
    %2764 = vmatpush1.msra.mxu0 0.0
    %2765 = vmatprep.subr.mxu0 0.0
    %2766 = vmatpush1.msra.mxu0 0.0
    %2767 = vmatprep.subr.mxu0 0.0
    %2768 = vmatpush1.msra.mxu0 0.0
    %2769 = vmatprep.subr.mxu0 0.0
    %2770 = vmatpush1.msra.mxu0 0.0
    %2771 = vmatprep.subr.mxu0 0.0
    %2772 = vmatpush1.msra.mxu0 0.0
    %2773 = vmatprep.subr.mxu0 0.0
    %2774 = vmatpush1.msra.mxu0 0.0
    %2775 = vmatprep.subr.mxu0 0.0
    %2776 = vmatpush1.msra.mxu0 0.0
    %2777 = vmatprep.subr.mxu0 0.0
    %2778 = vmatpush1.msra.mxu0 0.0
    %2779 = vmatprep.subr.mxu0 0.0
    %2780 = vmatpush1.msra.mxu0 0.0
    %2781 = vmatprep.subr.mxu0 0.0
    %2782 = vmatpush1.msra.mxu0 0.0
    %2783 = vmatprep.subr.mxu0 0.0
    %2784 = vmatpush1.msra.mxu0 0.0
    %2785 = vmatprep.subr.mxu0 0.0
    %2786 = vmatpush1.msra.mxu0 0.0
    %2787 = vmatprep.subr.mxu0 0.0
    %2788 = vmatpush1.msra.mxu0 0.0
    %2789 = vmatprep.subr.mxu0 0.0
    %2790 = vmatpush1.msra.mxu0 0.0
    %2791 = vmatprep.mubr.f32.mxu0 0.0
    %2792 = vmatmul.mubr.f32.gmra.mrb[0].mxu0 %v697
    %v2793 = vpop.f32.mrb[0].mxu0
    %v2794 = vadd.f32 0.0, %v2793
    %v2795 = vpop.f32.mrb[0].mxu0
    %2796 = vdwg.mxu0
    %v2797 = vsub.f32 %v2719, %v2794
    %v2798 = vmul.f32 %v2797, %v2797
    %v2800 = vsel %vm478, %v2798, 0
    %2802 = vmatprep.subr.mxu0 0.0
    %2803 = vmatpush1.msra.mxu0 %v2800
    %2804 = vmatprep.subr.mxu0 0.0
    %2805 = vmatpush1.msra.mxu0 0.0
    %2806 = vmatprep.subr.mxu0 0.0
    %2807 = vmatpush1.msra.mxu0 0.0
    %2808 = vmatprep.subr.mxu0 0.0
    %2809 = vmatpush1.msra.mxu0 0.0
    %2810 = vmatprep.subr.mxu0 0.0
    %2811 = vmatpush1.msra.mxu0 0.0
    %2812 = vmatprep.subr.mxu0 0.0
    %2813 = vmatpush1.msra.mxu0 0.0
    %2814 = vmatprep.subr.mxu0 0.0
    %2815 = vmatpush1.msra.mxu0 0.0
    %2816 = vmatprep.subr.mxu0 0.0
    %2817 = vmatpush1.msra.mxu0 0.0
    %2818 = vmatprep.subr.mxu0 0.0
    %2819 = vmatpush1.msra.mxu0 0.0
    %2820 = vmatprep.subr.mxu0 0.0
    %2821 = vmatpush1.msra.mxu0 0.0
    %2822 = vmatprep.subr.mxu0 0.0
    %2823 = vmatpush1.msra.mxu0 0.0
    %2824 = vmatprep.subr.mxu0 0.0
    %2825 = vmatpush1.msra.mxu0 0.0
    %2826 = vmatprep.subr.mxu0 0.0
    %2827 = vmatpush1.msra.mxu0 0.0
    %2828 = vmatprep.subr.mxu0 0.0
    %2829 = vmatpush1.msra.mxu0 0.0
    %2830 = vmatprep.subr.mxu0 0.0
    %2831 = vmatpush1.msra.mxu0 0.0
    %2832 = vmatprep.subr.mxu0 0.0
    %2833 = vmatpush1.msra.mxu0 0.0
    %2834 = vmatprep.subr.mxu0 0.0
    %2835 = vmatpush1.msra.mxu0 0.0
    %2836 = vmatprep.subr.mxu0 0.0
    %2837 = vmatpush1.msra.mxu0 0.0
    %2838 = vmatprep.subr.mxu0 0.0
    %2839 = vmatpush1.msra.mxu0 0.0
    %2840 = vmatprep.subr.mxu0 0.0
    %2841 = vmatpush1.msra.mxu0 0.0
    %2842 = vmatprep.subr.mxu0 0.0
    %2843 = vmatpush1.msra.mxu0 0.0
    %2844 = vmatprep.subr.mxu0 0.0
    %2845 = vmatpush1.msra.mxu0 0.0
    %2846 = vmatprep.subr.mxu0 0.0
    %2847 = vmatpush1.msra.mxu0 0.0
    %2848 = vmatprep.subr.mxu0 0.0
    %2849 = vmatpush1.msra.mxu0 0.0
    %2850 = vmatprep.subr.mxu0 0.0
    %2851 = vmatpush1.msra.mxu0 0.0
    %2852 = vmatprep.subr.mxu0 0.0
    %2853 = vmatpush1.msra.mxu0 0.0
    %2854 = vmatprep.subr.mxu0 0.0
    %2855 = vmatpush1.msra.mxu0 0.0
    %2856 = vmatprep.subr.mxu0 0.0
    %2857 = vmatpush1.msra.mxu0 0.0
    %2858 = vmatprep.subr.mxu0 0.0
    %2859 = vmatpush1.msra.mxu0 0.0
    %2860 = vmatprep.subr.mxu0 0.0
    %2861 = vmatpush1.msra.mxu0 0.0
    %2862 = vmatprep.subr.mxu0 0.0
    %2863 = vmatpush1.msra.mxu0 0.0
    %2864 = vmatprep.subr.mxu0 0.0
    %2865 = vmatpush1.msra.mxu0 0.0
    %2866 = vmatprep.mubr.f32.mxu0 0.0
    %2867 = vmatmul.mubr.f32.gmra.mrb[0].mxu0 %v697
    %v2868 = vpop.f32.mrb[0].mxu0
    %v2869 = vadd.f32 1e-05, %v2868
    %v2870 = vpop.f32.mrb[0].mxu0
    %2871 = vdwg.mxu0
    %v2872 = vrsqrt.pop %v2869
    %v2873 = vmul.f32 %v2797, %v2872
    %v2874 = vpack.c.bf16 %v2452, %v2452
    %v2876 = vsel %vm2467, %v2874, 0
    %2878 = vmatprep.subr.bf16.mxu0 0
    %2879 = vmatpush1.bf16.msra.mxu0 %v2466
    %2880 = vmatprep.subr.bf16.mxu0 0
    %2881 = vmatpush1.bf16.msra.mxu0 0
    %2882 = vmatprep.subr.bf16.mxu0 0
    %2883 = vmatpush1.bf16.msra.mxu0 0
    %2884 = vmatprep.subr.bf16.mxu0 0
    %2885 = vmatpush1.bf16.msra.mxu0 0
    %2886 = vmatprep.subr.bf16.mxu0 0
    %2887 = vmatpush1.bf16.msra.mxu0 0
    %2888 = vmatprep.subr.bf16.mxu0 0
    %2889 = vmatpush1.bf16.msra.mxu0 0
    %2890 = vmatprep.subr.bf16.mxu0 0
    %2891 = vmatpush1.bf16.msra.mxu0 0
    %2892 = vmatprep.subr.bf16.mxu0 0
    %2893 = vmatpush1.bf16.msra.mxu0 0
    %2894 = vmatprep.subr.bf16.mxu0 0
    %2895 = vmatpush1.bf16.msra.mxu0 0
    %2896 = vmatprep.subr.bf16.mxu0 0
    %2897 = vmatpush1.bf16.msra.mxu0 0
    %2898 = vmatprep.subr.bf16.mxu0 0
    %2899 = vmatpush1.bf16.msra.mxu0 0
    %2900 = vmatprep.subr.bf16.mxu0 0
    %2901 = vmatpush1.bf16.msra.mxu0 0
    %2902 = vmatprep.subr.bf16.mxu0 0
    %2903 = vmatpush1.bf16.msra.mxu0 0
    %2904 = vmatprep.subr.bf16.mxu0 0
    %2905 = vmatpush1.bf16.msra.mxu0 0
    %2906 = vmatprep.subr.bf16.mxu0 0
    %2907 = vmatpush1.bf16.msra.mxu0 0
    %2908 = vmatprep.subr.bf16.mxu0 0
    %2909 = vmatpush1.bf16.msra.mxu0 0
    %2910 = vmatprep.mubr.bf16.mxu0 0
    %2911 = vmatmul.mubr.bf16.gmra.mrb[0].mxu0 %v2876
    %v2912 = vpop.f32.mrb[0].mxu0
    %v2913 = vadd.f32 0.0, %v2912
    %v2914 = vpop.f32.mrb[0].mxu0
    %v2915 = vpop.f32.mrb[0].mxu0
    %v2916 = vpop.f32.mrb[0].mxu0
    %2917 = vdwg.mxu0
    %v2919 = vsel %vm1331, %v2913, 0
    %2921 = vmatprep.subr.mxu0 0.0
    %2922 = vmatpush1.msra.mxu0 %v2919
    %2923 = vmatprep.subr.mxu0 0.0
    %2924 = vmatpush1.msra.mxu0 0.0
    %2925 = vmatprep.subr.mxu0 0.0
    %2926 = vmatpush1.msra.mxu0 0.0
    %2927 = vmatprep.subr.mxu0 0.0
    %2928 = vmatpush1.msra.mxu0 0.0
    %2929 = vmatprep.subr.mxu0 0.0
    %2930 = vmatpush1.msra.mxu0 0.0
    %2931 = vmatprep.subr.mxu0 0.0
    %2932 = vmatpush1.msra.mxu0 0.0
    %2933 = vmatprep.subr.mxu0 0.0
    %2934 = vmatpush1.msra.mxu0 0.0
    %2935 = vmatprep.subr.mxu0 0.0
    %2936 = vmatpush1.msra.mxu0 0.0
    %2937 = vmatprep.subr.mxu0 0.0
    %2938 = vmatpush1.msra.mxu0 0.0
    %2939 = vmatprep.subr.mxu0 0.0
    %2940 = vmatpush1.msra.mxu0 0.0
    %2941 = vmatprep.subr.mxu0 0.0
    %2942 = vmatpush1.msra.mxu0 0.0
    %2943 = vmatprep.subr.mxu0 0.0
    %2944 = vmatpush1.msra.mxu0 0.0
    %2945 = vmatprep.subr.mxu0 0.0
    %2946 = vmatpush1.msra.mxu0 0.0
    %2947 = vmatprep.subr.mxu0 0.0
    %2948 = vmatpush1.msra.mxu0 0.0
    %2949 = vmatprep.subr.mxu0 0.0
    %2950 = vmatpush1.msra.mxu0 0.0
    %2951 = vmatprep.subr.mxu0 0.0
    %2952 = vmatpush1.msra.mxu0 0.0
    %2953 = vmatprep.subr.mxu0 0.0
    %2954 = vmatpush1.msra.mxu0 0.0
    %2955 = vmatprep.subr.mxu0 0.0
    %2956 = vmatpush1.msra.mxu0 0.0
    %2957 = vmatprep.subr.mxu0 0.0
    %2958 = vmatpush1.msra.mxu0 0.0
    %2959 = vmatprep.subr.mxu0 0.0
    %2960 = vmatpush1.msra.mxu0 0.0
    %2961 = vmatprep.subr.mxu0 0.0
    %2962 = vmatpush1.msra.mxu0 0.0
    %2963 = vmatprep.subr.mxu0 0.0
    %2964 = vmatpush1.msra.mxu0 0.0
    %2965 = vmatprep.subr.mxu0 0.0
    %2966 = vmatpush1.msra.mxu0 0.0
    %2967 = vmatprep.subr.mxu0 0.0
    %2968 = vmatpush1.msra.mxu0 0.0
    %2969 = vmatprep.subr.mxu0 0.0
    %2970 = vmatpush1.msra.mxu0 0.0
    %2971 = vmatprep.subr.mxu0 0.0
    %2972 = vmatpush1.msra.mxu0 0.0
    %2973 = vmatprep.subr.mxu0 0.0
    %2974 = vmatpush1.msra.mxu0 0.0
    %2975 = vmatprep.subr.mxu0 0.0
    %2976 = vmatpush1.msra.mxu0 0.0
    %2977 = vmatprep.subr.mxu0 0.0
    %2978 = vmatpush1.msra.mxu0 0.0
    %2979 = vmatprep.subr.mxu0 0.0
    %2980 = vmatpush1.msra.mxu0 0.0
    %2981 = vmatprep.subr.mxu0 0.0
    %2982 = vmatpush1.msra.mxu0 0.0
    %2983 = vmatprep.subr.mxu0 0.0
    %2984 = vmatpush1.msra.mxu0 0.0
    %2985 = vmatprep.mubr.f32.mxu0 0.0
    %2986 = vmatmul.mubr.f32.gmra.mrb[0].mxu0 %v1329
    %v2987 = vpop.f32.mrb[0].mxu0
    %v2988 = vadd.f32 0.0, %v2987
    %v2989 = vpop.f32.mrb[0].mxu0
    %2990 = vdwg.mxu0
    %v2991 = vsub.f32 %v2913, %v2988
    %v2992 = vmul.f32 %v2991, %v2991
    %v2994 = vsel %vm1331, %v2992, 0
    %2996 = vmatprep.subr.mxu0 0.0
    %2997 = vmatpush1.msra.mxu0 %v2994
    %2998 = vmatprep.subr.mxu0 0.0
    %2999 = vmatpush1.msra.mxu0 0.0
    %3000 = vmatprep.subr.mxu0 0.0
    %3001 = vmatpush1.msra.mxu0 0.0
    %3002 = vmatprep.subr.mxu0 0.0
    %3003 = vmatpush1.msra.mxu0 0.0
    %3004 = vmatprep.subr.mxu0 0.0
    %3005 = vmatpush1.msra.mxu0 0.0
    %3006 = vmatprep.subr.mxu0 0.0
    %3007 = vmatpush1.msra.mxu0 0.0
    %3008 = vmatprep.subr.mxu0 0.0
    %3009 = vmatpush1.msra.mxu0 0.0
    %3010 = vmatprep.subr.mxu0 0.0
    %3011 = vmatpush1.msra.mxu0 0.0
    %3012 = vmatprep.subr.mxu0 0.0
    %3013 = vmatpush1.msra.mxu0 0.0
    %3014 = vmatprep.subr.mxu0 0.0
    %3015 = vmatpush1.msra.mxu0 0.0
    %3016 = vmatprep.subr.mxu0 0.0
    %3017 = vmatpush1.msra.mxu0 0.0
    %3018 = vmatprep.subr.mxu0 0.0
    %3019 = vmatpush1.msra.mxu0 0.0
    %3020 = vmatprep.subr.mxu0 0.0
    %3021 = vmatpush1.msra.mxu0 0.0
    %3022 = vmatprep.subr.mxu0 0.0
    %3023 = vmatpush1.msra.mxu0 0.0
    %3024 = vmatprep.subr.mxu0 0.0
    %3025 = vmatpush1.msra.mxu0 0.0
    %3026 = vmatprep.subr.mxu0 0.0
    %3027 = vmatpush1.msra.mxu0 0.0
    %3028 = vmatprep.subr.mxu0 0.0
    %3029 = vmatpush1.msra.mxu0 0.0
    %3030 = vmatprep.subr.mxu0 0.0
    %3031 = vmatpush1.msra.mxu0 0.0
    %3032 = vmatprep.subr.mxu0 0.0
    %3033 = vmatpush1.msra.mxu0 0.0
    %3034 = vmatprep.subr.mxu0 0.0
    %3035 = vmatpush1.msra.mxu0 0.0
    %3036 = vmatprep.subr.mxu0 0.0
    %3037 = vmatpush1.msra.mxu0 0.0
    %3038 = vmatprep.subr.mxu0 0.0
    %3039 = vmatpush1.msra.mxu0 0.0
    %3040 = vmatprep.subr.mxu0 0.0
    %3041 = vmatpush1.msra.mxu0 0.0
    %3042 = vmatprep.subr.mxu0 0.0
    %3043 = vmatpush1.msra.mxu0 0.0
    %3044 = vmatprep.subr.mxu0 0.0
    %3045 = vmatpush1.msra.mxu0 0.0
    %3046 = vmatprep.subr.mxu0 0.0
    %3047 = vmatpush1.msra.mxu0 0.0
    %3048 = vmatprep.subr.mxu0 0.0
    %3049 = vmatpush1.msra.mxu0 0.0
    %3050 = vmatprep.subr.mxu0 0.0
    %3051 = vmatpush1.msra.mxu0 0.0
    %3052 = vmatprep.subr.mxu0 0.0
    %3053 = vmatpush1.msra.mxu0 0.0
    %3054 = vmatprep.subr.mxu0 0.0
    %3055 = vmatpush1.msra.mxu0 0.0
    %3056 = vmatprep.subr.mxu0 0.0
    %3057 = vmatpush1.msra.mxu0 0.0
    %3058 = vmatprep.subr.mxu0 0.0
    %3059 = vmatpush1.msra.mxu0 0.0
    %3060 = vmatprep.mubr.f32.mxu0 0.0
    %3061 = vmatmul.mubr.f32.gmra.mrb[0].mxu0 %v1329
    %v3062 = vpop.f32.mrb[0].mxu0
    %v3063 = vadd.f32 1e-05, %v3062
    %v3064 = vpop.f32.mrb[0].mxu0
    %3065 = vdwg.mxu0
    %v3066 = vrsqrt.pop %v3063
    %v3067 = vmul.f32 %v2991, %v3066
    %v3068 = vmul.f32 %v3067, %v2665
    %v3069 = vadd.f32 %v3068, %v2672
    %v3070 = vmax.f32 %v3069, 0.0
    %v3071 = vpack.c.bf16 %v3070, %v3070
    %v3073 = vsel %vm255, %v3071, 0
    %3075 = vmatprep.subr.bf16.mxu0 0
    %3076 = vmatpush1.bf16.msra.mxu0 %v2677
    %3077 = vmatprep.subr.bf16.mxu0 0
    %3078 = vmatpush1.bf16.msra.mxu0 %v2678
    %3079 = vmatprep.subr.bf16.mxu0 0
    %3080 = vmatpush1.bf16.msra.mxu0 %v2679
    %3081 = vmatprep.subr.bf16.mxu0 0
    %3082 = vmatpush1.bf16.msra.mxu0 %v2680
    %3083 = vmatprep.subr.bf16.mxu0 0
    %3084 = vmatpush1.bf16.msra.mxu0 0
    %3085 = vmatprep.subr.bf16.mxu0 0
    %3086 = vmatpush1.bf16.msra.mxu0 0
    %3087 = vmatprep.subr.bf16.mxu0 0
    %3088 = vmatpush1.bf16.msra.mxu0 0
    %3089 = vmatprep.subr.bf16.mxu0 0
    %3090 = vmatpush1.bf16.msra.mxu0 0
    %3091 = vmatprep.subr.bf16.mxu0 0
    %3092 = vmatpush1.bf16.msra.mxu0 0
    %3093 = vmatprep.subr.bf16.mxu0 0
    %3094 = vmatpush1.bf16.msra.mxu0 0
    %3095 = vmatprep.subr.bf16.mxu0 0
    %3096 = vmatpush1.bf16.msra.mxu0 0
    %3097 = vmatprep.subr.bf16.mxu0 0
    %3098 = vmatpush1.bf16.msra.mxu0 0
    %3099 = vmatprep.subr.bf16.mxu0 0
    %3100 = vmatpush1.bf16.msra.mxu0 0
    %3101 = vmatprep.subr.bf16.mxu0 0
    %3102 = vmatpush1.bf16.msra.mxu0 0
    %3103 = vmatprep.subr.bf16.mxu0 0
    %3104 = vmatpush1.bf16.msra.mxu0 0
    %3105 = vmatprep.subr.bf16.mxu0 0
    %3106 = vmatpush1.bf16.msra.mxu0 0
    %3107 = vmatprep.mubr.bf16.mxu0 0
    %3108 = vmatmul.mubr.bf16.gmra.mrb[0].mxu0 %v3073
    %v3109 = vpop.f32.mrb[0].mxu0
    %v3110 = vadd.f32 0.0, %v3109
    %v3111 = vpop.f32.mrb[0].mxu0
    %v3112 = vpop.f32.mrb[0].mxu0
    %v3113 = vpop.f32.mrb[0].mxu0
    %3114 = vdwg.mxu0
    %v3116 = vsel %vm1331, %v3110, 0
    %3118 = vmatprep.subr.mxu0 0.0
    %3119 = vmatpush1.msra.mxu0 %v3116
    %3120 = vmatprep.subr.mxu0 0.0
    %3121 = vmatpush1.msra.mxu0 0.0
    %3122 = vmatprep.subr.mxu0 0.0
    %3123 = vmatpush1.msra.mxu0 0.0
    %3124 = vmatprep.subr.mxu0 0.0
    %3125 = vmatpush1.msra.mxu0 0.0
    %3126 = vmatprep.subr.mxu0 0.0
    %3127 = vmatpush1.msra.mxu0 0.0
    %3128 = vmatprep.subr.mxu0 0.0
    %3129 = vmatpush1.msra.mxu0 0.0
    %3130 = vmatprep.subr.mxu0 0.0
    %3131 = vmatpush1.msra.mxu0 0.0
    %3132 = vmatprep.subr.mxu0 0.0
    %3133 = vmatpush1.msra.mxu0 0.0
    %3134 = vmatprep.subr.mxu0 0.0
    %3135 = vmatpush1.msra.mxu0 0.0
    %3136 = vmatprep.subr.mxu0 0.0
    %3137 = vmatpush1.msra.mxu0 0.0
    %3138 = vmatprep.subr.mxu0 0.0
    %3139 = vmatpush1.msra.mxu0 0.0
    %3140 = vmatprep.subr.mxu0 0.0
    %3141 = vmatpush1.msra.mxu0 0.0
    %3142 = vmatprep.subr.mxu0 0.0
    %3143 = vmatpush1.msra.mxu0 0.0
    %3144 = vmatprep.subr.mxu0 0.0
    %3145 = vmatpush1.msra.mxu0 0.0
    %3146 = vmatprep.subr.mxu0 0.0
    %3147 = vmatpush1.msra.mxu0 0.0
    %3148 = vmatprep.subr.mxu0 0.0
    %3149 = vmatpush1.msra.mxu0 0.0
    %3150 = vmatprep.subr.mxu0 0.0
    %3151 = vmatpush1.msra.mxu0 0.0
    %3152 = vmatprep.subr.mxu0 0.0
    %3153 = vmatpush1.msra.mxu0 0.0
    %3154 = vmatprep.subr.mxu0 0.0
    %3155 = vmatpush1.msra.mxu0 0.0
    %3156 = vmatprep.subr.mxu0 0.0
    %3157 = vmatpush1.msra.mxu0 0.0
    %3158 = vmatprep.subr.mxu0 0.0
    %3159 = vmatpush1.msra.mxu0 0.0
    %3160 = vmatprep.subr.mxu0 0.0
    %3161 = vmatpush1.msra.mxu0 0.0
    %3162 = vmatprep.subr.mxu0 0.0
    %3163 = vmatpush1.msra.mxu0 0.0
    %3164 = vmatprep.subr.mxu0 0.0
    %3165 = vmatpush1.msra.mxu0 0.0
    %3166 = vmatprep.subr.mxu0 0.0
    %3167 = vmatpush1.msra.mxu0 0.0
    %3168 = vmatprep.subr.mxu0 0.0
    %3169 = vmatpush1.msra.mxu0 0.0
    %3170 = vmatprep.subr.mxu0 0.0
    %3171 = vmatpush1.msra.mxu0 0.0
    %3172 = vmatprep.subr.mxu0 0.0
    %3173 = vmatpush1.msra.mxu0 0.0
    %3174 = vmatprep.subr.mxu0 0.0
    %3175 = vmatpush1.msra.mxu0 0.0
    %3176 = vmatprep.subr.mxu0 0.0
    %3177 = vmatpush1.msra.mxu0 0.0
    %3178 = vmatprep.subr.mxu0 0.0
    %3179 = vmatpush1.msra.mxu0 0.0
    %3180 = vmatprep.subr.mxu0 0.0
    %3181 = vmatpush1.msra.mxu0 0.0
    %3182 = vmatprep.mubr.f32.mxu0 0.0
    %3183 = vmatmul.mubr.f32.gmra.mrb[0].mxu0 %v1329
    %v3184 = vpop.f32.mrb[0].mxu0
    %v3185 = vadd.f32 0.0, %v3184
    %v3186 = vpop.f32.mrb[0].mxu0
    %3187 = vdwg.mxu0
    %v3188 = vsub.f32 %v3110, %v3185
    %v3189 = vmul.f32 %v3188, %v3188
    %v3191 = vsel %vm1331, %v3189, 0
    %3193 = vmatprep.subr.mxu0 0.0
    %3194 = vmatpush1.msra.mxu0 %v3191
    %3195 = vmatprep.subr.mxu0 0.0
    %3196 = vmatpush1.msra.mxu0 0.0
    %3197 = vmatprep.subr.mxu0 0.0
    %3198 = vmatpush1.msra.mxu0 0.0
    %3199 = vmatprep.subr.mxu0 0.0
    %3200 = vmatpush1.msra.mxu0 0.0
    %3201 = vmatprep.subr.mxu0 0.0
    %3202 = vmatpush1.msra.mxu0 0.0
    %3203 = vmatprep.subr.mxu0 0.0
    %3204 = vmatpush1.msra.mxu0 0.0
    %3205 = vmatprep.subr.mxu0 0.0
    %3206 = vmatpush1.msra.mxu0 0.0
    %3207 = vmatprep.subr.mxu0 0.0
    %3208 = vmatpush1.msra.mxu0 0.0
    %3209 = vmatprep.subr.mxu0 0.0
    %3210 = vmatpush1.msra.mxu0 0.0
    %3211 = vmatprep.subr.mxu0 0.0
    %3212 = vmatpush1.msra.mxu0 0.0
    %3213 = vmatprep.subr.mxu0 0.0
    %3214 = vmatpush1.msra.mxu0 0.0
    %3215 = vmatprep.subr.mxu0 0.0
    %3216 = vmatpush1.msra.mxu0 0.0
    %3217 = vmatprep.subr.mxu0 0.0
    %3218 = vmatpush1.msra.mxu0 0.0
    %3219 = vmatprep.subr.mxu0 0.0
    %3220 = vmatpush1.msra.mxu0 0.0
    %3221 = vmatprep.subr.mxu0 0.0
    %3222 = vmatpush1.msra.mxu0 0.0
    %3223 = vmatprep.subr.mxu0 0.0
    %3224 = vmatpush1.msra.mxu0 0.0
    %3225 = vmatprep.subr.mxu0 0.0
    %3226 = vmatpush1.msra.mxu0 0.0
    %3227 = vmatprep.subr.mxu0 0.0
    %3228 = vmatpush1.msra.mxu0 0.0
    %3229 = vmatprep.subr.mxu0 0.0
    %3230 = vmatpush1.msra.mxu0 0.0
    %3231 = vmatprep.subr.mxu0 0.0
    %3232 = vmatpush1.msra.mxu0 0.0
    %3233 = vmatprep.subr.mxu0 0.0
    %3234 = vmatpush1.msra.mxu0 0.0
    %3235 = vmatprep.subr.mxu0 0.0
    %3236 = vmatpush1.msra.mxu0 0.0
    %3237 = vmatprep.subr.mxu0 0.0
    %3238 = vmatpush1.msra.mxu0 0.0
    %3239 = vmatprep.subr.mxu0 0.0
    %3240 = vmatpush1.msra.mxu0 0.0
    %3241 = vmatprep.subr.mxu0 0.0
    %3242 = vmatpush1.msra.mxu0 0.0
    %3243 = vmatprep.subr.mxu0 0.0
    %3244 = vmatpush1.msra.mxu0 0.0
    %3245 = vmatprep.subr.mxu0 0.0
    %3246 = vmatpush1.msra.mxu0 0.0
    %3247 = vmatprep.subr.mxu0 0.0
    %3248 = vmatpush1.msra.mxu0 0.0
    %3249 = vmatprep.subr.mxu0 0.0
    %3250 = vmatpush1.msra.mxu0 0.0
    %3251 = vmatprep.subr.mxu0 0.0
    %3252 = vmatpush1.msra.mxu0 0.0
    %3253 = vmatprep.subr.mxu0 0.0
    %3254 = vmatpush1.msra.mxu0 0.0
    %3255 = vmatprep.subr.mxu0 0.0
    %3256 = vmatpush1.msra.mxu0 0.0
    %3257 = vmatprep.mubr.f32.mxu0 0.0
    %3258 = vmatmul.mubr.f32.gmra.mrb[0].mxu0 %v1329
    %v3259 = vpop.f32.mrb[0].mxu0
    %v3260 = vadd.f32 1e-05, %v3259
    %v3261 = vpop.f32.mrb[0].mxu0
    %3262 = vdwg.mxu0
    %v3263 = vrsqrt.pop %v3260
    %v3264 = vmul.f32 %v3188, %v3263
    %v3265 = vld [vmem:[%s25] sm:$0xff]
    %v3266 = vld [vmem:[%s25 + $0x8] sm:$0xff]
    %v3267 = vld [vmem:[%s25 + $0x10] sm:$0xff]
    %v3268 = vld [vmem:[%s25 + $0x18] sm:$0xff]
    %v3269 = vld [vmem:[%s25 + $0x20] sm:$0xff]
    %v3270 = vld [vmem:[%s25 + $0x28] sm:$0xff]
    %v3271 = vld [vmem:[%s27] sm:$0xff]
    %v3272 = vld [vmem:[%s27 + $0x8] sm:$0xff]
    %v3273 = vld [vmem:[%s27 + $0x10] sm:$0xff]
    %v3274 = vld [vmem:[%s29] sm:$0xff]
    %v3275 = vld [vmem:[%s29 + $0x8] sm:$0xff]
    %v3276 = vld [vmem:[%s29 + $0x10] sm:$0xff]
    %v3277 = vld [vmem:[%s29 + $0x18] sm:$0xff]
    %v3278 = vld [vmem:[%s29 + $0x20] sm:$0xff]
    %v3279 = vld [vmem:[%s29 + $0x28] sm:$0xff]
    %v3280 = vld [vmem:[%s29 + $0x30] sm:$0xff]
    %v3281 = vld [vmem:[%s29 + $0x38] sm:$0xff]
    %v3282 = vld [vmem:[%s29 + $0x40] sm:$0xff]
    %v3283 = vld [vmem:[%s29 + $0x48] sm:$0xff]
    %v3284 = vld [vmem:[%s29 + $0x50] sm:$0xff]
    %v3285 = vld [vmem:[%s29 + $0x58] sm:$0xff]
    %v3286 = vld [vmem:[%s29 + $0x60] sm:$0xff]
    %v3287 = vld [vmem:[%s29 + $0x68] sm:$0xff]
    %v3288 = vld [vmem:[%s29 + $0x70] sm:$0xff]
    %v3289 = vld [vmem:[%s29 + $0x78] sm:$0xff]
    %v3290 = vld [vmem:[%s29 + $0x80] sm:$0xff]
    %v3291 = vld [vmem:[%s29 + $0x88] sm:$0xff]
    %v3292 = vld [vmem:[%s29 + $0x90] sm:$0xff]
    %v3293 = vld [vmem:[%s29 + $0x98] sm:$0xff]
    %v3294 = vld [vmem:[%s29 + $0xa0] sm:$0xff]
    %v3295 = vld [vmem:[%s29 + $0xa8] sm:$0xff]
    %v3296 = vld [vmem:[%s29 + $0xb0] sm:$0xff]
    %v3297 = vld [vmem:[%s29 + $0xb8] sm:$0xff]
    %v3298 = vld [vmem:[%s31] sm:$0xff]
    %v3299 = vld [vmem:[%s31 + $0x8] sm:$0xff]
    %v3300 = vld [vmem:[%s31 + $0x10] sm:$0xff]
    %v3301 = vld [vmem:[%s31 + $0x18] sm:$0xff]
    %v3302 = vld [vmem:[%s33] sm:$0xff]
    %v3303 = vld [vmem:[%s33 + $0x8] sm:$0xff]
    %v3304 = vld [vmem:[%s33 + $0x10] sm:$0xff]
    %v3305 = vld [vmem:[%s33 + $0x18] sm:$0xff]
    %v3306 = vld [vmem:[%s33 + $0x20] sm:$0xff]
    %v3307 = vld [vmem:[%s33 + $0x28] sm:$0xff]
    %v3308 = vld [vmem:[%s33 + $0x30] sm:$0xff]
    %v3309 = vld [vmem:[%s33 + $0x38] sm:$0xff]
    %v3310 = vpack.c.bf16 %v3267, %v3265
    %v3311 = vpack.c.bf16 %v3268, %v3266
    %v3312 = vpack.c.bf16 %v3269, %v3269
    %v3313 = vpack.c.bf16 %v3270, %v3270
    %v3314 = vpack.c.bf16 %v3275, %v3274
    %v3315 = vpack.c.bf16 %v3277, %v3276
    %v3316 = vpack.c.bf16 %v3279, %v3278
    %v3317 = vpack.c.bf16 %v3281, %v3280
    %v3318 = vpack.c.bf16 %v3283, %v3282
    %v3319 = vpack.c.bf16 %v3285, %v3284
    %v3320 = vpack.c.bf16 %v3287, %v3286
    %v3321 = vpack.c.bf16 %v3289, %v3288
    %v3322 = vpack.c.bf16 %v3291, %v3290
    %v3323 = vpack.c.bf16 %v3293, %v3292
    %v3324 = vpack.c.bf16 %v3295, %v3294
    %v3325 = vpack.c.bf16 %v3297, %v3296
    %v3327 = vsel %vm255, %v3311, 0
    %v3330 = vsel %vm255, %v3313, 0
    %3332 = vmatprep.subr.bf16.mxu0 0
    %3333 = vmatpush1.bf16.msra.mxu0 %v3314
    %3334 = vmatprep.subr.bf16.mxu0 0
    %3335 = vmatpush1.bf16.msra.mxu0 %v3315
    %3336 = vmatprep.subr.bf16.mxu0 0
    %3337 = vmatpush1.bf16.msra.mxu0 %v3316
    %3338 = vmatprep.subr.bf16.mxu0 0
    %3339 = vmatpush1.bf16.msra.mxu0 %v3317
    %3340 = vmatprep.subr.bf16.mxu0 0
    %3341 = vmatpush1.bf16.msra.mxu0 %v3318
    %3342 = vmatprep.subr.bf16.mxu0 0
    %3343 = vmatpush1.bf16.msra.mxu0 %v3319
    %3344 = vmatprep.subr.bf16.mxu0 0
    %3345 = vmatpush1.bf16.msra.mxu0 %v3320
    %3346 = vmatprep.subr.bf16.mxu0 0
    %3347 = vmatpush1.bf16.msra.mxu0 %v3321
    %3348 = vmatprep.subr.bf16.mxu0 0
    %3349 = vmatpush1.bf16.msra.mxu0 %v3322
    %3350 = vmatprep.subr.bf16.mxu0 0
    %3351 = vmatpush1.bf16.msra.mxu0 %v3323
    %3352 = vmatprep.subr.bf16.mxu0 0
    %3353 = vmatpush1.bf16.msra.mxu0 %v3324
    %3354 = vmatprep.subr.bf16.mxu0 0
    %3355 = vmatpush1.bf16.msra.mxu0 %v3325
    %3356 = vmatprep.subr.bf16.mxu0 0
    %3357 = vmatpush1.bf16.msra.mxu0 0
    %3358 = vmatprep.subr.bf16.mxu0 0
    %3359 = vmatpush1.bf16.msra.mxu0 0
    %3360 = vmatprep.subr.bf16.mxu0 0
    %3361 = vmatpush1.bf16.msra.mxu0 0
    %3362 = vmatprep.subr.bf16.mxu0 0
    %3363 = vmatpush1.bf16.msra.mxu0 0
    %3364 = vmatprep.mubr.bf16.mxu0 %v3327
    %3365 = vmatmul.mubr.bf16.gmra.mrb[0].mxu0 %v3310
    %v3366 = vpop.f32.mrb[0].mxu0
    %v3367 = vadd.f32 %v3271, %v3366
    %v3368 = vpop.f32.mrb[0].mxu0
    %v3369 = vpop.f32.mrb[0].mxu0
    %v3370 = vadd.f32 %v3272, %v3369
    %v3371 = vpop.f32.mrb[0].mxu0
    %3372 = vmatprep.mubr.bf16.mxu0 %v3330
    %3373 = vmatmul.mubr.bf16.gmra.mrb[0].mxu0 %v3312
    %v3374 = vpop.f32.mrb[0].mxu0
    %v3375 = vadd.f32 %v3273, %v3374
    %v3376 = vpop.f32.mrb[0].mxu0
    %v3377 = vpop.f32.mrb[0].mxu0
    %v3378 = vpop.f32.mrb[0].mxu0
    %3379 = vdwg.mxu0
    %v3380 = vpack.c.bf16 %v3370, %v3367
    %v3381 = vpack.c.bf16 %v3375, %v3375
    %v3382 = vpack.c.bf16 %v3299, %v3298
    %v3383 = vpack.c.bf16 %v3301, %v3300
    %v3385 = vsel %vm326, %v3380, 0
    %v3388 = vsel %vm326, %v3381, 0
    %3390 = vmatprep.subr.bf16.mxu0 0
    %3391 = vmatpush1.bf16.msra.mxu0 %v3382
    %3392 = vmatprep.subr.bf16.mxu0 0
    %3393 = vmatpush1.bf16.msra.mxu0 %v3383
    %3394 = vmatprep.subr.bf16.mxu0 0
    %3395 = vmatpush1.bf16.msra.mxu0 0
    %3396 = vmatprep.subr.bf16.mxu0 0
    %3397 = vmatpush1.bf16.msra.mxu0 0
    %3398 = vmatprep.subr.bf16.mxu0 0
    %3399 = vmatpush1.bf16.msra.mxu0 0
    %3400 = vmatprep.subr.bf16.mxu0 0
    %3401 = vmatpush1.bf16.msra.mxu0 0
    %3402 = vmatprep.subr.bf16.mxu0 0
    %3403 = vmatpush1.bf16.msra.mxu0 0
    %3404 = vmatprep.subr.bf16.mxu0 0
    %3405 = vmatpush1.bf16.msra.mxu0 0
    %3406 = vmatprep.subr.bf16.mxu0 0
    %3407 = vmatpush1.bf16.msra.mxu0 0
    %3408 = vmatprep.subr.bf16.mxu0 0
    %3409 = vmatpush1.bf16.msra.mxu0 0
    %3410 = vmatprep.subr.bf16.mxu0 0
    %3411 = vmatpush1.bf16.msra.mxu0 0
    %3412 = vmatprep.subr.bf16.mxu0 0
    %3413 = vmatpush1.bf16.msra.mxu0 0
    %3414 = vmatprep.subr.bf16.mxu0 0
    %3415 = vmatpush1.bf16.msra.mxu0 0
    %3416 = vmatprep.subr.bf16.mxu0 0
    %3417 = vmatpush1.bf16.msra.mxu0 0
    %3418 = vmatprep.subr.bf16.mxu0 0
    %3419 = vmatpush1.bf16.msra.mxu0 0
    %3420 = vmatprep.subr.bf16.mxu0 0
    %3421 = vmatpush1.bf16.msra.mxu0 0
    %3422 = vmatprep.mubr.bf16.mxu0 0
    %3423 = vmatmul.mubr.bf16.gmra.mrb[0].mxu0 %v3385
    %v3424 = vpop.f32.mrb[0].mxu0
    %v3425 = vadd.f32 0.0, %v3424
    %v3426 = vpop.f32.mrb[0].mxu0
    %v3427 = vpop.f32.mrb[0].mxu0
    %v3428 = vadd.f32 0.0, %v3427
    %v3429 = vpop.f32.mrb[0].mxu0
    %3430 = vmatprep.mubr.bf16.mxu0 0
    %3431 = vmatmul.mubr.bf16.gmra.mrb[0].mxu0 %v3388
    %v3432 = vpop.f32.mrb[0].mxu0
    %v3433 = vadd.f32 0.0, %v3432
    %v3434 = vpop.f32.mrb[0].mxu0
    %v3435 = vpop.f32.mrb[0].mxu0
    %v3436 = vpop.f32.mrb[0].mxu0
    %3437 = vdwg.mxu0
    %v3438 = vmax.f32 %v3425, 0.0
    %v3439 = vmax.f32 %v3428, 0.0
    %v3440 = vmax.f32 %v3433, 0.0
    %v3441 = vpack.c.bf16 %v3439, %v3438
    %v3442 = vpack.c.bf16 %v3440, %v3440
    %v3443 = vpack.c.bf16 %v3303, %v3302
    %v3444 = vpack.c.bf16 %v3305, %v3304
    %v3445 = vpack.c.bf16 %v3307, %v3306
    %v3446 = vpack.c.bf16 %v3309, %v3308
    %v3448 = vsel %vm255, %v3441, 0
    %v3451 = vsel %vm255, %v3442, 0
    %3453 = vmatprep.subr.bf16.mxu0 0
    %3454 = vmatpush1.bf16.msra.mxu0 %v3443
    %3455 = vmatprep.subr.bf16.mxu0 0
    %3456 = vmatpush1.bf16.msra.mxu0 %v3444
    %3457 = vmatprep.subr.bf16.mxu0 0
    %3458 = vmatpush1.bf16.msra.mxu0 %v3445
    %3459 = vmatprep.subr.bf16.mxu0 0
    %3460 = vmatpush1.bf16.msra.mxu0 %v3446
    %3461 = vmatprep.subr.bf16.mxu0 0
    %3462 = vmatpush1.bf16.msra.mxu0 0
    %3463 = vmatprep.subr.bf16.mxu0 0
    %3464 = vmatpush1.bf16.msra.mxu0 0
    %3465 = vmatprep.subr.bf16.mxu0 0
    %3466 = vmatpush1.bf16.msra.mxu0 0
    %3467 = vmatprep.subr.bf16.mxu0 0
    %3468 = vmatpush1.bf16.msra.mxu0 0
    %3469 = vmatprep.subr.bf16.mxu0 0
    %3470 = vmatpush1.bf16.msra.mxu0 0
    %3471 = vmatprep.subr.bf16.mxu0 0
    %3472 = vmatpush1.bf16.msra.mxu0 0
    %3473 = vmatprep.subr.bf16.mxu0 0
    %3474 = vmatpush1.bf16.msra.mxu0 0
    %3475 = vmatprep.subr.bf16.mxu0 0
    %3476 = vmatpush1.bf16.msra.mxu0 0
    %3477 = vmatprep.subr.bf16.mxu0 0
    %3478 = vmatpush1.bf16.msra.mxu0 0
    %3479 = vmatprep.subr.bf16.mxu0 0
    %3480 = vmatpush1.bf16.msra.mxu0 0
    %3481 = vmatprep.subr.bf16.mxu0 0
    %3482 = vmatpush1.bf16.msra.mxu0 0
    %3483 = vmatprep.subr.bf16.mxu0 0
    %3484 = vmatpush1.bf16.msra.mxu0 0
    %3485 = vmatprep.mubr.bf16.mxu0 0
    %3486 = vmatmul.mubr.bf16.gmra.mrb[0].mxu0 %v3448
    %v3487 = vpop.f32.mrb[0].mxu0
    %v3488 = vadd.f32 0.0, %v3487
    %v3489 = vpop.f32.mrb[0].mxu0
    %v3490 = vpop.f32.mrb[0].mxu0
    %v3491 = vadd.f32 0.0, %v3490
    %v3492 = vpop.f32.mrb[0].mxu0
    %3493 = vmatprep.mubr.bf16.mxu0 0
    %3494 = vmatmul.mubr.bf16.gmra.mrb[0].mxu0 %v3451
    %v3495 = vpop.f32.mrb[0].mxu0
    %v3496 = vadd.f32 0.0, %v3495
    %v3497 = vpop.f32.mrb[0].mxu0
    %v3498 = vpop.f32.mrb[0].mxu0
    %v3499 = vpop.f32.mrb[0].mxu0
    %3500 = vdwg.mxu0
    %v3501 = vadd.f32 %v3367, %v3488
    %v3502 = vadd.f32 %v3370, %v3491
    %v3503 = vadd.f32 %v3375, %v3496
    %vm3504 = vcmask 195584
    %v3506 = vsel %vm3504, %v178, 0
    %3508 = vmatprep.subr.mxu0 0.0
    %3509 = vmatpush1.msra.mxu0 %v3501
    %3510 = vmatprep.subr.mxu0 0.0
    %3511 = vmatpush1.msra.mxu0 %v3502
    %3512 = vmatprep.subr.mxu0 0.0
    %3513 = vmatpush1.msra.mxu0 %v3503
    %3514 = vmatprep.subr.mxu0 0.0
    %3515 = vmatpush1.msra.mxu0 0.0
    %3516 = vmatprep.subr.mxu0 0.0
    %3517 = vmatpush1.msra.mxu0 0.0
    %3518 = vmatprep.subr.mxu0 0.0
    %3519 = vmatpush1.msra.mxu0 0.0
    %3520 = vmatprep.subr.mxu0 0.0
    %3521 = vmatpush1.msra.mxu0 0.0
    %3522 = vmatprep.subr.mxu0 0.0
    %3523 = vmatpush1.msra.mxu0 0.0
    %3524 = vmatprep.subr.mxu0 0.0
    %3525 = vmatpush1.msra.mxu0 0.0
    %3526 = vmatprep.subr.mxu0 0.0
    %3527 = vmatpush1.msra.mxu0 0.0
    %3528 = vmatprep.subr.mxu0 0.0
    %3529 = vmatpush1.msra.mxu0 0.0
    %3530 = vmatprep.subr.mxu0 0.0
    %3531 = vmatpush1.msra.mxu0 0.0
    %3532 = vmatprep.subr.mxu0 0.0
    %3533 = vmatpush1.msra.mxu0 0.0
    %3534 = vmatprep.subr.mxu0 0.0
    %3535 = vmatpush1.msra.mxu0 0.0
    %3536 = vmatprep.subr.mxu0 0.0
    %3537 = vmatpush1.msra.mxu0 0.0
    %3538 = vmatprep.subr.mxu0 0.0
    %3539 = vmatpush1.msra.mxu0 0.0
    %3540 = vmatprep.subr.mxu0 0.0
    %3541 = vmatpush1.msra.mxu0 0.0
    %3542 = vmatprep.subr.mxu0 0.0
    %3543 = vmatpush1.msra.mxu0 0.0
    %3544 = vmatprep.subr.mxu0 0.0
    %3545 = vmatpush1.msra.mxu0 0.0
    %3546 = vmatprep.subr.mxu0 0.0
    %3547 = vmatpush1.msra.mxu0 0.0
    %3548 = vmatprep.subr.mxu0 0.0
    %3549 = vmatpush1.msra.mxu0 0.0
    %3550 = vmatprep.subr.mxu0 0.0
    %3551 = vmatpush1.msra.mxu0 0.0
    %3552 = vmatprep.subr.mxu0 0.0
    %3553 = vmatpush1.msra.mxu0 0.0
    %3554 = vmatprep.subr.mxu0 0.0
    %3555 = vmatpush1.msra.mxu0 0.0
    %3556 = vmatprep.subr.mxu0 0.0
    %3557 = vmatpush1.msra.mxu0 0.0
    %3558 = vmatprep.subr.mxu0 0.0
    %3559 = vmatpush1.msra.mxu0 0.0
    %3560 = vmatprep.subr.mxu0 0.0
    %3561 = vmatpush1.msra.mxu0 0.0
    %3562 = vmatprep.subr.mxu0 0.0
    %3563 = vmatpush1.msra.mxu0 0.0
    %3564 = vmatprep.subr.mxu0 0.0
    %3565 = vmatpush1.msra.mxu0 0.0
    %3566 = vmatprep.subr.mxu0 0.0
    %3567 = vmatpush1.msra.mxu0 0.0
    %3568 = vmatprep.subr.mxu0 0.0
    %3569 = vmatpush1.msra.mxu0 0.0
    %3570 = vmatprep.subr.mxu0 0.0
    %3571 = vmatpush1.msra.mxu0 0.0
    %3572 = vmatprep.mubr.f32.mxu0 0.0
    %3573 = vmatmul.mubr.f32.gmra.mrb[0].mxu0 %v3506
    %v3574 = vpop.f32.mrb[0].mxu0
    %v3575 = vadd.f32 0.0, %v3574
    %v3576 = vpop.f32.mrb[0].mxu0
    %3577 = vdwg.mxu0
    %v3578 = vld [vmem:[%s35] sm:$0xff]
    %v3579 = vld [vmem:[%s35 + $0x8] sm:$0xff]
    %v3580 = vld [vmem:[%s35 + $0x10] sm:$0xff]
    %v3581 = vld [vmem:[%s35 + $0x18] sm:$0xff]
    %v3582 = vld [vmem:[%s41] sm:$0xff]
    %v3583 = vld [vmem:[%s41 + $0x8] sm:$0xff]
    %v3584 = vld [vmem:[%s41 + $0x10] sm:$0xff]
    %v3585 = vld [vmem:[%s41 + $0x18] sm:$0xff]
    %v3586 = vld [vmem:[%s41 + $0x20] sm:$0xff]
    %v3587 = vld [vmem:[%s41 + $0x28] sm:$0xff]
    %v3588 = vld [vmem:[%s41 + $0x30] sm:$0xff]
    %v3589 = vld [vmem:[%s41 + $0x38] sm:$0xff]
    %v3590 = vld [vmem:[%s47] sm:$0xff]
    %v3591 = vld [vmem:[%s47 + $0x8] sm:$0xff]
    %v3592 = vld [vmem:[%s47 + $0x10] sm:$0xff]
    %v3593 = vld [vmem:[%s47 + $0x18] sm:$0xff]
    %v3594 = vld [vmem:[%s47 + $0x20] sm:$0xff]
    %v3595 = vld [vmem:[%s47 + $0x28] sm:$0xff]
    %v3596 = vld [vmem:[%s47 + $0x30] sm:$0xff]
    %v3597 = vld [vmem:[%s47 + $0x38] sm:$0xff]
    %v3598 = vld [vmem:[%s37] sm:$0x1]
    %v3599 = vld [vmem:[%s43] sm:$0x1]
    %v3600 = vld [vmem:[%s39] sm:$0x1]
    %v3601 = vld [vmem:[%s45] sm:$0x1]
    %v3602 = vpack.c.bf16 %v3575, %v3575
    %v3603 = vpack.c.bf16 %v3579, %v3578
    %v3604 = vpack.c.bf16 %v3581, %v3580
    %v3606 = vsel %vm326, %v3602, 0
    %3608 = vmatprep.subr.bf16.mxu0 0
    %3609 = vmatpush1.bf16.msra.mxu0 %v3603
    %3610 = vmatprep.subr.bf16.mxu0 0
    %3611 = vmatpush1.bf16.msra.mxu0 %v3604
    %3612 = vmatprep.subr.bf16.mxu0 0
    %3613 = vmatpush1.bf16.msra.mxu0 0
    %3614 = vmatprep.subr.bf16.mxu0 0
    %3615 = vmatpush1.bf16.msra.mxu0 0
    %3616 = vmatprep.subr.bf16.mxu0 0
    %3617 = vmatpush1.bf16.msra.mxu0 0
    %3618 = vmatprep.subr.bf16.mxu0 0
    %3619 = vmatpush1.bf16.msra.mxu0 0
    %3620 = vmatprep.subr.bf16.mxu0 0
    %3621 = vmatpush1.bf16.msra.mxu0 0
    %3622 = vmatprep.subr.bf16.mxu0 0
    %3623 = vmatpush1.bf16.msra.mxu0 0
    %3624 = vmatprep.subr.bf16.mxu0 0
    %3625 = vmatpush1.bf16.msra.mxu0 0
    %3626 = vmatprep.subr.bf16.mxu0 0
    %3627 = vmatpush1.bf16.msra.mxu0 0
    %3628 = vmatprep.subr.bf16.mxu0 0
    %3629 = vmatpush1.bf16.msra.mxu0 0
    %3630 = vmatprep.subr.bf16.mxu0 0
    %3631 = vmatpush1.bf16.msra.mxu0 0
    %3632 = vmatprep.subr.bf16.mxu0 0
    %3633 = vmatpush1.bf16.msra.mxu0 0
    %3634 = vmatprep.subr.bf16.mxu0 0
    %3635 = vmatpush1.bf16.msra.mxu0 0
    %3636 = vmatprep.subr.bf16.mxu0 0
    %3637 = vmatpush1.bf16.msra.mxu0 0
    %3638 = vmatprep.subr.bf16.mxu0 0
    %3639 = vmatpush1.bf16.msra.mxu0 0
    %3640 = vmatprep.mubr.bf16.mxu0 0
    %3641 = vmatmul.mubr.bf16.gmra.mrb[0].mxu0 %v3606
    %v3642 = vpop.f32.mrb[0].mxu0
    %v3643 = vadd.f32 0.0, %v3642
    %v3644 = vpop.f32.mrb[0].mxu0
    %v3645 = vpop.f32.mrb[0].mxu0
    %v3646 = vpop.f32.mrb[0].mxu0
    %3647 = vdwg.mxu0
    %v3649 = vsel %vm478, %v3643, 0
    %3651 = vmatprep.subr.mxu0 0.0
    %3652 = vmatpush1.msra.mxu0 %v3649
    %3653 = vmatprep.subr.mxu0 0.0
    %3654 = vmatpush1.msra.mxu0 0.0
    %3655 = vmatprep.subr.mxu0 0.0
    %3656 = vmatpush1.msra.mxu0 0.0
    %3657 = vmatprep.subr.mxu0 0.0
    %3658 = vmatpush1.msra.mxu0 0.0
    %3659 = vmatprep.subr.mxu0 0.0
    %3660 = vmatpush1.msra.mxu0 0.0
    %3661 = vmatprep.subr.mxu0 0.0
    %3662 = vmatpush1.msra.mxu0 0.0
    %3663 = vmatprep.subr.mxu0 0.0
    %3664 = vmatpush1.msra.mxu0 0.0
    %3665 = vmatprep.subr.mxu0 0.0
    %3666 = vmatpush1.msra.mxu0 0.0
    %3667 = vmatprep.subr.mxu0 0.0
    %3668 = vmatpush1.msra.mxu0 0.0
    %3669 = vmatprep.subr.mxu0 0.0
    %3670 = vmatpush1.msra.mxu0 0.0
    %3671 = vmatprep.subr.mxu0 0.0
    %3672 = vmatpush1.msra.mxu0 0.0
    %3673 = vmatprep.subr.mxu0 0.0
    %3674 = vmatpush1.msra.mxu0 0.0
    %3675 = vmatprep.subr.mxu0 0.0
    %3676 = vmatpush1.msra.mxu0 0.0
    %3677 = vmatprep.subr.mxu0 0.0
    %3678 = vmatpush1.msra.mxu0 0.0
    %3679 = vmatprep.subr.mxu0 0.0
    %3680 = vmatpush1.msra.mxu0 0.0
    %3681 = vmatprep.subr.mxu0 0.0
    %3682 = vmatpush1.msra.mxu0 0.0
    %3683 = vmatprep.subr.mxu0 0.0
    %3684 = vmatpush1.msra.mxu0 0.0
    %3685 = vmatprep.subr.mxu0 0.0
    %3686 = vmatpush1.msra.mxu0 0.0
    %3687 = vmatprep.subr.mxu0 0.0
    %3688 = vmatpush1.msra.mxu0 0.0
    %3689 = vmatprep.subr.mxu0 0.0
    %3690 = vmatpush1.msra.mxu0 0.0
    %3691 = vmatprep.subr.mxu0 0.0
    %3692 = vmatpush1.msra.mxu0 0.0
    %3693 = vmatprep.subr.mxu0 0.0
    %3694 = vmatpush1.msra.mxu0 0.0
    %3695 = vmatprep.subr.mxu0 0.0
    %3696 = vmatpush1.msra.mxu0 0.0
    %3697 = vmatprep.subr.mxu0 0.0
    %3698 = vmatpush1.msra.mxu0 0.0
    %3699 = vmatprep.subr.mxu0 0.0
    %3700 = vmatpush1.msra.mxu0 0.0
    %3701 = vmatprep.subr.mxu0 0.0
    %3702 = vmatpush1.msra.mxu0 0.0
    %3703 = vmatprep.subr.mxu0 0.0
    %3704 = vmatpush1.msra.mxu0 0.0
    %3705 = vmatprep.subr.mxu0 0.0
    %3706 = vmatpush1.msra.mxu0 0.0
    %3707 = vmatprep.subr.mxu0 0.0
    %3708 = vmatpush1.msra.mxu0 0.0
    %3709 = vmatprep.subr.mxu0 0.0
    %3710 = vmatpush1.msra.mxu0 0.0
    %3711 = vmatprep.subr.mxu0 0.0
    %3712 = vmatpush1.msra.mxu0 0.0
    %3713 = vmatprep.subr.mxu0 0.0
    %3714 = vmatpush1.msra.mxu0 0.0
    %3715 = vmatprep.mubr.f32.mxu0 0.0
    %3716 = vmatmul.mubr.f32.gmra.mrb[0].mxu0 %v697
    %v3717 = vpop.f32.mrb[0].mxu0
    %v3718 = vadd.f32 0.0, %v3717
    %v3719 = vpop.f32.mrb[0].mxu0
    %3720 = vdwg.mxu0
    %v3721 = vsub.f32 %v3643, %v3718
    %v3722 = vmul.f32 %v3721, %v3721
    %v3724 = vsel %vm478, %v3722, 0
    %3726 = vmatprep.subr.mxu0 0.0
    %3727 = vmatpush1.msra.mxu0 %v3724
    %3728 = vmatprep.subr.mxu0 0.0
    %3729 = vmatpush1.msra.mxu0 0.0
    %3730 = vmatprep.subr.mxu0 0.0
    %3731 = vmatpush1.msra.mxu0 0.0
    %3732 = vmatprep.subr.mxu0 0.0
    %3733 = vmatpush1.msra.mxu0 0.0
    %3734 = vmatprep.subr.mxu0 0.0
    %3735 = vmatpush1.msra.mxu0 0.0
    %3736 = vmatprep.subr.mxu0 0.0
    %3737 = vmatpush1.msra.mxu0 0.0
    %3738 = vmatprep.subr.mxu0 0.0
    %3739 = vmatpush1.msra.mxu0 0.0
    %3740 = vmatprep.subr.mxu0 0.0
    %3741 = vmatpush1.msra.mxu0 0.0
    %3742 = vmatprep.subr.mxu0 0.0
    %3743 = vmatpush1.msra.mxu0 0.0
    %3744 = vmatprep.subr.mxu0 0.0
    %3745 = vmatpush1.msra.mxu0 0.0
    %3746 = vmatprep.subr.mxu0 0.0
    %3747 = vmatpush1.msra.mxu0 0.0
    %3748 = vmatprep.subr.mxu0 0.0
    %3749 = vmatpush1.msra.mxu0 0.0
    %3750 = vmatprep.subr.mxu0 0.0
    %3751 = vmatpush1.msra.mxu0 0.0
    %3752 = vmatprep.subr.mxu0 0.0
    %3753 = vmatpush1.msra.mxu0 0.0
    %3754 = vmatprep.subr.mxu0 0.0
    %3755 = vmatpush1.msra.mxu0 0.0
    %3756 = vmatprep.subr.mxu0 0.0
    %3757 = vmatpush1.msra.mxu0 0.0
    %3758 = vmatprep.subr.mxu0 0.0
    %3759 = vmatpush1.msra.mxu0 0.0
    %3760 = vmatprep.subr.mxu0 0.0
    %3761 = vmatpush1.msra.mxu0 0.0
    %3762 = vmatprep.subr.mxu0 0.0
    %3763 = vmatpush1.msra.mxu0 0.0
    %3764 = vmatprep.subr.mxu0 0.0
    %3765 = vmatpush1.msra.mxu0 0.0
    %3766 = vmatprep.subr.mxu0 0.0
    %3767 = vmatpush1.msra.mxu0 0.0
    %3768 = vmatprep.subr.mxu0 0.0
    %3769 = vmatpush1.msra.mxu0 0.0
    %3770 = vmatprep.subr.mxu0 0.0
    %3771 = vmatpush1.msra.mxu0 0.0
    %3772 = vmatprep.subr.mxu0 0.0
    %3773 = vmatpush1.msra.mxu0 0.0
    %3774 = vmatprep.subr.mxu0 0.0
    %3775 = vmatpush1.msra.mxu0 0.0
    %3776 = vmatprep.subr.mxu0 0.0
    %3777 = vmatpush1.msra.mxu0 0.0
    %3778 = vmatprep.subr.mxu0 0.0
    %3779 = vmatpush1.msra.mxu0 0.0
    %3780 = vmatprep.subr.mxu0 0.0
    %3781 = vmatpush1.msra.mxu0 0.0
    %3782 = vmatprep.subr.mxu0 0.0
    %3783 = vmatpush1.msra.mxu0 0.0
    %3784 = vmatprep.subr.mxu0 0.0
    %3785 = vmatpush1.msra.mxu0 0.0
    %3786 = vmatprep.subr.mxu0 0.0
    %3787 = vmatpush1.msra.mxu0 0.0
    %3788 = vmatprep.subr.mxu0 0.0
    %3789 = vmatpush1.msra.mxu0 0.0
    %3790 = vmatprep.mubr.f32.mxu0 0.0
    %3791 = vmatmul.mubr.f32.gmra.mrb[0].mxu0 %v697
    %v3792 = vpop.f32.mrb[0].mxu0
    %v3793 = vadd.f32 1e-05, %v3792
    %v3794 = vpop.f32.mrb[0].mxu0
    %3795 = vdwg.mxu0
    %v3796 = vrsqrt.pop %v3793
    %v3797 = vmul.f32 %v3721, %v3796
    %v3799 = vlaneseq
    %v3800 = vshrl.u32 %v3799, 7
    %v3801 = vsub.s32 0, %v3800
    %v3802 = vrot.slane %v3598, %v3801
    %v3804 = vmul.f32 %v3797, %v3802
    %v3806 = vlaneseq
    %v3807 = vshrl.u32 %v3806, 7
    %v3808 = vsub.s32 0, %v3807
    %v3809 = vrot.slane %v3600, %v3808
    %v3811 = vadd.f32 %v3804, %v3809
    %v3812 = vmax.f32 %v3811, 0.0
    %v3813 = vpack.c.bf16 %v3812, %v3812
    %v3814 = vpack.c.bf16 %v3583, %v3582
    %v3815 = vpack.c.bf16 %v3585, %v3584
    %v3816 = vpack.c.bf16 %v3587, %v3586
    %v3817 = vpack.c.bf16 %v3589, %v3588
    %v3819 = vsel %vm255, %v3813, 0
    %3821 = vmatprep.subr.bf16.mxu0 0
    %3822 = vmatpush1.bf16.msra.mxu0 %v3814
    %3823 = vmatprep.subr.bf16.mxu0 0
    %3824 = vmatpush1.bf16.msra.mxu0 %v3815
    %3825 = vmatprep.subr.bf16.mxu0 0
    %3826 = vmatpush1.bf16.msra.mxu0 %v3816
    %3827 = vmatprep.subr.bf16.mxu0 0
    %3828 = vmatpush1.bf16.msra.mxu0 %v3817
    %3829 = vmatprep.subr.bf16.mxu0 0
    %3830 = vmatpush1.bf16.msra.mxu0 0
    %3831 = vmatprep.subr.bf16.mxu0 0
    %3832 = vmatpush1.bf16.msra.mxu0 0
    %3833 = vmatprep.subr.bf16.mxu0 0
    %3834 = vmatpush1.bf16.msra.mxu0 0
    %3835 = vmatprep.subr.bf16.mxu0 0
    %3836 = vmatpush1.bf16.msra.mxu0 0
    %3837 = vmatprep.subr.bf16.mxu0 0
    %3838 = vmatpush1.bf16.msra.mxu0 0
    %3839 = vmatprep.subr.bf16.mxu0 0
    %3840 = vmatpush1.bf16.msra.mxu0 0
    %3841 = vmatprep.subr.bf16.mxu0 0
    %3842 = vmatpush1.bf16.msra.mxu0 0
    %3843 = vmatprep.subr.bf16.mxu0 0
    %3844 = vmatpush1.bf16.msra.mxu0 0
    %3845 = vmatprep.subr.bf16.mxu0 0
    %3846 = vmatpush1.bf16.msra.mxu0 0
    %3847 = vmatprep.subr.bf16.mxu0 0
    %3848 = vmatpush1.bf16.msra.mxu0 0
    %3849 = vmatprep.subr.bf16.mxu0 0
    %3850 = vmatpush1.bf16.msra.mxu0 0
    %3851 = vmatprep.subr.bf16.mxu0 0
    %3852 = vmatpush1.bf16.msra.mxu0 0
    %3853 = vmatprep.mubr.bf16.mxu0 0
    %3854 = vmatmul.mubr.bf16.gmra.mrb[0].mxu0 %v3819
    %v3855 = vpop.f32.mrb[0].mxu0
    %v3856 = vadd.f32 0.0, %v3855
    %v3857 = vpop.f32.mrb[0].mxu0
    %v3858 = vpop.f32.mrb[0].mxu0
    %v3859 = vpop.f32.mrb[0].mxu0
    %3860 = vdwg.mxu0
    %v3862 = vsel %vm478, %v3856, 0
    %3864 = vmatprep.subr.mxu0 0.0
    %3865 = vmatpush1.msra.mxu0 %v3862
    %3866 = vmatprep.subr.mxu0 0.0
    %3867 = vmatpush1.msra.mxu0 0.0
    %3868 = vmatprep.subr.mxu0 0.0
    %3869 = vmatpush1.msra.mxu0 0.0
    %3870 = vmatprep.subr.mxu0 0.0
    %3871 = vmatpush1.msra.mxu0 0.0
    %3872 = vmatprep.subr.mxu0 0.0
    %3873 = vmatpush1.msra.mxu0 0.0
    %3874 = vmatprep.subr.mxu0 0.0
    %3875 = vmatpush1.msra.mxu0 0.0
    %3876 = vmatprep.subr.mxu0 0.0
    %3877 = vmatpush1.msra.mxu0 0.0
    %3878 = vmatprep.subr.mxu0 0.0
    %3879 = vmatpush1.msra.mxu0 0.0
    %3880 = vmatprep.subr.mxu0 0.0
    %3881 = vmatpush1.msra.mxu0 0.0
    %3882 = vmatprep.subr.mxu0 0.0
    %3883 = vmatpush1.msra.mxu0 0.0
    %3884 = vmatprep.subr.mxu0 0.0
    %3885 = vmatpush1.msra.mxu0 0.0
    %3886 = vmatprep.subr.mxu0 0.0
    %3887 = vmatpush1.msra.mxu0 0.0
    %3888 = vmatprep.subr.mxu0 0.0
    %3889 = vmatpush1.msra.mxu0 0.0
    %3890 = vmatprep.subr.mxu0 0.0
    %3891 = vmatpush1.msra.mxu0 0.0
    %3892 = vmatprep.subr.mxu0 0.0
    %3893 = vmatpush1.msra.mxu0 0.0
    %3894 = vmatprep.subr.mxu0 0.0
    %3895 = vmatpush1.msra.mxu0 0.0
    %3896 = vmatprep.subr.mxu0 0.0
    %3897 = vmatpush1.msra.mxu0 0.0
    %3898 = vmatprep.subr.mxu0 0.0
    %3899 = vmatpush1.msra.mxu0 0.0
    %3900 = vmatprep.subr.mxu0 0.0
    %3901 = vmatpush1.msra.mxu0 0.0
    %3902 = vmatprep.subr.mxu0 0.0
    %3903 = vmatpush1.msra.mxu0 0.0
    %3904 = vmatprep.subr.mxu0 0.0
    %3905 = vmatpush1.msra.mxu0 0.0
    %3906 = vmatprep.subr.mxu0 0.0
    %3907 = vmatpush1.msra.mxu0 0.0
    %3908 = vmatprep.subr.mxu0 0.0
    %3909 = vmatpush1.msra.mxu0 0.0
    %3910 = vmatprep.subr.mxu0 0.0
    %3911 = vmatpush1.msra.mxu0 0.0
    %3912 = vmatprep.subr.mxu0 0.0
    %3913 = vmatpush1.msra.mxu0 0.0
    %3914 = vmatprep.subr.mxu0 0.0
    %3915 = vmatpush1.msra.mxu0 0.0
    %3916 = vmatprep.subr.mxu0 0.0
    %3917 = vmatpush1.msra.mxu0 0.0
    %3918 = vmatprep.subr.mxu0 0.0
    %3919 = vmatpush1.msra.mxu0 0.0
    %3920 = vmatprep.subr.mxu0 0.0
    %3921 = vmatpush1.msra.mxu0 0.0
    %3922 = vmatprep.subr.mxu0 0.0
    %3923 = vmatpush1.msra.mxu0 0.0
    %3924 = vmatprep.subr.mxu0 0.0
    %3925 = vmatpush1.msra.mxu0 0.0
    %3926 = vmatprep.subr.mxu0 0.0
    %3927 = vmatpush1.msra.mxu0 0.0
    %3928 = vmatprep.mubr.f32.mxu0 0.0
    %3929 = vmatmul.mubr.f32.gmra.mrb[0].mxu0 %v697
    %v3930 = vpop.f32.mrb[0].mxu0
    %v3931 = vadd.f32 0.0, %v3930
    %v3932 = vpop.f32.mrb[0].mxu0
    %3933 = vdwg.mxu0
    %v3934 = vsub.f32 %v3856, %v3931
    %v3935 = vmul.f32 %v3934, %v3934
    %v3937 = vsel %vm478, %v3935, 0
    %3939 = vmatprep.subr.mxu0 0.0
    %3940 = vmatpush1.msra.mxu0 %v3937
    %3941 = vmatprep.subr.mxu0 0.0
    %3942 = vmatpush1.msra.mxu0 0.0
    %3943 = vmatprep.subr.mxu0 0.0
    %3944 = vmatpush1.msra.mxu0 0.0
    %3945 = vmatprep.subr.mxu0 0.0
    %3946 = vmatpush1.msra.mxu0 0.0
    %3947 = vmatprep.subr.mxu0 0.0
    %3948 = vmatpush1.msra.mxu0 0.0
    %3949 = vmatprep.subr.mxu0 0.0
    %3950 = vmatpush1.msra.mxu0 0.0
    %3951 = vmatprep.subr.mxu0 0.0
    %3952 = vmatpush1.msra.mxu0 0.0
    %3953 = vmatprep.subr.mxu0 0.0
    %3954 = vmatpush1.msra.mxu0 0.0
    %3955 = vmatprep.subr.mxu0 0.0
    %3956 = vmatpush1.msra.mxu0 0.0
    %3957 = vmatprep.subr.mxu0 0.0
    %3958 = vmatpush1.msra.mxu0 0.0
    %3959 = vmatprep.subr.mxu0 0.0
    %3960 = vmatpush1.msra.mxu0 0.0
    %3961 = vmatprep.subr.mxu0 0.0
    %3962 = vmatpush1.msra.mxu0 0.0
    %3963 = vmatprep.subr.mxu0 0.0
    %3964 = vmatpush1.msra.mxu0 0.0
    %3965 = vmatprep.subr.mxu0 0.0
    %3966 = vmatpush1.msra.mxu0 0.0
    %3967 = vmatprep.subr.mxu0 0.0
    %3968 = vmatpush1.msra.mxu0 0.0
    %3969 = vmatprep.subr.mxu0 0.0
    %3970 = vmatpush1.msra.mxu0 0.0
    %3971 = vmatprep.subr.mxu0 0.0
    %3972 = vmatpush1.msra.mxu0 0.0
    %3973 = vmatprep.subr.mxu0 0.0
    %3974 = vmatpush1.msra.mxu0 0.0
    %3975 = vmatprep.subr.mxu0 0.0
    %3976 = vmatpush1.msra.mxu0 0.0
    %3977 = vmatprep.subr.mxu0 0.0
    %3978 = vmatpush1.msra.mxu0 0.0
    %3979 = vmatprep.subr.mxu0 0.0
    %3980 = vmatpush1.msra.mxu0 0.0
    %3981 = vmatprep.subr.mxu0 0.0
    %3982 = vmatpush1.msra.mxu0 0.0
    %3983 = vmatprep.subr.mxu0 0.0
    %3984 = vmatpush1.msra.mxu0 0.0
    %3985 = vmatprep.subr.mxu0 0.0
    %3986 = vmatpush1.msra.mxu0 0.0
    %3987 = vmatprep.subr.mxu0 0.0
    %3988 = vmatpush1.msra.mxu0 0.0
    %3989 = vmatprep.subr.mxu0 0.0
    %3990 = vmatpush1.msra.mxu0 0.0
    %3991 = vmatprep.subr.mxu0 0.0
    %3992 = vmatpush1.msra.mxu0 0.0
    %3993 = vmatprep.subr.mxu0 0.0
    %3994 = vmatpush1.msra.mxu0 0.0
    %3995 = vmatprep.subr.mxu0 0.0
    %3996 = vmatpush1.msra.mxu0 0.0
    %3997 = vmatprep.subr.mxu0 0.0
    %3998 = vmatpush1.msra.mxu0 0.0
    %3999 = vmatprep.subr.mxu0 0.0
    %4000 = vmatpush1.msra.mxu0 0.0
    %4001 = vmatprep.subr.mxu0 0.0
    %4002 = vmatpush1.msra.mxu0 0.0
    %4003 = vmatprep.mubr.f32.mxu0 0.0
    %4004 = vmatmul.mubr.f32.gmra.mrb[0].mxu0 %v697
    %v4005 = vpop.f32.mrb[0].mxu0
    %v4006 = vadd.f32 1e-05, %v4005
    %v4007 = vpop.f32.mrb[0].mxu0
    %4008 = vdwg.mxu0
    %v4009 = vrsqrt.pop %v4006
    %v4010 = vmul.f32 %v3934, %v4009
    %v4012 = vlaneseq
    %v4013 = vshrl.u32 %v4012, 7
    %v4014 = vsub.s32 0, %v4013
    %v4015 = vrot.slane %v3599, %v4014
    %v4017 = vmul.f32 %v4010, %v4015
    %v4019 = vlaneseq
    %v4020 = vshrl.u32 %v4019, 7
    %v4021 = vsub.s32 0, %v4020
    %v4022 = vrot.slane %v3601, %v4021
    %v4024 = vadd.f32 %v4017, %v4022
    %v4025 = vmax.f32 %v4024, 0.0
    %v4026 = vpack.c.bf16 %v4025, %v4025
    %v4027 = vpack.c.bf16 %v3591, %v3590
    %v4028 = vpack.c.bf16 %v3593, %v3592
    %v4029 = vpack.c.bf16 %v3595, %v3594
    %v4030 = vpack.c.bf16 %v3597, %v3596
    %v4032 = vsel %vm255, %v4026, 0
    %4034 = vmatprep.subr.bf16.mxu0 0
    %4035 = vmatpush1.bf16.msra.mxu0 %v4027
    %4036 = vmatprep.subr.bf16.mxu0 0
    %4037 = vmatpush1.bf16.msra.mxu0 %v4028
    %4038 = vmatprep.subr.bf16.mxu0 0
    %4039 = vmatpush1.bf16.msra.mxu0 %v4029
    %4040 = vmatprep.subr.bf16.mxu0 0
    %4041 = vmatpush1.bf16.msra.mxu0 %v4030
    %4042 = vmatprep.subr.bf16.mxu0 0
    %4043 = vmatpush1.bf16.msra.mxu0 0
    %4044 = vmatprep.subr.bf16.mxu0 0
    %4045 = vmatpush1.bf16.msra.mxu0 0
    %4046 = vmatprep.subr.bf16.mxu0 0
    %4047 = vmatpush1.bf16.msra.mxu0 0
    %4048 = vmatprep.subr.bf16.mxu0 0
    %4049 = vmatpush1.bf16.msra.mxu0 0
    %4050 = vmatprep.subr.bf16.mxu0 0
    %4051 = vmatpush1.bf16.msra.mxu0 0
    %4052 = vmatprep.subr.bf16.mxu0 0
    %4053 = vmatpush1.bf16.msra.mxu0 0
    %4054 = vmatprep.subr.bf16.mxu0 0
    %4055 = vmatpush1.bf16.msra.mxu0 0
    %4056 = vmatprep.subr.bf16.mxu0 0
    %4057 = vmatpush1.bf16.msra.mxu0 0
    %4058 = vmatprep.subr.bf16.mxu0 0
    %4059 = vmatpush1.bf16.msra.mxu0 0
    %4060 = vmatprep.subr.bf16.mxu0 0
    %4061 = vmatpush1.bf16.msra.mxu0 0
    %4062 = vmatprep.subr.bf16.mxu0 0
    %4063 = vmatpush1.bf16.msra.mxu0 0
    %4064 = vmatprep.subr.bf16.mxu0 0
    %4065 = vmatpush1.bf16.msra.mxu0 0
    %4066 = vmatprep.mubr.bf16.mxu0 0
    %4067 = vmatmul.mubr.bf16.gmra.mrb[0].mxu0 %v4032
    %v4068 = vpop.f32.mrb[0].mxu0
    %v4069 = vadd.f32 0.0, %v4068
    %v4070 = vpop.f32.mrb[0].mxu0
    %v4071 = vpop.f32.mrb[0].mxu0
    %v4072 = vpop.f32.mrb[0].mxu0
    %4073 = vdwg.mxu0
    %v4075 = vsel %vm478, %v4069, 0
    %4077 = vmatprep.subr.mxu0 0.0
    %4078 = vmatpush1.msra.mxu0 %v4075
    %4079 = vmatprep.subr.mxu0 0.0
    %4080 = vmatpush1.msra.mxu0 0.0
    %4081 = vmatprep.subr.mxu0 0.0
    %4082 = vmatpush1.msra.mxu0 0.0
    %4083 = vmatprep.subr.mxu0 0.0
    %4084 = vmatpush1.msra.mxu0 0.0
    %4085 = vmatprep.subr.mxu0 0.0
    %4086 = vmatpush1.msra.mxu0 0.0
    %4087 = vmatprep.subr.mxu0 0.0
    %4088 = vmatpush1.msra.mxu0 0.0
    %4089 = vmatprep.subr.mxu0 0.0
    %4090 = vmatpush1.msra.mxu0 0.0
    %4091 = vmatprep.subr.mxu0 0.0
    %4092 = vmatpush1.msra.mxu0 0.0
    %4093 = vmatprep.subr.mxu0 0.0
    %4094 = vmatpush1.msra.mxu0 0.0
    %4095 = vmatprep.subr.mxu0 0.0
    %4096 = vmatpush1.msra.mxu0 0.0
    %4097 = vmatprep.subr.mxu0 0.0
    %4098 = vmatpush1.msra.mxu0 0.0
    %4099 = vmatprep.subr.mxu0 0.0
    %4100 = vmatpush1.msra.mxu0 0.0
    %4101 = vmatprep.subr.mxu0 0.0
    %4102 = vmatpush1.msra.mxu0 0.0
    %4103 = vmatprep.subr.mxu0 0.0
    %4104 = vmatpush1.msra.mxu0 0.0
    %4105 = vmatprep.subr.mxu0 0.0
    %4106 = vmatpush1.msra.mxu0 0.0
    %4107 = vmatprep.subr.mxu0 0.0
    %4108 = vmatpush1.msra.mxu0 0.0
    %4109 = vmatprep.subr.mxu0 0.0
    %4110 = vmatpush1.msra.mxu0 0.0
    %4111 = vmatprep.subr.mxu0 0.0
    %4112 = vmatpush1.msra.mxu0 0.0
    %4113 = vmatprep.subr.mxu0 0.0
    %4114 = vmatpush1.msra.mxu0 0.0
    %4115 = vmatprep.subr.mxu0 0.0
    %4116 = vmatpush1.msra.mxu0 0.0
    %4117 = vmatprep.subr.mxu0 0.0
    %4118 = vmatpush1.msra.mxu0 0.0
    %4119 = vmatprep.subr.mxu0 0.0
    %4120 = vmatpush1.msra.mxu0 0.0
    %4121 = vmatprep.subr.mxu0 0.0
    %4122 = vmatpush1.msra.mxu0 0.0
    %4123 = vmatprep.subr.mxu0 0.0
    %4124 = vmatpush1.msra.mxu0 0.0
    %4125 = vmatprep.subr.mxu0 0.0
    %4126 = vmatpush1.msra.mxu0 0.0
    %4127 = vmatprep.subr.mxu0 0.0
    %4128 = vmatpush1.msra.mxu0 0.0
    %4129 = vmatprep.subr.mxu0 0.0
    %4130 = vmatpush1.msra.mxu0 0.0
    %4131 = vmatprep.subr.mxu0 0.0
    %4132 = vmatpush1.msra.mxu0 0.0
    %4133 = vmatprep.subr.mxu0 0.0
    %4134 = vmatpush1.msra.mxu0 0.0
    %4135 = vmatprep.subr.mxu0 0.0
    %4136 = vmatpush1.msra.mxu0 0.0
    %4137 = vmatprep.subr.mxu0 0.0
    %4138 = vmatpush1.msra.mxu0 0.0
    %4139 = vmatprep.subr.mxu0 0.0
    %4140 = vmatpush1.msra.mxu0 0.0
    %4141 = vmatprep.mubr.f32.mxu0 0.0
    %4142 = vmatmul.mubr.f32.gmra.mrb[0].mxu0 %v697
    %v4143 = vpop.f32.mrb[0].mxu0
    %v4144 = vadd.f32 0.0, %v4143
    %v4145 = vpop.f32.mrb[0].mxu0
    %4146 = vdwg.mxu0
    %v4147 = vsub.f32 %v4069, %v4144
    %v4148 = vmul.f32 %v4147, %v4147
    %v4150 = vsel %vm478, %v4148, 0
    %4152 = vmatprep.subr.mxu0 0.0
    %4153 = vmatpush1.msra.mxu0 %v4150
    %4154 = vmatprep.subr.mxu0 0.0
    %4155 = vmatpush1.msra.mxu0 0.0
    %4156 = vmatprep.subr.mxu0 0.0
    %4157 = vmatpush1.msra.mxu0 0.0
    %4158 = vmatprep.subr.mxu0 0.0
    %4159 = vmatpush1.msra.mxu0 0.0
    %4160 = vmatprep.subr.mxu0 0.0
    %4161 = vmatpush1.msra.mxu0 0.0
    %4162 = vmatprep.subr.mxu0 0.0
    %4163 = vmatpush1.msra.mxu0 0.0
    %4164 = vmatprep.subr.mxu0 0.0
    %4165 = vmatpush1.msra.mxu0 0.0
    %4166 = vmatprep.subr.mxu0 0.0
    %4167 = vmatpush1.msra.mxu0 0.0
    %4168 = vmatprep.subr.mxu0 0.0
    %4169 = vmatpush1.msra.mxu0 0.0
    %4170 = vmatprep.subr.mxu0 0.0
    %4171 = vmatpush1.msra.mxu0 0.0
    %4172 = vmatprep.subr.mxu0 0.0
    %4173 = vmatpush1.msra.mxu0 0.0
    %4174 = vmatprep.subr.mxu0 0.0
    %4175 = vmatpush1.msra.mxu0 0.0
    %4176 = vmatprep.subr.mxu0 0.0
    %4177 = vmatpush1.msra.mxu0 0.0
    %4178 = vmatprep.subr.mxu0 0.0
    %4179 = vmatpush1.msra.mxu0 0.0
    %4180 = vmatprep.subr.mxu0 0.0
    %4181 = vmatpush1.msra.mxu0 0.0
    %4182 = vmatprep.subr.mxu0 0.0
    %4183 = vmatpush1.msra.mxu0 0.0
    %4184 = vmatprep.subr.mxu0 0.0
    %4185 = vmatpush1.msra.mxu0 0.0
    %4186 = vmatprep.subr.mxu0 0.0
    %4187 = vmatpush1.msra.mxu0 0.0
    %4188 = vmatprep.subr.mxu0 0.0
    %4189 = vmatpush1.msra.mxu0 0.0
    %4190 = vmatprep.subr.mxu0 0.0
    %4191 = vmatpush1.msra.mxu0 0.0
    %4192 = vmatprep.subr.mxu0 0.0
    %4193 = vmatpush1.msra.mxu0 0.0
    %4194 = vmatprep.subr.mxu0 0.0
    %4195 = vmatpush1.msra.mxu0 0.0
    %4196 = vmatprep.subr.mxu0 0.0
    %4197 = vmatpush1.msra.mxu0 0.0
    %4198 = vmatprep.subr.mxu0 0.0
    %4199 = vmatpush1.msra.mxu0 0.0
    %4200 = vmatprep.subr.mxu0 0.0
    %4201 = vmatpush1.msra.mxu0 0.0
    %4202 = vmatprep.subr.mxu0 0.0
    %4203 = vmatpush1.msra.mxu0 0.0
    %4204 = vmatprep.subr.mxu0 0.0
    %4205 = vmatpush1.msra.mxu0 0.0
    %4206 = vmatprep.subr.mxu0 0.0
    %4207 = vmatpush1.msra.mxu0 0.0
    %4208 = vmatprep.subr.mxu0 0.0
    %4209 = vmatpush1.msra.mxu0 0.0
    %4210 = vmatprep.subr.mxu0 0.0
    %4211 = vmatpush1.msra.mxu0 0.0
    %4212 = vmatprep.subr.mxu0 0.0
    %4213 = vmatpush1.msra.mxu0 0.0
    %4214 = vmatprep.subr.mxu0 0.0
    %4215 = vmatpush1.msra.mxu0 0.0
    %4216 = vmatprep.mubr.f32.mxu0 0.0
    %4217 = vmatmul.mubr.f32.gmra.mrb[0].mxu0 %v697
    %v4218 = vpop.f32.mrb[0].mxu0
    %v4219 = vadd.f32 1e-05, %v4218
    %v4220 = vpop.f32.mrb[0].mxu0
    %4221 = vdwg.mxu0
    %v4222 = vrsqrt.pop %v4219
    %v4223 = vmul.f32 %v4147, %v4222
    %v4224 = vmul.f32 %v2873, %v2873
    %vm4225 = vcmask 125952
    %v4226 = vsel %vm4225, %v4224, 0.0
    %4227 = vadd.xlane.f32.xlu0 %v4226
    %v4228 = vpop.xlane.xlu0 %4227
    %v4229 = vrsqrt.pop %v4228
    %v4230 = vmul.f32 %v4228, %v4229
    %vm4231 = vcmp.eq.f32.partialorder %v4228, inf
    %v4232 = vsel %vm4231, %v4228, %v4230
    %vm4233 = vcmp.eq.f32.partialorder %v4228, 0.0
    %v4234 = vand.u32 %v4228, 2147483648
    %v4235 = vsel %vm4233, %v4234, %v4232
    %v4236 = vmax.f32 %v4235, 1e-12
    %v4237 = vrcp.pop %v4236
    %v4238 = vmul.f32 %v2873, %v4237
    %v4239 = vmul.f32 %v4223, %v4223
    %v4240 = vsel %vm4225, %v4239, 0.0
    %4241 = vadd.xlane.f32.xlu0 %v4240
    %v4242 = vpop.xlane.xlu0 %4241
    %v4243 = vrsqrt.pop %v4242
    %v4244 = vmul.f32 %v4242, %v4243
    %vm4245 = vcmp.eq.f32.partialorder %v4242, inf
    %v4246 = vsel %vm4245, %v4242, %v4244
    %vm4247 = vcmp.eq.f32.partialorder %v4242, 0.0
    %v4248 = vand.u32 %v4242, 2147483648
    %v4249 = vsel %vm4247, %v4248, %v4246
    %v4250 = vmax.f32 %v4249, 1e-12
    %v4251 = vrcp.pop %v4250
    %v4252 = vmul.f32 %v4223, %v4251
    %v4254 = vsel %vm2467, %v4238, 0
    %v4257 = vsel %vm2467, %v4252, 0
    %4259 = vmatprep.subr.mxu0 0.0
    %4260 = vmatpush1.xpose.msra.mxu0 %v4257
    %4261 = vmatprep.subr.mxu0 0.0
    %4262 = vmatpush1.xpose.msra.mxu0 0.0
    %4263 = vmatprep.subr.mxu0 0.0
    %4264 = vmatpush1.xpose.msra.mxu0 0.0
    %4265 = vmatprep.subr.mxu0 0.0
    %4266 = vmatpush1.xpose.msra.mxu0 0.0
    %4267 = vmatprep.subr.mxu0 0.0
    %4268 = vmatpush1.xpose.msra.mxu0 0.0
    %4269 = vmatprep.subr.mxu0 0.0
    %4270 = vmatpush1.xpose.msra.mxu0 0.0
    %4271 = vmatprep.subr.mxu0 0.0
    %4272 = vmatpush1.xpose.msra.mxu0 0.0
    %4273 = vmatprep.subr.mxu0 0.0
    %4274 = vmatpush1.xpose.msra.mxu0 0.0
    %4275 = vmatprep.subr.mxu0 0.0
    %4276 = vmatpush1.xpose.msra.mxu0 0.0
    %4277 = vmatprep.subr.mxu0 0.0
    %4278 = vmatpush1.xpose.msra.mxu0 0.0
    %4279 = vmatprep.subr.mxu0 0.0
    %4280 = vmatpush1.xpose.msra.mxu0 0.0
    %4281 = vmatprep.subr.mxu0 0.0
    %4282 = vmatpush1.xpose.msra.mxu0 0.0
    %4283 = vmatprep.subr.mxu0 0.0
    %4284 = vmatpush1.xpose.msra.mxu0 0.0
    %4285 = vmatprep.subr.mxu0 0.0
    %4286 = vmatpush1.xpose.msra.mxu0 0.0
    %4287 = vmatprep.subr.mxu0 0.0
    %4288 = vmatpush1.xpose.msra.mxu0 0.0
    %4289 = vmatprep.subr.mxu0 0.0
    %4290 = vmatpush1.xpose.msra.mxu0 0.0
    %4291 = vmatprep.subr.mxu0 0.0
    %4292 = vmatpush1.xpose.msra.mxu0 0.0
    %4293 = vmatprep.subr.mxu0 0.0
    %4294 = vmatpush1.xpose.msra.mxu0 0.0
    %4295 = vmatprep.subr.mxu0 0.0
    %4296 = vmatpush1.xpose.msra.mxu0 0.0
    %4297 = vmatprep.subr.mxu0 0.0
    %4298 = vmatpush1.xpose.msra.mxu0 0.0
    %4299 = vmatprep.subr.mxu0 0.0
    %4300 = vmatpush1.xpose.msra.mxu0 0.0
    %4301 = vmatprep.subr.mxu0 0.0
    %4302 = vmatpush1.xpose.msra.mxu0 0.0
    %4303 = vmatprep.subr.mxu0 0.0
    %4304 = vmatpush1.xpose.msra.mxu0 0.0
    %4305 = vmatprep.subr.mxu0 0.0
    %4306 = vmatpush1.xpose.msra.mxu0 0.0
    %4307 = vmatprep.subr.mxu0 0.0
    %4308 = vmatpush1.xpose.msra.mxu0 0.0
    %4309 = vmatprep.subr.mxu0 0.0
    %4310 = vmatpush1.xpose.msra.mxu0 0.0
    %4311 = vmatprep.subr.mxu0 0.0
    %4312 = vmatpush1.xpose.msra.mxu0 0.0
    %4313 = vmatprep.subr.mxu0 0.0
    %4314 = vmatpush1.xpose.msra.mxu0 0.0
    %4315 = vmatprep.subr.mxu0 0.0
    %4316 = vmatpush1.xpose.msra.mxu0 0.0
    %4317 = vmatprep.subr.mxu0 0.0
    %4318 = vmatpush1.xpose.msra.mxu0 0.0
    %4319 = vmatprep.subr.mxu0 0.0
    %4320 = vmatpush1.xpose.msra.mxu0 0.0
    %4321 = vmatprep.subr.mxu0 0.0
    %4322 = vmatpush1.xpose.msra.mxu0 0.0
    %4323 = vmatprep.mubr.f32.mxu0 0.0
    %4324 = vmatmul.mubr.f32.gmra.mrb[0].mxu0 %v4254
    %v4325 = vpop.f32.mrb[0].mxu0
    %v4326 = vadd.f32 0.0, %v4325
    %v4327 = vpop.f32.mrb[0].mxu0
    %4328 = vdwg.mxu0
    %vm4329 = vcmp.gt.f32.partialorder %v184, 0.5
    %v4330 = vsel %vm4329, %v4326, -1e+30
    %vm4331 = vcmask 27648
    %v4332 = vsel %vm4331, %v4330, -inf
    %4333 = vmax.xlane.f32.xlu0 %v4332
    %v4334 = vpop.xlane.xlu0 %4333
    %v4335 = vsub.f32 %v4330, %v4334
    %v4336 = vmul.f32 %v4335, 1.442695
    %v4337 = vpow.pop %v4336
    %v4338 = vsel %vm4331, %v4337, 0.0
    %4339 = vadd.xlane.f32.xlu0 %v4338
    %v4340 = vpop.xlane.xlu0 %4339
    %v4341 = vlog2.pop %v4340
    %v4342 = vmul.f32 %v4341, 0.6931472
    %v4343 = vadd.f32 %v4334, %v4342
    %v4344 = vmul.f32 %v4326, %v185
    %v4345 = vsel %vm4331, %v4344, 0.0
    %4346 = vadd.xlane.f32.xlu0 %v4345
    %v4347 = vpop.xlane.xlu0 %4346
    %v4348 = vsub.f32 %v4343, %v4347
    %v4349 = vsel %vm478, %v4348, 0.0
    %v4350 = vrot.slane %v4349, 4
    %v4351 = vadd.f32 %v4349, %v4350
    %v4352 = vrot.slane %v4351, 2
    %v4353 = vadd.f32 %v4351, %v4352
    %v4354 = vrot.slane %v4353, 1
    %v4355 = vadd.f32 %v4353, %v4354
    %v4356 = vmul.f32 %v4355, 2.0
    %v4357 = vrcp.pop 2.0
    %v4358 = vmul.f32 %v4356, %v4357
    %v4360 = vsel %vm1327, %v183, 0
    %v4363 = vsel %vm1331, %v3264, 0
    %4365 = vmatprep.subr.mxu0 0.0
    %4366 = vmatpush1.msra.mxu0 %v4363
    %4367 = vmatprep.subr.mxu0 0.0
    %4368 = vmatpush1.msra.mxu0 0.0
    %4369 = vmatprep.subr.mxu0 0.0
    %4370 = vmatpush1.msra.mxu0 0.0
    %4371 = vmatprep.subr.mxu0 0.0
    %4372 = vmatpush1.msra.mxu0 0.0
    %4373 = vmatprep.subr.mxu0 0.0
    %4374 = vmatpush1.msra.mxu0 0.0
    %4375 = vmatprep.subr.mxu0 0.0
    %4376 = vmatpush1.msra.mxu0 0.0
    %4377 = vmatprep.subr.mxu0 0.0
    %4378 = vmatpush1.msra.mxu0 0.0
    %4379 = vmatprep.subr.mxu0 0.0
    %4380 = vmatpush1.msra.mxu0 0.0
    %4381 = vmatprep.subr.mxu0 0.0
    %4382 = vmatpush1.msra.mxu0 0.0
    %4383 = vmatprep.subr.mxu0 0.0
    %4384 = vmatpush1.msra.mxu0 0.0
    %4385 = vmatprep.subr.mxu0 0.0
    %4386 = vmatpush1.msra.mxu0 0.0
    %4387 = vmatprep.subr.mxu0 0.0
    %4388 = vmatpush1.msra.mxu0 0.0
    %4389 = vmatprep.subr.mxu0 0.0
    %4390 = vmatpush1.msra.mxu0 0.0
    %4391 = vmatprep.subr.mxu0 0.0
    %4392 = vmatpush1.msra.mxu0 0.0
    %4393 = vmatprep.subr.mxu0 0.0
    %4394 = vmatpush1.msra.mxu0 0.0
    %4395 = vmatprep.subr.mxu0 0.0
    %4396 = vmatpush1.msra.mxu0 0.0
    %4397 = vmatprep.subr.mxu0 0.0
    %4398 = vmatpush1.msra.mxu0 0.0
    %4399 = vmatprep.subr.mxu0 0.0
    %4400 = vmatpush1.msra.mxu0 0.0
    %4401 = vmatprep.subr.mxu0 0.0
    %4402 = vmatpush1.msra.mxu0 0.0
    %4403 = vmatprep.subr.mxu0 0.0
    %4404 = vmatpush1.msra.mxu0 0.0
    %4405 = vmatprep.subr.mxu0 0.0
    %4406 = vmatpush1.msra.mxu0 0.0
    %4407 = vmatprep.subr.mxu0 0.0
    %4408 = vmatpush1.msra.mxu0 0.0
    %4409 = vmatprep.subr.mxu0 0.0
    %4410 = vmatpush1.msra.mxu0 0.0
    %4411 = vmatprep.subr.mxu0 0.0
    %4412 = vmatpush1.msra.mxu0 0.0
    %4413 = vmatprep.subr.mxu0 0.0
    %4414 = vmatpush1.msra.mxu0 0.0
    %4415 = vmatprep.subr.mxu0 0.0
    %4416 = vmatpush1.msra.mxu0 0.0
    %4417 = vmatprep.subr.mxu0 0.0
    %4418 = vmatpush1.msra.mxu0 0.0
    %4419 = vmatprep.subr.mxu0 0.0
    %4420 = vmatpush1.msra.mxu0 0.0
    %4421 = vmatprep.subr.mxu0 0.0
    %4422 = vmatpush1.msra.mxu0 0.0
    %4423 = vmatprep.subr.mxu0 0.0
    %4424 = vmatpush1.msra.mxu0 0.0
    %4425 = vmatprep.subr.mxu0 0.0
    %4426 = vmatpush1.msra.mxu0 0.0
    %4427 = vmatprep.subr.mxu0 0.0
    %4428 = vmatpush1.msra.mxu0 0.0
    %4429 = vmatprep.mubr.f32.mxu0 0.0
    %4430 = vmatmul.mubr.f32.gmra.mrb[0].mxu0 %v4360
    %v4431 = vpop.f32.mrb[0].mxu0
    %v4432 = vadd.f32 0.0, %v4431
    %v4433 = vpop.f32.mrb[0].mxu0
    %4434 = vdwg.mxu0
    %v4436 = vsel %vm1331, %v2452, 0
    %4438 = vmatprep.subr.mxu0 0.0
    %4439 = vmatpush1.msra.mxu0 %v4436
    %4440 = vmatprep.subr.mxu0 0.0
    %4441 = vmatpush1.msra.mxu0 0.0
    %4442 = vmatprep.subr.mxu0 0.0
    %4443 = vmatpush1.msra.mxu0 0.0
    %4444 = vmatprep.subr.mxu0 0.0
    %4445 = vmatpush1.msra.mxu0 0.0
    %4446 = vmatprep.subr.mxu0 0.0
    %4447 = vmatpush1.msra.mxu0 0.0
    %4448 = vmatprep.subr.mxu0 0.0
    %4449 = vmatpush1.msra.mxu0 0.0
    %4450 = vmatprep.subr.mxu0 0.0
    %4451 = vmatpush1.msra.mxu0 0.0
    %4452 = vmatprep.subr.mxu0 0.0
    %4453 = vmatpush1.msra.mxu0 0.0
    %4454 = vmatprep.subr.mxu0 0.0
    %4455 = vmatpush1.msra.mxu0 0.0
    %4456 = vmatprep.subr.mxu0 0.0
    %4457 = vmatpush1.msra.mxu0 0.0
    %4458 = vmatprep.subr.mxu0 0.0
    %4459 = vmatpush1.msra.mxu0 0.0
    %4460 = vmatprep.subr.mxu0 0.0
    %4461 = vmatpush1.msra.mxu0 0.0
    %4462 = vmatprep.subr.mxu0 0.0
    %4463 = vmatpush1.msra.mxu0 0.0
    %4464 = vmatprep.subr.mxu0 0.0
    %4465 = vmatpush1.msra.mxu0 0.0
    %4466 = vmatprep.subr.mxu0 0.0
    %4467 = vmatpush1.msra.mxu0 0.0
    %4468 = vmatprep.subr.mxu0 0.0
    %4469 = vmatpush1.msra.mxu0 0.0
    %4470 = vmatprep.subr.mxu0 0.0
    %4471 = vmatpush1.msra.mxu0 0.0
    %4472 = vmatprep.subr.mxu0 0.0
    %4473 = vmatpush1.msra.mxu0 0.0
    %4474 = vmatprep.subr.mxu0 0.0
    %4475 = vmatpush1.msra.mxu0 0.0
    %4476 = vmatprep.subr.mxu0 0.0
    %4477 = vmatpush1.msra.mxu0 0.0
    %4478 = vmatprep.subr.mxu0 0.0
    %4479 = vmatpush1.msra.mxu0 0.0
    %4480 = vmatprep.subr.mxu0 0.0
    %4481 = vmatpush1.msra.mxu0 0.0
    %4482 = vmatprep.subr.mxu0 0.0
    %4483 = vmatpush1.msra.mxu0 0.0
    %4484 = vmatprep.subr.mxu0 0.0
    %4485 = vmatpush1.msra.mxu0 0.0
    %4486 = vmatprep.subr.mxu0 0.0
    %4487 = vmatpush1.msra.mxu0 0.0
    %4488 = vmatprep.subr.mxu0 0.0
    %4489 = vmatpush1.msra.mxu0 0.0
    %4490 = vmatprep.subr.mxu0 0.0
    %4491 = vmatpush1.msra.mxu0 0.0
    %4492 = vmatprep.subr.mxu0 0.0
    %4493 = vmatpush1.msra.mxu0 0.0
    %4494 = vmatprep.subr.mxu0 0.0
    %4495 = vmatpush1.msra.mxu0 0.0
    %4496 = vmatprep.subr.mxu0 0.0
    %4497 = vmatpush1.msra.mxu0 0.0
    %4498 = vmatprep.subr.mxu0 0.0
    %4499 = vmatpush1.msra.mxu0 0.0
    %4500 = vmatprep.subr.mxu0 0.0
    %4501 = vmatpush1.msra.mxu0 0.0
    %4502 = vmatprep.mubr.f32.mxu0 0.0
    %4503 = vmatmul.mubr.f32.gmra.mrb[0].mxu0 %v4360
    %v4504 = vpop.f32.mrb[0].mxu0
    %v4505 = vadd.f32 0.0, %v4504
    %v4506 = vpop.f32.mrb[0].mxu0
    %4507 = vdwg.mxu0
    %v4508 = vmul.f32 %v4432, %v1274
    %v4509 = vsel %vm4225, %v4508, 0.0
    %4510 = vadd.xlane.f32.xlu0 %v4509
    %v4511 = vpop.xlane.xlu0 %4510
    %v4512 = vmul.f32 %v4432, %v4432
    %v4513 = vsel %vm4225, %v4512, 0.0
    %4514 = vadd.xlane.f32.xlu0 %v4513
    %v4515 = vpop.xlane.xlu0 %4514
    %v4516 = vrsqrt.pop %v4515
    %v4517 = vmul.f32 %v4515, %v4516
    %vm4518 = vcmp.eq.f32.partialorder %v4515, inf
    %v4519 = vsel %vm4518, %v4515, %v4517
    %vm4520 = vcmp.eq.f32.partialorder %v4515, 0.0
    %v4521 = vand.u32 %v4515, 2147483648
    %v4522 = vsel %vm4520, %v4521, %v4519
    %v4523 = vmul.f32 %v1274, %v1274
    %v4524 = vsel %vm4225, %v4523, 0.0
    %4525 = vadd.xlane.f32.xlu0 %v4524
    %v4526 = vpop.xlane.xlu0 %4525
    %v4527 = vrsqrt.pop %v4526
    %v4528 = vmul.f32 %v4526, %v4527
    %vm4529 = vcmp.eq.f32.partialorder %v4526, inf
    %v4530 = vsel %vm4529, %v4526, %v4528
    %vm4531 = vcmp.eq.f32.partialorder %v4526, 0.0
    %v4532 = vand.u32 %v4526, 2147483648
    %v4533 = vsel %vm4531, %v4532, %v4530
    %v4534 = vmul.f32 %v4522, %v4533
    %v4535 = vmax.f32 %v4534, 1e-08
    %v4536 = vrcp.pop %v4535
    %v4537 = vmul.f32 %v4511, %v4536
    %v4538 = vsel %vm478, %v4537, 0.0
    %v4539 = vrot.slane %v4538, 4
    %v4540 = vadd.f32 %v4538, %v4539
    %v4541 = vrot.slane %v4540, 2
    %v4542 = vadd.f32 %v4540, %v4541
    %v4543 = vrot.slane %v4542, 1
    %v4544 = vadd.f32 %v4542, %v4543
    %v4545 = vmul.f32 %v2873, %v4505
    %v4546 = vsel %vm4225, %v4545, 0.0
    %4547 = vadd.xlane.f32.xlu0 %v4546
    %v4548 = vpop.xlane.xlu0 %4547
    %v4549 = vmul.f32 %v4505, %v4505
    %v4550 = vsel %vm4225, %v4549, 0.0
    %4551 = vadd.xlane.f32.xlu0 %v4550
    %v4552 = vpop.xlane.xlu0 %4551
    %v4553 = vrsqrt.pop %v4552
    %v4554 = vmul.f32 %v4552, %v4553
    %vm4555 = vcmp.eq.f32.partialorder %v4552, inf
    %v4556 = vsel %vm4555, %v4552, %v4554
    %vm4557 = vcmp.eq.f32.partialorder %v4552, 0.0
    %v4558 = vand.u32 %v4552, 2147483648
    %v4559 = vsel %vm4557, %v4558, %v4556
    %v4560 = vmul.f32 %v4235, %v4559
    %v4561 = vmax.f32 %v4560, 1e-08
    %v4562 = vrcp.pop %v4561
    %v4563 = vmul.f32 %v4548, %v4562
    %v4564 = vsel %vm478, %v4563, 0.0
    %v4565 = vrot.slane %v4564, 4
    %v4566 = vadd.f32 %v4564, %v4565
    %v4567 = vrot.slane %v4566, 2
    %v4568 = vadd.f32 %v4566, %v4567
    %v4569 = vrot.slane %v4568, 1
    %v4570 = vadd.f32 %v4568, %v4569
    %v4571 = vadd.f32 %v4544, %v4570
    %v4572 = vmul.f32 %v4571, %v4357
    %v4573 = vsub.f32 4.004, %v4572
    %v4574 = vadd.f32 %v4358, %v4573
    %vm4575 = vcmask 0
    %4576 = vst.msk [vmem:[#allocation2] sm:$0x1] %vm4575, %v4574
    // Predicated region
    $region170: #{bridge_forward.1} parent=1 // pred_check
      _
    $region171: #{bridge_forward.1} parent=1 // pred_check_branch
      %4578 = sbr.rel (0) target = $region173
    $region172: #{bridge_forward.1} parent=1 // pred_region
      %s4580 = ssub.s32 16, 16
      %4581 = vsyncadd [#allocation3], %s4580
      %s4583 = sshll.u32 [#allocation2], 4
      %s4584 = int_to_ptr.vmem [resolvable:$true] %s4583
      %4586 = dma.vmem_to_hbm [thread:$0]  %s4584, 16, %s85, [#allocation3]
    $region173: #{bridge_forward.1} parent=1 // pred_fallthru
      _
    // Predicated region
    $region174: #{bridge_forward.1} parent=1 // pred_check
      _
    $region175: #{bridge_forward.1} parent=1 // pred_check_branch
      %4588 = sbr.rel (0) target = $region177
    $region176: #{bridge_forward.1} parent=1 // pred_region
      %4589 = dma.done [#allocation3], 16
    $region177: #{bridge_forward.1} parent=1 // pred_fallthru
      _
    %4590 = vsyncpa [#allocation3], 1

</llo_original>
